<compile_context>
chip_gen: v5e
topology: v5e:2x2
jax: 0.10.0
libtpu: 0.0.40
codegen_flags: <defaults>
</compile_context>

<pallas_src>
import functools

import jax
import jax.numpy as jnp
from jax.experimental import pallas as pl
from jax.experimental.pallas import tpu as pltpu


def context_policy_kernel(x_ref, w1_ref, b1_ref, w2_ref, b2_ref, w3_ref, b3_ref,
                          o_ref, *, act_dtype):
    act = act_dtype

    # Layer 1: (TB,256) @ (256,512), bf16 MXU inputs, f32 accumulate.
    x = x_ref[...].astype(jnp.bfloat16)
    h1 = jnp.dot(x, w1_ref[...], preferred_element_type=jnp.float32)
    h1 = jnp.maximum(h1.astype(act) + b1_ref[...], 0.0).astype(jnp.bfloat16)

    # Layer 2: (TB,512) @ (512,1024).
    h2 = jnp.dot(h1, w2_ref[...], preferred_element_type=jnp.float32)
    h2 = jnp.maximum(h2.astype(act) + b2_ref[...], 0.0)

    # Head (out_features == 1): elementwise mul with the (1,1024) w3 row and a lane
    # reduction, accumulated in f32 -> per-row logits, shape (TB, 1).
    prod = (h2 * w3_ref[...]).astype(jnp.float32)
    logits = jnp.sum(prod, axis=-1, keepdims=True) + b3_ref[0, 0]      # (TB, 1) f32

    # Pack the (TB,1) column lane-dense into the (TB//128, 128) output block:
    # spread each 128-row chunk onto the diagonal of a (128,128) tile and reduce
    # over sublanes -> a (1,128) lane-major row (dense, unmasked store).
    eye = (jax.lax.broadcasted_iota(jnp.int32, (128, 128), 0)
           == jax.lax.broadcasted_iota(jnp.int32, (128, 128), 1)).astype(jnp.float32)
    rows = o_ref.shape[0]
    for c in range(rows):                                  # static unroll (rows <= 8)
        col = logits[c * 128:(c + 1) * 128, :]             # (128, 1)
        o_ref[pl.ds(c, 1), :] = jnp.sum(col * eye, axis=0, keepdims=True)


def context_policy(x, w1, b1, w2, b2, w3, b3, *, block_b=512, act_dtype=jnp.bfloat16):
    """Forward pass of ContextPolicy.

    x: (B, 256), f32 (or bf16 - accepted directly, no wrapper cast).
    Weights are PyTorch Linear params transposed to (in, out); head weight is a
    (1, 1024) row, b3 a (1, 1) scalar.
    act_dtype: post-MXU elementwise dtype.  bf16 for v6e/v7x; jnp.float32 on v5e.
    """
    B = x.shape[0]

    # Lane-dense output packing requires batch tiles that are multiples of 128.
    Bp = max(128, pl.cdiv(B, 128) * 128)
    TB = max(128, (min(block_b, Bp) // 128) * 128)
    # v7x megacore: if there would be a single grid step but the batch allows two,
    # halve the tile so the "parallel" axis can shard across both TensorCores.
    if TB == Bp and Bp >= 256 and (Bp // 2) % 128 == 0:
        TB = Bp // 2
    Bp = pl.cdiv(Bp, TB) * TB
    if Bp != B:
        x = jnp.pad(x, ((0, Bp - B), (0, 0)))

    # bf16 weights halve the HBM->VMEM weight DMA (the dominant cost at small batch).
    # TODO(synk): on v7x only, fp8(e4m3) weight storage + per-tensor scale would halve it again.
    w1b = w1.astype(jnp.bfloat16)
    w2b = w2.astype(jnp.bfloat16)
    w3c = w3.astype(act_dtype)
    b1c = b1.astype(act_dtype)
    b2c = b2.astype(act_dtype)
    b3f = b3.astype(jnp.float32).reshape(1, 1)

    const = lambda i: (0, 0)   # weights/biases: same block every step -> VMEM-resident
    flops = 2 * Bp * (256 * 512 + 512 * 1024 + 1024 * 1)
    bytes_accessed = (
        x.size * x.dtype.itemsize
        + w1b.size * 2 + w2b.size * 2
        + w3c.size * w3c.dtype.itemsize
        + b1c.size * b1c.dtype.itemsize + b2c.size * b2c.dtype.itemsize
        + 4 + Bp * 4)

    kernel = functools.partial(context_policy_kernel, act_dtype=act_dtype)

    out = pl.pallas_call(
        kernel,
        out_shape=jax.ShapeDtypeStruct((Bp // 128, 128), jnp.float32),
        grid=(Bp // TB,),
        in_specs=[
            pl.BlockSpec((TB, 256), lambda i: (i, 0)),          # x tile (pipelined)
            pl.BlockSpec((256, 512), const),                    # w1 (resident)
            pl.BlockSpec((1, 512), const),                      # b1
            pl.BlockSpec((512, 1024), const),                   # w2 (resident)
            pl.BlockSpec((1, 1024), const),                     # b2
            pl.BlockSpec((1, 1024), const),                     # w3 row (resident)
            pl.BlockSpec(memory_space=pltpu.MemorySpace.SMEM),  # b3 scalar
        ],
        out_specs=pl.BlockSpec((TB // 128, 128), lambda i: (i, 0)),
        compiler_params=pltpu.CompilerParams(
            dimension_semantics=("parallel",)),
        cost_estimate=pl.CostEstimate(
            flops=flops, transcendentals=0, bytes_accessed=bytes_accessed),
    )(x, w1b, b1c, w2b, b2c, w3c, b3f)

    # Tiny (Bp,)-element reshape/slice; element [r//128, r%128] is batch row r.
    return out.reshape(-1)[:B].reshape(B, 1).astype(jnp.float32)


def init_params(key):
    k1, k2, k3, k4, k5, k6 = jax.random.split(key, 6)

    # Deterministic synthetic init (uniform, roughly PyTorch-Linear-like scale).
    def u(k, shape, fan_in):
        bound = 1.0 / jnp.sqrt(fan_in)
        return jax.random.uniform(k, shape, jnp.float32, -bound, bound)

    w1 = u(k1, (256, 512), 256)
    b1 = u(k2, (1, 512), 256)
    w2 = u(k3, (512, 1024), 512)
    b2 = u(k4, (1, 1024), 512)
    w3 = u(k5, (1, 1024), 1024)   # head weight kept as a (1, 1024) row
    b3 = u(k6, (1, 1), 1024)
    return w1, b1, w2, b2, w3, b3


if __name__ == "__main__":
    key = jax.random.PRNGKey(0)
    kx, kp = jax.random.split(key)

    B = 8
    x = jax.random.normal(kx, (B, 256), jnp.float32)
    w1, b1, w2, b2, w3, b3 = init_params(kp)

    out = context_policy(x, w1, b1, w2, b2, w3, b3)
    out = jax.block_until_ready(out)

    # Pure-JAX f32 reference of the same forward pass.  The kernel uses bf16 weights
    # and bf16 post-MXU activations with f32 accumulation, so tolerance is loosened.
    h1 = jax.nn.relu(x @ w1 + b1)
    h2 = jax.nn.relu(h1 @ w2 + b2)
    ref = h2 @ w3.T + b3
    assert out.shape == (B, 1)
    err = float(jnp.max(jnp.abs(out - ref)))
    assert jnp.allclose(out, ref, atol=2e-2, rtol=2e-2), err

    print("KERNEL_OK")
</pallas_src>

<mosaic_0001>
module attributes {stable_mosaic.version = 11 : i64} {
  func.func @context_policy_kernel(%arg0: i32, %arg1: memref<128x256xf32, #tpu.memory_space<vmem>>, %arg2: memref<256x512xbf16, #tpu.memory_space<vmem>>, %arg3: memref<1x512xbf16, #tpu.memory_space<vmem>>, %arg4: memref<512x1024xbf16, #tpu.memory_space<vmem>>, %arg5: memref<1x1024xbf16, #tpu.memory_space<vmem>>, %arg6: memref<1x1024xbf16, #tpu.memory_space<vmem>>, %arg7: memref<1x1xf32, #tpu.memory_space<smem>>, %arg8: memref<1x128xf32, #tpu.memory_space<vmem>>) attributes {dimension_semantics = [#tpu.dimension_semantics<parallel>], iteration_bounds = array<i64: 1>, scalar_prefetch = 0 : i64, scratch_operands = 0 : i64, tpu.core_type = #tpu.core_type<tc>, window_params = [{transform_indices = @transform_0, window_bounds = array<i64: 128, 256>}, {pipeline_mode = #tpu.pipeline_mode<synchronous>, transform_indices = @transform_1, window_bounds = array<i64: 256, 512>}, {pipeline_mode = #tpu.pipeline_mode<synchronous>, transform_indices = @transform_2, window_bounds = array<i64: 1, 512>}, {pipeline_mode = #tpu.pipeline_mode<synchronous>, transform_indices = @transform_3, window_bounds = array<i64: 512, 1024>}, {pipeline_mode = #tpu.pipeline_mode<synchronous>, transform_indices = @transform_4, window_bounds = array<i64: 1, 1024>}, {pipeline_mode = #tpu.pipeline_mode<synchronous>, transform_indices = @transform_5, window_bounds = array<i64: 1, 1024>}, {transform_indices = @transform_6, window_bounds = array<i64: 1, 1>}, {transform_indices = @transform_7, window_bounds = array<i64: 1, 128>}]} {
    %c0 = arith.constant 0 : index
    %c0_0 = arith.constant 0 : index
    %0 = vector.load %arg1[%c0, %c0_0] : memref<128x256xf32, #tpu.memory_space<vmem>>, vector<128x256xf32>
    %1 = arith.truncf %0 : vector<128x256xf32> to vector<128x256xbf16>
    %c0_1 = arith.constant 0 : index
    %c0_2 = arith.constant 0 : index
    %2 = vector.load %arg2[%c0_1, %c0_2] : memref<256x512xbf16, #tpu.memory_space<vmem>>, vector<256x512xbf16>
    %cst = arith.constant dense<0.000000e+00> : vector<128x512xf32>
    %3 = tpu.matmul %1, %2, %cst {dimension_numbers = #tpu.dot_dimension_numbers<[1], [0], [0], [1], [0, 0, 1, 1], [], []>} : vector<128x256xbf16>, vector<256x512xbf16>, vector<128x512xf32> -> vector<128x512xf32>
    %4 = arith.truncf %3 : vector<128x512xf32> to vector<128x512xbf16>
    %c0_3 = arith.constant 0 : index
    %c0_4 = arith.constant 0 : index
    %5 = vector.load %arg3[%c0_3, %c0_4] : memref<1x512xbf16, #tpu.memory_space<vmem>>, vector<1x512xbf16>
    %6 = vector.broadcast %5 : vector<1x512xbf16> to vector<128x512xbf16>
    %7 = arith.addf %4, %6 : vector<128x512xbf16>
    %cst_5 = arith.constant 0.000000e+00 : bf16
    %8 = vector.broadcast %cst_5 : bf16 to vector<128x512xbf16>
    %9 = arith.maximumf %7, %8 : vector<128x512xbf16>
    %c0_6 = arith.constant 0 : index
    %c0_7 = arith.constant 0 : index
    %10 = vector.load %arg4[%c0_6, %c0_7] : memref<512x1024xbf16, #tpu.memory_space<vmem>>, vector<512x1024xbf16>
    %cst_8 = arith.constant dense<0.000000e+00> : vector<128x1024xf32>
    %11 = tpu.matmul %9, %10, %cst_8 {dimension_numbers = #tpu.dot_dimension_numbers<[1], [0], [0], [1], [0, 0, 1, 1], [], []>} : vector<128x512xbf16>, vector<512x1024xbf16>, vector<128x1024xf32> -> vector<128x1024xf32>
    %12 = arith.truncf %11 : vector<128x1024xf32> to vector<128x1024xbf16>
    %c0_9 = arith.constant 0 : index
    %c0_10 = arith.constant 0 : index
    %13 = vector.load %arg5[%c0_9, %c0_10] : memref<1x1024xbf16, #tpu.memory_space<vmem>>, vector<1x1024xbf16>
    %14 = vector.broadcast %13 : vector<1x1024xbf16> to vector<128x1024xbf16>
    %15 = arith.addf %12, %14 : vector<128x1024xbf16>
    %cst_11 = arith.constant 0.000000e+00 : bf16
    %16 = vector.broadcast %cst_11 : bf16 to vector<128x1024xbf16>
    %17 = arith.maximumf %15, %16 : vector<128x1024xbf16>
    %c0_12 = arith.constant 0 : index
    %c0_13 = arith.constant 0 : index
    %18 = vector.load %arg6[%c0_12, %c0_13] : memref<1x1024xbf16, #tpu.memory_space<vmem>>, vector<1x1024xbf16>
    %19 = vector.broadcast %18 : vector<1x1024xbf16> to vector<128x1024xbf16>
    %20 = arith.mulf %17, %19 : vector<128x1024xbf16>
    %21 = arith.extf %20 : vector<128x1024xbf16> to vector<128x1024xf32>
    %cst_14 = arith.constant dense<0.000000e+00> : vector<128xf32>
    %22 = vector.multi_reduction <add>, %21, %cst_14 [1] : vector<128x1024xf32> to vector<128xf32>
    %23 = vector.shape_cast %22 : vector<128xf32> to vector<128x1xf32>
    %c0_15 = arith.constant 0 : index
    %c0_16 = arith.constant 0 : index
    %24 = memref.load %arg7[%c0_15, %c0_16] : memref<1x1xf32, #tpu.memory_space<smem>>
    %25 = vector.broadcast %24 : f32 to vector<128x1xf32>
    %26 = arith.addf %23, %25 : vector<128x1xf32>
    %27 = tpu.iota {dimensions = array<i32: 0>} : vector<128x128xi32>
    %28 = tpu.iota {dimensions = array<i32: 1>} : vector<128x128xi32>
    %29 = arith.cmpi eq, %27, %28 : vector<128x128xi32>
    %30 = arith.extui %29 : vector<128x128xi1> to vector<128x128xi32>
    %31 = arith.sitofp %30 : vector<128x128xi32> to vector<128x128xf32>
    %32 = vector.broadcast %26 : vector<128x1xf32> to vector<128x128xf32>
    %33 = arith.mulf %32, %31 : vector<128x128xf32>
    %cst_17 = arith.constant dense<0.000000e+00> : vector<128xf32>
    %34 = vector.multi_reduction <add>, %33, %cst_17 [0] : vector<128x128xf32> to vector<128xf32>
    %35 = vector.shape_cast %34 : vector<128xf32> to vector<1x128xf32>
    %c0_18 = arith.constant 0 : index
    %c0_19 = arith.constant 0 : index
    %36 = vector.load %arg8[%c0_18, %c0_19] : memref<1x128xf32, #tpu.memory_space<vmem>>, vector<1x128xf32>
    tpu.vector_store %arg8[%c0_18, %c0_19], %35 {strides = array<i32>} : memref<1x128xf32, #tpu.memory_space<vmem>>, vector<1x128xf32>,
    return
  }
  func.func @transform_0(%arg0: i32) -> (i32, i32) {
    %c0_i32 = arith.constant 0 : i32
    %c0_i32_0 = arith.constant 0 : i32
    return %arg0, %c0_i32 : i32, i32
  }
  func.func @transform_1(%arg0: i32) -> (i32, i32) {
    %c0_i32 = arith.constant 0 : i32
    %c0_i32_0 = arith.constant 0 : i32
    %c0_i32_1 = arith.constant 0 : i32
    return %c0_i32, %c0_i32_0 : i32, i32
  }
  func.func @transform_2(%arg0: i32) -> (i32, i32) {
    %c0_i32 = arith.constant 0 : i32
    %c0_i32_0 = arith.constant 0 : i32
    %c0_i32_1 = arith.constant 0 : i32
    return %c0_i32, %c0_i32_0 : i32, i32
  }
  func.func @transform_3(%arg0: i32) -> (i32, i32) {
    %c0_i32 = arith.constant 0 : i32
    %c0_i32_0 = arith.constant 0 : i32
    %c0_i32_1 = arith.constant 0 : i32
    return %c0_i32, %c0_i32_0 : i32, i32
  }
  func.func @transform_4(%arg0: i32) -> (i32, i32) {
    %c0_i32 = arith.constant 0 : i32
    %c0_i32_0 = arith.constant 0 : i32
    %c0_i32_1 = arith.constant 0 : i32
    return %c0_i32, %c0_i32_0 : i32, i32
  }
  func.func @transform_5(%arg0: i32) -> (i32, i32) {
    %c0_i32 = arith.constant 0 : i32
    %c0_i32_0 = arith.constant 0 : i32
    %c0_i32_1 = arith.constant 0 : i32
    return %c0_i32, %c0_i32_0 : i32, i32
  }
  func.func @transform_6(%arg0: i32) -> (i32, i32) {
    %c0_i32 = arith.constant 0 : i32
    %c0_i32_0 = arith.constant 0 : i32
    %c0_i32_1 = arith.constant 0 : i32
    return %c0_i32, %c0_i32_0 : i32, i32
  }
  func.func @transform_7(%arg0: i32) -> (i32, i32) {
    %c0_i32 = arith.constant 0 : i32
    %c0_i32_0 = arith.constant 0 : i32
    return %arg0, %c0_i32 : i32, i32
  }
}

</mosaic_0001>

<llo_original>
// kernel: tpu_custom_call.1
$region0: #{tpu_custom_call.1}
  #allocation0 [shape = 'u32[]', space=smem, size = 0x4, offset = 0x4, fixed_abs, tag = 'smem constant byte address 0x4 - core index']
  #allocation1 [shape = 'u32[72,128]{1,0:T(1,128)}', space=vmem, size = 0x9000, scoped, tag = 'internal scratch']
  #allocation2 [shape = 'f32[1,1]{1,0:T(1,128)S(6)}', space=smem, size = 0x200, scoped, tag = 'scoped memory for tpu_custom_call.1']
  %s0 = inlined_call_operand.hbm [shape: f32[128,256], index: 0, kind: input, shape index: {}]
  %s1 = inlined_call_operand.hbm [shape: bf16[256,512], index: 1, kind: input, shape index: {}]
  %s2 = inlined_call_operand.hbm [shape: bf16[1,512], index: 2, kind: input, shape index: {}]
  %s3 = inlined_call_operand.hbm [shape: bf16[512,1024], index: 3, kind: input, shape index: {}]
  %s4 = inlined_call_operand.hbm [shape: bf16[1,1024], index: 4, kind: input, shape index: {}]
  %s5 = inlined_call_operand.hbm [shape: bf16[1,1024], index: 5, kind: input, shape index: {}]
  %s6 = inlined_call_operand.<no memory space> [shape: f32[1,1], index: 6, kind: input, shape index: {}]
  %s7 = inlined_call_operand.hbm [shape: f32[1,128], index: 7, kind: output, shape index: {}]
  %s8 = sld [smem:[#allocation0]]
  $region62: #{tpu_custom_call.1} parent=0
    _
  %s10 = ssub.s32 1, %s8
  %s11 = scalar_select 0, %s10, %s8
  %12 = sst [smem:[#allocation2]] %s6
  $region1: #{tpu_custom_call.1} parent=0
    #allocation3 [shape = 'u8[131072]{0}', space=vmem, size = 0x20000, scoped, tag = 'input window, operand 0, single buffered']
    #allocation4 [shape = 's32[1]{0}', space=sflag, size = 0x4, scoped, tag = 'scoped memory for tpu_custom_call.1']
    #allocation5 [shape = 's32[1]{0}', space=sflag, size = 0x4, scoped, tag = 'scoped memory for tpu_custom_call.1']
    #allocation6 [shape = 'u8[262144]{0}', space=vmem, size = 0x40000, scoped, tag = 'input window, operand 1, single buffered']
    #allocation7 [shape = 's32[1]{0}', space=sflag, size = 0x4, scoped, tag = 'scoped memory for tpu_custom_call.1']
    #allocation8 [shape = 'u8[2048]{0}', space=vmem, size = 0x800, scoped, tag = 'input window, operand 2, single buffered']
    #allocation9 [shape = 'u8[1048576]{0}', space=vmem, size = 0x100000, scoped, tag = 'input window, operand 3, single buffered']
    #allocation10 [shape = 's32[1]{0}', space=sflag, size = 0x4, scoped, tag = 'scoped memory for tpu_custom_call.1']
    #allocation11 [shape = 'u8[4096]{0}', space=vmem, size = 0x1000, scoped, tag = 'input window, operand 4, single buffered']
    #allocation12 [shape = 'u8[4096]{0}', space=vmem, size = 0x1000, scoped, tag = 'input window, operand 5, single buffered']
    #allocation13 [shape = 's32[1]{0}', space=sflag, size = 0x4, scoped, tag = 'scoped memory for tpu_custom_call.1']
    #allocation14 [shape = 'u8[512]{0}', space=vmem, size = 0x400, scoped, tag = 'output window, operand 0, single buffered']
    %13 = vsyncpa [#allocation4], 0
    %14 = vsyncpa [#allocation7], 0
    %15 = vsyncpa [#allocation10], 0
    %16 = vsyncpa [#allocation13], 0
    %17 = vsyncpa [#allocation5], 0
    // Predicated region
    $region2: #{tpu_custom_call.1} parent=1 // pred_check
      _
    $region3: #{tpu_custom_call.1} parent=1 // pred_check_branch
      %19 = sbr.rel (0) target = $region5
    $region4: #{tpu_custom_call.1} parent=1 // pred_region
      %21 = vsyncadd [#allocation4], 0
      %s22 = sshll.u32 %s0, 4
      %s23 = int_to_ptr.hbm [resolvable:$true] %s22
      %s24 = sshll.u32 [#allocation3], 4
      %s25 = int_to_ptr.vmem [resolvable:$true] %s24
      %30 = dma.hbm_to_vmem [thread:$0]  %s23, 4096, %s25, [#allocation4], 256, 256, 16
    $region5: #{tpu_custom_call.1} parent=1 // pred_fallthru
      _
    // Predicated region
    $region6: #{tpu_custom_call.1} parent=1 // pred_check
      _
    $region7: #{tpu_custom_call.1} parent=1 // pred_check_branch
      %32 = sbr.rel (0) target = $region9
    $region8: #{tpu_custom_call.1} parent=1 // pred_region
      %34 = vsyncadd [#allocation7], 0
      %s35 = sshll.u32 %s1, 4
      %s36 = int_to_ptr.hbm [resolvable:$true] %s35
      %s37 = sshll.u32 [#allocation6], 4
      %s38 = int_to_ptr.vmem [resolvable:$true] %s37
      %43 = dma.hbm_to_vmem [thread:$0]  %s36, 8192, %s38, [#allocation7], 256, 256, 16
    $region9: #{tpu_custom_call.1} parent=1 // pred_fallthru
      _
    // Predicated region
    $region10: #{tpu_custom_call.1} parent=1 // pred_check
      _
    $region11: #{tpu_custom_call.1} parent=1 // pred_check_branch
      %45 = sbr.rel (0) target = $region13
    $region12: #{tpu_custom_call.1} parent=1 // pred_region
      %47 = vsyncadd [#allocation7], 0
      %s49 = sshll.u32 %s2, 4
      %s50 = int_to_ptr.hbm [resolvable:$true] %s49
      %s51 = sshll.u32 [#allocation8], 4
      %s52 = int_to_ptr.vmem [resolvable:$true] %s51
      %54 = dma.hbm_to_vmem [thread:$0]  %s50, 64, %s52, [#allocation7]
    $region13: #{tpu_custom_call.1} parent=1 // pred_fallthru
      _
    // Predicated region
    $region14: #{tpu_custom_call.1} parent=1 // pred_check
      _
    $region15: #{tpu_custom_call.1} parent=1 // pred_check_branch
      %56 = sbr.rel (0) target = $region17
    $region16: #{tpu_custom_call.1} parent=1 // pred_region
      %58 = vsyncadd [#allocation10], 0
      %s59 = sshll.u32 %s3, 4
      %s60 = int_to_ptr.hbm [resolvable:$true] %s59
      %s61 = sshll.u32 [#allocation9], 4
      %s62 = int_to_ptr.vmem [resolvable:$true] %s61
      %67 = dma.hbm_to_vmem [thread:$0]  %s60, 32768, %s62, [#allocation10], 512, 512, 32
    $region17: #{tpu_custom_call.1} parent=1 // pred_fallthru
      _
    // Predicated region
    $region18: #{tpu_custom_call.1} parent=1 // pred_check
      _
    $region19: #{tpu_custom_call.1} parent=1 // pred_check_branch
      %69 = sbr.rel (0) target = $region21
    $region20: #{tpu_custom_call.1} parent=1 // pred_region
      %71 = vsyncadd [#allocation10], 0
      %s73 = sshll.u32 %s4, 4
      %s74 = int_to_ptr.hbm [resolvable:$true] %s73
      %s75 = sshll.u32 [#allocation11], 4
      %s76 = int_to_ptr.vmem [resolvable:$true] %s75
      %78 = dma.hbm_to_vmem [thread:$0]  %s74, 128, %s76, [#allocation10]
    $region21: #{tpu_custom_call.1} parent=1 // pred_fallthru
      _
    // Predicated region
    $region22: #{tpu_custom_call.1} parent=1 // pred_check
      _
    $region23: #{tpu_custom_call.1} parent=1 // pred_check_branch
      %80 = sbr.rel (0) target = $region25
    $region24: #{tpu_custom_call.1} parent=1 // pred_region
      %82 = vsyncadd [#allocation13], 0
      %s84 = sshll.u32 %s5, 4
      %s85 = int_to_ptr.hbm [resolvable:$true] %s84
      %s86 = sshll.u32 [#allocation12], 4
      %s87 = int_to_ptr.vmem [resolvable:$true] %s86
      %89 = dma.hbm_to_vmem [thread:$0]  %s85, 128, %s87, [#allocation13]
    $region25: #{tpu_custom_call.1} parent=1 // pred_fallthru
      _
    // Predicated region
    $region26: #{tpu_custom_call.1} parent=1 // pred_check
      _
    $region27: #{tpu_custom_call.1} parent=1 // pred_check_branch
      %91 = sbr.rel (0) target = $region29
    $region28: #{tpu_custom_call.1} parent=1 // pred_region
      _
    $region29: #{tpu_custom_call.1} parent=1 // pred_fallthru
      _
    // Predicated region
    $region30: #{tpu_custom_call.1} parent=1 // pred_check
      _
    $region31: #{tpu_custom_call.1} parent=1 // pred_check_branch
      %93 = sbr.rel (0) target = $region33
    $region32: #{tpu_custom_call.1} parent=1 // pred_region
      %95 = dma.done [#allocation4], 4096
    $region33: #{tpu_custom_call.1} parent=1 // pred_fallthru
      _
    // Predicated region
    $region34: #{tpu_custom_call.1} parent=1 // pred_check
      _
    $region35: #{tpu_custom_call.1} parent=1 // pred_check_branch
      %97 = sbr.rel (0) target = $region37
    $region36: #{tpu_custom_call.1} parent=1 // pred_region
      %99 = dma.done [#allocation7], 8192
    $region37: #{tpu_custom_call.1} parent=1 // pred_fallthru
      _
    // Predicated region
    $region38: #{tpu_custom_call.1} parent=1 // pred_check
      _
    $region39: #{tpu_custom_call.1} parent=1 // pred_check_branch
      %101 = sbr.rel (0) target = $region41
    $region40: #{tpu_custom_call.1} parent=1 // pred_region
      %103 = dma.done [#allocation7], 64
    $region41: #{tpu_custom_call.1} parent=1 // pred_fallthru
      _
    // Predicated region
    $region42: #{tpu_custom_call.1} parent=1 // pred_check
      _
    $region43: #{tpu_custom_call.1} parent=1 // pred_check_branch
      %105 = sbr.rel (0) target = $region45
    $region44: #{tpu_custom_call.1} parent=1 // pred_region
      %107 = dma.done [#allocation10], 32768
    $region45: #{tpu_custom_call.1} parent=1 // pred_fallthru
      _
    // Predicated region
    $region46: #{tpu_custom_call.1} parent=1 // pred_check
      _
    $region47: #{tpu_custom_call.1} parent=1 // pred_check_branch
      %109 = sbr.rel (0) target = $region49
    $region48: #{tpu_custom_call.1} parent=1 // pred_region
      %111 = dma.done [#allocation10], 128
    $region49: #{tpu_custom_call.1} parent=1 // pred_fallthru
      _
    // Predicated region
    $region50: #{tpu_custom_call.1} parent=1 // pred_check
      _
    $region51: #{tpu_custom_call.1} parent=1 // pred_check_branch
      %113 = sbr.rel (0) target = $region53
    $region52: #{tpu_custom_call.1} parent=1 // pred_region
      %115 = dma.done [#allocation13], 128
    $region53: #{tpu_custom_call.1} parent=1 // pred_fallthru
      _
    %v116 = vld [vmem:[#allocation3] sm:$0xff]
    %v117 = vld [vmem:[#allocation3 + $0x8] sm:$0xff]
    %v118 = vld [vmem:[#allocation3 + $0x10] sm:$0xff]
    %v119 = vld [vmem:[#allocation3 + $0x18] sm:$0xff]
    %v120 = vld [vmem:[#allocation3 + $0x20] sm:$0xff]
    %v121 = vld [vmem:[#allocation3 + $0x28] sm:$0xff]
    %v122 = vld [vmem:[#allocation3 + $0x30] sm:$0xff]
    %v123 = vld [vmem:[#allocation3 + $0x38] sm:$0xff]
    %v124 = vld [vmem:[#allocation3 + $0x40] sm:$0xff]
    %v125 = vld [vmem:[#allocation3 + $0x48] sm:$0xff]
    %v126 = vld [vmem:[#allocation3 + $0x50] sm:$0xff]
    %v127 = vld [vmem:[#allocation3 + $0x58] sm:$0xff]
    %v128 = vld [vmem:[#allocation3 + $0x60] sm:$0xff]
    %v129 = vld [vmem:[#allocation3 + $0x68] sm:$0xff]
    %v130 = vld [vmem:[#allocation3 + $0x70] sm:$0xff]
    %v131 = vld [vmem:[#allocation3 + $0x78] sm:$0xff]
    %v132 = vld [vmem:[#allocation3 + $0x80] sm:$0xff]
    %v133 = vld [vmem:[#allocation3 + $0x88] sm:$0xff]
    %v134 = vld [vmem:[#allocation3 + $0x90] sm:$0xff]
    %v135 = vld [vmem:[#allocation3 + $0x98] sm:$0xff]
    %v136 = vld [vmem:[#allocation3 + $0xa0] sm:$0xff]
    %v137 = vld [vmem:[#allocation3 + $0xa8] sm:$0xff]
    %v138 = vld [vmem:[#allocation3 + $0xb0] sm:$0xff]
    %v139 = vld [vmem:[#allocation3 + $0xb8] sm:$0xff]
    %v140 = vld [vmem:[#allocation3 + $0xc0] sm:$0xff]
    %v141 = vld [vmem:[#allocation3 + $0xc8] sm:$0xff]
    %v142 = vld [vmem:[#allocation3 + $0xd0] sm:$0xff]
    %v143 = vld [vmem:[#allocation3 + $0xd8] sm:$0xff]
    %v144 = vld [vmem:[#allocation3 + $0xe0] sm:$0xff]
    %v145 = vld [vmem:[#allocation3 + $0xe8] sm:$0xff]
    %v146 = vld [vmem:[#allocation3 + $0xf0] sm:$0xff]
    %v147 = vld [vmem:[#allocation3 + $0xf8] sm:$0xff]
    %v148 = vpack.c.bf16 %v118, %v116
    %v149 = vpack.c.bf16 %v119, %v117
    %v150 = vpack.c.bf16 %v122, %v120
    %v151 = vpack.c.bf16 %v123, %v121
    %v152 = vpack.c.bf16 %v126, %v124
    %v153 = vpack.c.bf16 %v127, %v125
    %v154 = vpack.c.bf16 %v130, %v128
    %v155 = vpack.c.bf16 %v131, %v129
    %v156 = vpack.c.bf16 %v134, %v132
    %v157 = vpack.c.bf16 %v135, %v133
    %v158 = vpack.c.bf16 %v138, %v136
    %v159 = vpack.c.bf16 %v139, %v137
    %v160 = vpack.c.bf16 %v142, %v140
    %v161 = vpack.c.bf16 %v143, %v141
    %v162 = vpack.c.bf16 %v146, %v144
    %v163 = vpack.c.bf16 %v147, %v145
    %v164 = vld [vmem:[#allocation6] sm:$0xff]
    %v165 = vld [vmem:[#allocation6 + $0x8] sm:$0xff]
    %v166 = vld [vmem:[#allocation6 + $0x10] sm:$0xff]
    %v167 = vld [vmem:[#allocation6 + $0x18] sm:$0xff]
    %v168 = vld [vmem:[#allocation6 + $0x20] sm:$0xff]
    %v169 = vld [vmem:[#allocation6 + $0x28] sm:$0xff]
    %v170 = vld [vmem:[#allocation6 + $0x30] sm:$0xff]
    %v171 = vld [vmem:[#allocation6 + $0x38] sm:$0xff]
    %v172 = vld [vmem:[#allocation6 + $0x40] sm:$0xff]
    %v173 = vld [vmem:[#allocation6 + $0x48] sm:$0xff]
    %v174 = vld [vmem:[#allocation6 + $0x50] sm:$0xff]
    %v175 = vld [vmem:[#allocation6 + $0x58] sm:$0xff]
    %v176 = vld [vmem:[#allocation6 + $0x60] sm:$0xff]
    %v177 = vld [vmem:[#allocation6 + $0x68] sm:$0xff]
    %v178 = vld [vmem:[#allocation6 + $0x70] sm:$0xff]
    %v179 = vld [vmem:[#allocation6 + $0x78] sm:$0xff]
    %v180 = vld [vmem:[#allocation6 + $0x80] sm:$0xff]
    %v181 = vld [vmem:[#allocation6 + $0x88] sm:$0xff]
    %v182 = vld [vmem:[#allocation6 + $0x90] sm:$0xff]
    %v183 = vld [vmem:[#allocation6 + $0x98] sm:$0xff]
    %v184 = vld [vmem:[#allocation6 + $0xa0] sm:$0xff]
    %v185 = vld [vmem:[#allocation6 + $0xa8] sm:$0xff]
    %v186 = vld [vmem:[#allocation6 + $0xb0] sm:$0xff]
    %v187 = vld [vmem:[#allocation6 + $0xb8] sm:$0xff]
    %v188 = vld [vmem:[#allocation6 + $0xc0] sm:$0xff]
    %v189 = vld [vmem:[#allocation6 + $0xc8] sm:$0xff]
    %v190 = vld [vmem:[#allocation6 + $0xd0] sm:$0xff]
    %v191 = vld [vmem:[#allocation6 + $0xd8] sm:$0xff]
    %v192 = vld [vmem:[#allocation6 + $0xe0] sm:$0xff]
    %v193 = vld [vmem:[#allocation6 + $0xe8] sm:$0xff]
    %v194 = vld [vmem:[#allocation6 + $0xf0] sm:$0xff]
    %v195 = vld [vmem:[#allocation6 + $0xf8] sm:$0xff]
    %v196 = vld [vmem:[#allocation6 + $0x100] sm:$0xff]
    %v197 = vld [vmem:[#allocation6 + $0x108] sm:$0xff]
    %v198 = vld [vmem:[#allocation6 + $0x110] sm:$0xff]
    %v199 = vld [vmem:[#allocation6 + $0x118] sm:$0xff]
    %v200 = vld [vmem:[#allocation6 + $0x120] sm:$0xff]
    %v201 = vld [vmem:[#allocation6 + $0x128] sm:$0xff]
    %v202 = vld [vmem:[#allocation6 + $0x130] sm:$0xff]
    %v203 = vld [vmem:[#allocation6 + $0x138] sm:$0xff]
    %v204 = vld [vmem:[#allocation6 + $0x140] sm:$0xff]
    %v205 = vld [vmem:[#allocation6 + $0x148] sm:$0xff]
    %v206 = vld [vmem:[#allocation6 + $0x150] sm:$0xff]
    %v207 = vld [vmem:[#allocation6 + $0x158] sm:$0xff]
    %v208 = vld [vmem:[#allocation6 + $0x160] sm:$0xff]
    %v209 = vld [vmem:[#allocation6 + $0x168] sm:$0xff]
    %v210 = vld [vmem:[#allocation6 + $0x170] sm:$0xff]
    %v211 = vld [vmem:[#allocation6 + $0x178] sm:$0xff]
    %v212 = vld [vmem:[#allocation6 + $0x180] sm:$0xff]
    %v213 = vld [vmem:[#allocation6 + $0x188] sm:$0xff]
    %v214 = vld [vmem:[#allocation6 + $0x190] sm:$0xff]
    %v215 = vld [vmem:[#allocation6 + $0x198] sm:$0xff]
    %v216 = vld [vmem:[#allocation6 + $0x1a0] sm:$0xff]
    %v217 = vld [vmem:[#allocation6 + $0x1a8] sm:$0xff]
    %v218 = vld [vmem:[#allocation6 + $0x1b0] sm:$0xff]
    %v219 = vld [vmem:[#allocation6 + $0x1b8] sm:$0xff]
    %v220 = vld [vmem:[#allocation6 + $0x1c0] sm:$0xff]
    %v221 = vld [vmem:[#allocation6 + $0x1c8] sm:$0xff]
    %v222 = vld [vmem:[#allocation6 + $0x1d0] sm:$0xff]
    %v223 = vld [vmem:[#allocation6 + $0x1d8] sm:$0xff]
    %v224 = vld [vmem:[#allocation6 + $0x1e0] sm:$0xff]
    %v225 = vld [vmem:[#allocation6 + $0x1e8] sm:$0xff]
    %v226 = vld [vmem:[#allocation6 + $0x1f0] sm:$0xff]
    %v227 = vld [vmem:[#allocation6 + $0x1f8] sm:$0xff]
    %v292 = vunpack.c.l.b16 %v164
    %v293 = vunpack.c.h.b16 %v164
    %v294 = vunpack.c.l.b16 %v165
    %v295 = vunpack.c.h.b16 %v165
    %v296 = vunpack.c.l.b16 %v166
    %v297 = vunpack.c.h.b16 %v166
    %v298 = vunpack.c.l.b16 %v167
    %v299 = vunpack.c.h.b16 %v167
    %v300 = vunpack.c.l.b16 %v168
    %v301 = vunpack.c.h.b16 %v168
    %v302 = vunpack.c.l.b16 %v169
    %v303 = vunpack.c.h.b16 %v169
    %v304 = vunpack.c.l.b16 %v170
    %v305 = vunpack.c.h.b16 %v170
    %v306 = vunpack.c.l.b16 %v171
    %v307 = vunpack.c.h.b16 %v171
    %v308 = vunpack.c.l.b16 %v172
    %v309 = vunpack.c.h.b16 %v172
    %v310 = vunpack.c.l.b16 %v173
    %v311 = vunpack.c.h.b16 %v173
    %v312 = vunpack.c.l.b16 %v174
    %v313 = vunpack.c.h.b16 %v174
    %v314 = vunpack.c.l.b16 %v175
    %v315 = vunpack.c.h.b16 %v175
    %v316 = vunpack.c.l.b16 %v176
    %v317 = vunpack.c.h.b16 %v176
    %v318 = vunpack.c.l.b16 %v177
    %v319 = vunpack.c.h.b16 %v177
    %v320 = vunpack.c.l.b16 %v178
    %v321 = vunpack.c.h.b16 %v178
    %v322 = vunpack.c.l.b16 %v179
    %v323 = vunpack.c.h.b16 %v179
    %v324 = vunpack.c.l.b16 %v180
    %v325 = vunpack.c.h.b16 %v180
    %v326 = vunpack.c.l.b16 %v181
    %v327 = vunpack.c.h.b16 %v181
    %v328 = vunpack.c.l.b16 %v182
    %v329 = vunpack.c.h.b16 %v182
    %v330 = vunpack.c.l.b16 %v183
    %v331 = vunpack.c.h.b16 %v183
    %v332 = vunpack.c.l.b16 %v184
    %v333 = vunpack.c.h.b16 %v184
    %v334 = vunpack.c.l.b16 %v185
    %v335 = vunpack.c.h.b16 %v185
    %v336 = vunpack.c.l.b16 %v186
    %v337 = vunpack.c.h.b16 %v186
    %v338 = vunpack.c.l.b16 %v187
    %v339 = vunpack.c.h.b16 %v187
    %v340 = vunpack.c.l.b16 %v188
    %v341 = vunpack.c.h.b16 %v188
    %v342 = vunpack.c.l.b16 %v189
    %v343 = vunpack.c.h.b16 %v189
    %v344 = vunpack.c.l.b16 %v190
    %v345 = vunpack.c.h.b16 %v190
    %v346 = vunpack.c.l.b16 %v191
    %v347 = vunpack.c.h.b16 %v191
    %v348 = vunpack.c.l.b16 %v192
    %v349 = vunpack.c.h.b16 %v192
    %v350 = vunpack.c.l.b16 %v193
    %v351 = vunpack.c.h.b16 %v193
    %v352 = vunpack.c.l.b16 %v194
    %v353 = vunpack.c.h.b16 %v194
    %v354 = vunpack.c.l.b16 %v195
    %v355 = vunpack.c.h.b16 %v195
    %v356 = vunpack.c.l.b16 %v196
    %v357 = vunpack.c.h.b16 %v196
    %v358 = vunpack.c.l.b16 %v197
    %v359 = vunpack.c.h.b16 %v197
    %v360 = vunpack.c.l.b16 %v198
    %v361 = vunpack.c.h.b16 %v198
    %v362 = vunpack.c.l.b16 %v199
    %v363 = vunpack.c.h.b16 %v199
    %v364 = vunpack.c.l.b16 %v200
    %v365 = vunpack.c.h.b16 %v200
    %v366 = vunpack.c.l.b16 %v201
    %v367 = vunpack.c.h.b16 %v201
    %v368 = vunpack.c.l.b16 %v202
    %v369 = vunpack.c.h.b16 %v202
    %v370 = vunpack.c.l.b16 %v203
    %v371 = vunpack.c.h.b16 %v203
    %v372 = vunpack.c.l.b16 %v204
    %v373 = vunpack.c.h.b16 %v204
    %v374 = vunpack.c.l.b16 %v205
    %v375 = vunpack.c.h.b16 %v205
    %v376 = vunpack.c.l.b16 %v206
    %v377 = vunpack.c.h.b16 %v206
    %v378 = vunpack.c.l.b16 %v207
    %v379 = vunpack.c.h.b16 %v207
    %v380 = vunpack.c.l.b16 %v208
    %v381 = vunpack.c.h.b16 %v208
    %v382 = vunpack.c.l.b16 %v209
    %v383 = vunpack.c.h.b16 %v209
    %v384 = vunpack.c.l.b16 %v210
    %v385 = vunpack.c.h.b16 %v210
    %v386 = vunpack.c.l.b16 %v211
    %v387 = vunpack.c.h.b16 %v211
    %v388 = vunpack.c.l.b16 %v212
    %v389 = vunpack.c.h.b16 %v212
    %v390 = vunpack.c.l.b16 %v213
    %v391 = vunpack.c.h.b16 %v213
    %v392 = vunpack.c.l.b16 %v214
    %v393 = vunpack.c.h.b16 %v214
    %v394 = vunpack.c.l.b16 %v215
    %v395 = vunpack.c.h.b16 %v215
    %v396 = vunpack.c.l.b16 %v216
    %v397 = vunpack.c.h.b16 %v216
    %v398 = vunpack.c.l.b16 %v217
    %v399 = vunpack.c.h.b16 %v217
    %v400 = vunpack.c.l.b16 %v218
    %v401 = vunpack.c.h.b16 %v218
    %v402 = vunpack.c.l.b16 %v219
    %v403 = vunpack.c.h.b16 %v219
    %v404 = vunpack.c.l.b16 %v220
    %v405 = vunpack.c.h.b16 %v220
    %v406 = vunpack.c.l.b16 %v221
    %v407 = vunpack.c.h.b16 %v221
    %v408 = vunpack.c.l.b16 %v222
    %v409 = vunpack.c.h.b16 %v222
    %v410 = vunpack.c.l.b16 %v223
    %v411 = vunpack.c.h.b16 %v223
    %v412 = vunpack.c.l.b16 %v224
    %v413 = vunpack.c.h.b16 %v224
    %v414 = vunpack.c.l.b16 %v225
    %v415 = vunpack.c.h.b16 %v225
    %v416 = vunpack.c.l.b16 %v226
    %v417 = vunpack.c.h.b16 %v226
    %v418 = vunpack.c.l.b16 %v227
    %v419 = vunpack.c.h.b16 %v227
    %v420 = vpack.c.b16 %v296, %v292
    %v421 = vpack.c.b16 %v297, %v293
    %v422 = vpack.c.b16 %v298, %v294
    %v423 = vpack.c.b16 %v299, %v295
    %v424 = vpack.c.b16 %v304, %v300
    %v425 = vpack.c.b16 %v305, %v301
    %v426 = vpack.c.b16 %v306, %v302
    %v427 = vpack.c.b16 %v307, %v303
    %v428 = vpack.c.b16 %v312, %v308
    %v429 = vpack.c.b16 %v313, %v309
    %v430 = vpack.c.b16 %v314, %v310
    %v431 = vpack.c.b16 %v315, %v311
    %v432 = vpack.c.b16 %v320, %v316
    %v433 = vpack.c.b16 %v321, %v317
    %v434 = vpack.c.b16 %v322, %v318
    %v435 = vpack.c.b16 %v323, %v319
    %v436 = vpack.c.b16 %v328, %v324
    %v437 = vpack.c.b16 %v329, %v325
    %v438 = vpack.c.b16 %v330, %v326
    %v439 = vpack.c.b16 %v331, %v327
    %v440 = vpack.c.b16 %v336, %v332
    %v441 = vpack.c.b16 %v337, %v333
    %v442 = vpack.c.b16 %v338, %v334
    %v443 = vpack.c.b16 %v339, %v335
    %v444 = vpack.c.b16 %v344, %v340
    %v445 = vpack.c.b16 %v345, %v341
    %v446 = vpack.c.b16 %v346, %v342
    %v447 = vpack.c.b16 %v347, %v343
    %v448 = vpack.c.b16 %v352, %v348
    %v449 = vpack.c.b16 %v353, %v349
    %v450 = vpack.c.b16 %v354, %v350
    %v451 = vpack.c.b16 %v355, %v351
    %v452 = vpack.c.b16 %v360, %v356
    %v453 = vpack.c.b16 %v361, %v357
    %v454 = vpack.c.b16 %v362, %v358
    %v455 = vpack.c.b16 %v363, %v359
    %v456 = vpack.c.b16 %v368, %v364
    %v457 = vpack.c.b16 %v369, %v365
    %v458 = vpack.c.b16 %v370, %v366
    %v459 = vpack.c.b16 %v371, %v367
    %v460 = vpack.c.b16 %v376, %v372
    %v461 = vpack.c.b16 %v377, %v373
    %v462 = vpack.c.b16 %v378, %v374
    %v463 = vpack.c.b16 %v379, %v375
    %v464 = vpack.c.b16 %v384, %v380
    %v465 = vpack.c.b16 %v385, %v381
    %v466 = vpack.c.b16 %v386, %v382
    %v467 = vpack.c.b16 %v387, %v383
    %v468 = vpack.c.b16 %v392, %v388
    %v469 = vpack.c.b16 %v393, %v389
    %v470 = vpack.c.b16 %v394, %v390
    %v471 = vpack.c.b16 %v395, %v391
    %v472 = vpack.c.b16 %v400, %v396
    %v473 = vpack.c.b16 %v401, %v397
    %v474 = vpack.c.b16 %v402, %v398
    %v475 = vpack.c.b16 %v403, %v399
    %v476 = vpack.c.b16 %v408, %v404
    %v477 = vpack.c.b16 %v409, %v405
    %v478 = vpack.c.b16 %v410, %v406
    %v479 = vpack.c.b16 %v411, %v407
    %v480 = vpack.c.b16 %v416, %v412
    %v481 = vpack.c.b16 %v417, %v413
    %v482 = vpack.c.b16 %v418, %v414
    %v483 = vpack.c.b16 %v419, %v415
    %548 = vmatpush.bf16.msra.mxu0 %v448
    %549 = vmatpush.bf16.msra.mxu0 %v444
    %550 = vmatpush.bf16.msra.mxu0 %v440
    %551 = vmatpush.bf16.msra.mxu0 %v436
    %552 = vmatpush.bf16.msra.mxu0 %v432
    %553 = vmatpush.bf16.msra.mxu0 %v428
    %554 = vmatpush.bf16.msra.mxu0 %v424
    %555 = vmatpush.bf16.msra.mxu0 %v420
    %556 = vmatmul.bf16.gmra.mxu0 %v148
    %v557 = vpop.f32.mrf.mxu0
    %v558 = vadd.f32 0.0, %v557
    %v559 = vpop.f32.mrf.mxu0
    %v560 = vadd.f32 0.0, %v559
    %561 = vmatmul.bf16.gmra.mxu0 %v150
    %v562 = vpop.f32.mrf.mxu0
    %v563 = vadd.f32 0.0, %v562
    %v564 = vpop.f32.mrf.mxu0
    %v565 = vadd.f32 0.0, %v564
    %566 = vmatmul.bf16.gmra.mxu0 %v152
    %v567 = vpop.f32.mrf.mxu0
    %v568 = vadd.f32 0.0, %v567
    %v569 = vpop.f32.mrf.mxu0
    %v570 = vadd.f32 0.0, %v569
    %571 = vmatmul.bf16.gmra.mxu0 %v154
    %v572 = vpop.f32.mrf.mxu0
    %v573 = vadd.f32 0.0, %v572
    %v574 = vpop.f32.mrf.mxu0
    %v575 = vadd.f32 0.0, %v574
    %576 = vmatmul.bf16.gmra.mxu0 %v156
    %v577 = vpop.f32.mrf.mxu0
    %v578 = vadd.f32 0.0, %v577
    %v579 = vpop.f32.mrf.mxu0
    %v580 = vadd.f32 0.0, %v579
    %581 = vmatmul.bf16.gmra.mxu0 %v158
    %v582 = vpop.f32.mrf.mxu0
    %v583 = vadd.f32 0.0, %v582
    %v584 = vpop.f32.mrf.mxu0
    %v585 = vadd.f32 0.0, %v584
    %586 = vmatmul.bf16.gmra.mxu0 %v160
    %v587 = vpop.f32.mrf.mxu0
    %v588 = vadd.f32 0.0, %v587
    %v589 = vpop.f32.mrf.mxu0
    %v590 = vadd.f32 0.0, %v589
    %591 = vmatmul.bf16.gmra.mxu0 %v162
    %v592 = vpop.f32.mrf.mxu0
    %v593 = vadd.f32 0.0, %v592
    %v594 = vpop.f32.mrf.mxu0
    %v595 = vadd.f32 0.0, %v594
    %596 = vdwg.mxu0
    %597 = vmatpush.bf16.msra.mxu0 %v480
    %598 = vmatpush.bf16.msra.mxu0 %v476
    %599 = vmatpush.bf16.msra.mxu0 %v472
    %600 = vmatpush.bf16.msra.mxu0 %v468
    %601 = vmatpush.bf16.msra.mxu0 %v464
    %602 = vmatpush.bf16.msra.mxu0 %v460
    %603 = vmatpush.bf16.msra.mxu0 %v456
    %604 = vmatpush.bf16.msra.mxu0 %v452
    %605 = vmatmul.bf16.gmra.mxu0 %v149
    %v606 = vpop.f32.mrf.mxu0
    %v607 = vadd.f32 %v558, %v606
    %v608 = vpop.f32.mrf.mxu0
    %v609 = vadd.f32 %v560, %v608
    %610 = vmatmul.bf16.gmra.mxu0 %v151
    %v611 = vpop.f32.mrf.mxu0
    %v612 = vadd.f32 %v563, %v611
    %v613 = vpop.f32.mrf.mxu0
    %v614 = vadd.f32 %v565, %v613
    %615 = vmatmul.bf16.gmra.mxu0 %v153
    %v616 = vpop.f32.mrf.mxu0
    %v617 = vadd.f32 %v568, %v616
    %v618 = vpop.f32.mrf.mxu0
    %v619 = vadd.f32 %v570, %v618
    %620 = vmatmul.bf16.gmra.mxu0 %v155
    %v621 = vpop.f32.mrf.mxu0
    %v622 = vadd.f32 %v573, %v621
    %v623 = vpop.f32.mrf.mxu0
    %v624 = vadd.f32 %v575, %v623
    %625 = vmatmul.bf16.gmra.mxu0 %v157
    %v626 = vpop.f32.mrf.mxu0
    %v627 = vadd.f32 %v578, %v626
    %v628 = vpop.f32.mrf.mxu0
    %v629 = vadd.f32 %v580, %v628
    %630 = vmatmul.bf16.gmra.mxu0 %v159
    %v631 = vpop.f32.mrf.mxu0
    %v632 = vadd.f32 %v583, %v631
    %v633 = vpop.f32.mrf.mxu0
    %v634 = vadd.f32 %v585, %v633
    %635 = vmatmul.bf16.gmra.mxu0 %v161
    %v636 = vpop.f32.mrf.mxu0
    %v637 = vadd.f32 %v588, %v636
    %v638 = vpop.f32.mrf.mxu0
    %v639 = vadd.f32 %v590, %v638
    %640 = vmatmul.bf16.gmra.mxu0 %v163
    %v641 = vpop.f32.mrf.mxu0
    %v642 = vadd.f32 %v593, %v641
    %v643 = vpop.f32.mrf.mxu0
    %v644 = vadd.f32 %v595, %v643
    %645 = vdwg.mxu0
    %646 = vmatpush.bf16.msra.mxu0 %v449
    %647 = vmatpush.bf16.msra.mxu0 %v445
    %648 = vmatpush.bf16.msra.mxu0 %v441
    %649 = vmatpush.bf16.msra.mxu0 %v437
    %650 = vmatpush.bf16.msra.mxu0 %v433
    %651 = vmatpush.bf16.msra.mxu0 %v429
    %652 = vmatpush.bf16.msra.mxu0 %v425
    %653 = vmatpush.bf16.msra.mxu0 %v421
    %654 = vmatmul.bf16.gmra.mxu0 %v148
    %v655 = vpop.f32.mrf.mxu0
    %v656 = vadd.f32 0.0, %v655
    %v657 = vpop.f32.mrf.mxu0
    %v658 = vadd.f32 0.0, %v657
    %659 = vmatmul.bf16.gmra.mxu0 %v150
    %v660 = vpop.f32.mrf.mxu0
    %v661 = vadd.f32 0.0, %v660
    %v662 = vpop.f32.mrf.mxu0
    %v663 = vadd.f32 0.0, %v662
    %664 = vmatmul.bf16.gmra.mxu0 %v152
    %v665 = vpop.f32.mrf.mxu0
    %v666 = vadd.f32 0.0, %v665
    %v667 = vpop.f32.mrf.mxu0
    %v668 = vadd.f32 0.0, %v667
    %669 = vmatmul.bf16.gmra.mxu0 %v154
    %v670 = vpop.f32.mrf.mxu0
    %v671 = vadd.f32 0.0, %v670
    %v672 = vpop.f32.mrf.mxu0
    %v673 = vadd.f32 0.0, %v672
    %674 = vmatmul.bf16.gmra.mxu0 %v156
    %v675 = vpop.f32.mrf.mxu0
    %v676 = vadd.f32 0.0, %v675
    %v677 = vpop.f32.mrf.mxu0
    %v678 = vadd.f32 0.0, %v677
    %679 = vmatmul.bf16.gmra.mxu0 %v158
    %v680 = vpop.f32.mrf.mxu0
    %v681 = vadd.f32 0.0, %v680
    %v682 = vpop.f32.mrf.mxu0
    %v683 = vadd.f32 0.0, %v682
    %684 = vmatmul.bf16.gmra.mxu0 %v160
    %v685 = vpop.f32.mrf.mxu0
    %v686 = vadd.f32 0.0, %v685
    %v687 = vpop.f32.mrf.mxu0
    %v688 = vadd.f32 0.0, %v687
    %689 = vmatmul.bf16.gmra.mxu0 %v162
    %v690 = vpop.f32.mrf.mxu0
    %v691 = vadd.f32 0.0, %v690
    %v692 = vpop.f32.mrf.mxu0
    %v693 = vadd.f32 0.0, %v692
    %694 = vdwg.mxu0
    %695 = vmatpush.bf16.msra.mxu0 %v481
    %696 = vmatpush.bf16.msra.mxu0 %v477
    %697 = vmatpush.bf16.msra.mxu0 %v473
    %698 = vmatpush.bf16.msra.mxu0 %v469
    %699 = vmatpush.bf16.msra.mxu0 %v465
    %700 = vmatpush.bf16.msra.mxu0 %v461
    %701 = vmatpush.bf16.msra.mxu0 %v457
    %702 = vmatpush.bf16.msra.mxu0 %v453
    %703 = vmatmul.bf16.gmra.mxu0 %v149
    %v704 = vpop.f32.mrf.mxu0
    %v705 = vadd.f32 %v656, %v704
    %v706 = vpop.f32.mrf.mxu0
    %v707 = vadd.f32 %v658, %v706
    %708 = vmatmul.bf16.gmra.mxu0 %v151
    %v709 = vpop.f32.mrf.mxu0
    %v710 = vadd.f32 %v661, %v709
    %v711 = vpop.f32.mrf.mxu0
    %v712 = vadd.f32 %v663, %v711
    %713 = vmatmul.bf16.gmra.mxu0 %v153
    %v714 = vpop.f32.mrf.mxu0
    %v715 = vadd.f32 %v666, %v714
    %v716 = vpop.f32.mrf.mxu0
    %v717 = vadd.f32 %v668, %v716
    %718 = vmatmul.bf16.gmra.mxu0 %v155
    %v719 = vpop.f32.mrf.mxu0
    %v720 = vadd.f32 %v671, %v719
    %v721 = vpop.f32.mrf.mxu0
    %v722 = vadd.f32 %v673, %v721
    %723 = vmatmul.bf16.gmra.mxu0 %v157
    %v724 = vpop.f32.mrf.mxu0
    %v725 = vadd.f32 %v676, %v724
    %v726 = vpop.f32.mrf.mxu0
    %v727 = vadd.f32 %v678, %v726
    %728 = vmatmul.bf16.gmra.mxu0 %v159
    %v729 = vpop.f32.mrf.mxu0
    %v730 = vadd.f32 %v681, %v729
    %v731 = vpop.f32.mrf.mxu0
    %v732 = vadd.f32 %v683, %v731
    %733 = vmatmul.bf16.gmra.mxu0 %v161
    %v734 = vpop.f32.mrf.mxu0
    %v735 = vadd.f32 %v686, %v734
    %v736 = vpop.f32.mrf.mxu0
    %v737 = vadd.f32 %v688, %v736
    %738 = vmatmul.bf16.gmra.mxu0 %v163
    %v739 = vpop.f32.mrf.mxu0
    %v740 = vadd.f32 %v691, %v739
    %v741 = vpop.f32.mrf.mxu0
    %v742 = vadd.f32 %v693, %v741
    %743 = vdwg.mxu0
    %744 = vmatpush.bf16.msra.mxu0 %v450
    %745 = vmatpush.bf16.msra.mxu0 %v446
    %746 = vmatpush.bf16.msra.mxu0 %v442
    %747 = vmatpush.bf16.msra.mxu0 %v438
    %748 = vmatpush.bf16.msra.mxu0 %v434
    %749 = vmatpush.bf16.msra.mxu0 %v430
    %750 = vmatpush.bf16.msra.mxu0 %v426
    %751 = vmatpush.bf16.msra.mxu0 %v422
    %752 = vmatmul.bf16.gmra.mxu0 %v148
    %v753 = vpop.f32.mrf.mxu0
    %v754 = vadd.f32 0.0, %v753
    %v755 = vpop.f32.mrf.mxu0
    %v756 = vadd.f32 0.0, %v755
    %757 = vmatmul.bf16.gmra.mxu0 %v150
    %v758 = vpop.f32.mrf.mxu0
    %v759 = vadd.f32 0.0, %v758
    %v760 = vpop.f32.mrf.mxu0
    %v761 = vadd.f32 0.0, %v760
    %762 = vmatmul.bf16.gmra.mxu0 %v152
    %v763 = vpop.f32.mrf.mxu0
    %v764 = vadd.f32 0.0, %v763
    %v765 = vpop.f32.mrf.mxu0
    %v766 = vadd.f32 0.0, %v765
    %767 = vmatmul.bf16.gmra.mxu0 %v154
    %v768 = vpop.f32.mrf.mxu0
    %v769 = vadd.f32 0.0, %v768
    %v770 = vpop.f32.mrf.mxu0
    %v771 = vadd.f32 0.0, %v770
    %772 = vmatmul.bf16.gmra.mxu0 %v156
    %v773 = vpop.f32.mrf.mxu0
    %v774 = vadd.f32 0.0, %v773
    %v775 = vpop.f32.mrf.mxu0
    %v776 = vadd.f32 0.0, %v775
    %777 = vmatmul.bf16.gmra.mxu0 %v158
    %v778 = vpop.f32.mrf.mxu0
    %v779 = vadd.f32 0.0, %v778
    %v780 = vpop.f32.mrf.mxu0
    %v781 = vadd.f32 0.0, %v780
    %782 = vmatmul.bf16.gmra.mxu0 %v160
    %v783 = vpop.f32.mrf.mxu0
    %v784 = vadd.f32 0.0, %v783
    %v785 = vpop.f32.mrf.mxu0
    %v786 = vadd.f32 0.0, %v785
    %787 = vmatmul.bf16.gmra.mxu0 %v162
    %v788 = vpop.f32.mrf.mxu0
    %v789 = vadd.f32 0.0, %v788
    %v790 = vpop.f32.mrf.mxu0
    %v791 = vadd.f32 0.0, %v790
    %792 = vdwg.mxu0
    %793 = vmatpush.bf16.msra.mxu0 %v482
    %794 = vmatpush.bf16.msra.mxu0 %v478
    %795 = vmatpush.bf16.msra.mxu0 %v474
    %796 = vmatpush.bf16.msra.mxu0 %v470
    %797 = vmatpush.bf16.msra.mxu0 %v466
    %798 = vmatpush.bf16.msra.mxu0 %v462
    %799 = vmatpush.bf16.msra.mxu0 %v458
    %800 = vmatpush.bf16.msra.mxu0 %v454
    %801 = vmatmul.bf16.gmra.mxu0 %v149
    %v802 = vpop.f32.mrf.mxu0
    %v803 = vadd.f32 %v754, %v802
    %v804 = vpop.f32.mrf.mxu0
    %v805 = vadd.f32 %v756, %v804
    %806 = vmatmul.bf16.gmra.mxu0 %v151
    %v807 = vpop.f32.mrf.mxu0
    %v808 = vadd.f32 %v759, %v807
    %v809 = vpop.f32.mrf.mxu0
    %v810 = vadd.f32 %v761, %v809
    %811 = vmatmul.bf16.gmra.mxu0 %v153
    %v812 = vpop.f32.mrf.mxu0
    %v813 = vadd.f32 %v764, %v812
    %v814 = vpop.f32.mrf.mxu0
    %v815 = vadd.f32 %v766, %v814
    %816 = vmatmul.bf16.gmra.mxu0 %v155
    %v817 = vpop.f32.mrf.mxu0
    %v818 = vadd.f32 %v769, %v817
    %v819 = vpop.f32.mrf.mxu0
    %v820 = vadd.f32 %v771, %v819
    %821 = vmatmul.bf16.gmra.mxu0 %v157
    %v822 = vpop.f32.mrf.mxu0
    %v823 = vadd.f32 %v774, %v822
    %v824 = vpop.f32.mrf.mxu0
    %v825 = vadd.f32 %v776, %v824
    %826 = vmatmul.bf16.gmra.mxu0 %v159
    %v827 = vpop.f32.mrf.mxu0
    %v828 = vadd.f32 %v779, %v827
    %v829 = vpop.f32.mrf.mxu0
    %v830 = vadd.f32 %v781, %v829
    %831 = vmatmul.bf16.gmra.mxu0 %v161
    %v832 = vpop.f32.mrf.mxu0
    %v833 = vadd.f32 %v784, %v832
    %v834 = vpop.f32.mrf.mxu0
    %v835 = vadd.f32 %v786, %v834
    %836 = vmatmul.bf16.gmra.mxu0 %v163
    %v837 = vpop.f32.mrf.mxu0
    %v838 = vadd.f32 %v789, %v837
    %v839 = vpop.f32.mrf.mxu0
    %v840 = vadd.f32 %v791, %v839
    %841 = vdwg.mxu0
    %842 = vmatpush.bf16.msra.mxu0 %v451
    %843 = vmatpush.bf16.msra.mxu0 %v447
    %844 = vmatpush.bf16.msra.mxu0 %v443
    %845 = vmatpush.bf16.msra.mxu0 %v439
    %846 = vmatpush.bf16.msra.mxu0 %v435
    %847 = vmatpush.bf16.msra.mxu0 %v431
    %848 = vmatpush.bf16.msra.mxu0 %v427
    %849 = vmatpush.bf16.msra.mxu0 %v423
    %850 = vmatmul.bf16.gmra.mxu0 %v148
    %v851 = vpop.f32.mrf.mxu0
    %v852 = vadd.f32 0.0, %v851
    %v853 = vpop.f32.mrf.mxu0
    %v854 = vadd.f32 0.0, %v853
    %855 = vmatmul.bf16.gmra.mxu0 %v150
    %v856 = vpop.f32.mrf.mxu0
    %v857 = vadd.f32 0.0, %v856
    %v858 = vpop.f32.mrf.mxu0
    %v859 = vadd.f32 0.0, %v858
    %860 = vmatmul.bf16.gmra.mxu0 %v152
    %v861 = vpop.f32.mrf.mxu0
    %v862 = vadd.f32 0.0, %v861
    %v863 = vpop.f32.mrf.mxu0
    %v864 = vadd.f32 0.0, %v863
    %865 = vmatmul.bf16.gmra.mxu0 %v154
    %v866 = vpop.f32.mrf.mxu0
    %v867 = vadd.f32 0.0, %v866
    %v868 = vpop.f32.mrf.mxu0
    %v869 = vadd.f32 0.0, %v868
    %870 = vmatmul.bf16.gmra.mxu0 %v156
    %v871 = vpop.f32.mrf.mxu0
    %v872 = vadd.f32 0.0, %v871
    %v873 = vpop.f32.mrf.mxu0
    %v874 = vadd.f32 0.0, %v873
    %875 = vmatmul.bf16.gmra.mxu0 %v158
    %v876 = vpop.f32.mrf.mxu0
    %v877 = vadd.f32 0.0, %v876
    %v878 = vpop.f32.mrf.mxu0
    %v879 = vadd.f32 0.0, %v878
    %880 = vmatmul.bf16.gmra.mxu0 %v160
    %v881 = vpop.f32.mrf.mxu0
    %v882 = vadd.f32 0.0, %v881
    %v883 = vpop.f32.mrf.mxu0
    %v884 = vadd.f32 0.0, %v883
    %885 = vmatmul.bf16.gmra.mxu0 %v162
    %v886 = vpop.f32.mrf.mxu0
    %v887 = vadd.f32 0.0, %v886
    %v888 = vpop.f32.mrf.mxu0
    %v889 = vadd.f32 0.0, %v888
    %890 = vdwg.mxu0
    %891 = vmatpush.bf16.msra.mxu0 %v483
    %892 = vmatpush.bf16.msra.mxu0 %v479
    %893 = vmatpush.bf16.msra.mxu0 %v475
    %894 = vmatpush.bf16.msra.mxu0 %v471
    %895 = vmatpush.bf16.msra.mxu0 %v467
    %896 = vmatpush.bf16.msra.mxu0 %v463
    %897 = vmatpush.bf16.msra.mxu0 %v459
    %898 = vmatpush.bf16.msra.mxu0 %v455
    %899 = vmatmul.bf16.gmra.mxu0 %v149
    %v900 = vpop.f32.mrf.mxu0
    %v901 = vadd.f32 %v852, %v900
    %v902 = vpop.f32.mrf.mxu0
    %v903 = vadd.f32 %v854, %v902
    %904 = vmatmul.bf16.gmra.mxu0 %v151
    %v905 = vpop.f32.mrf.mxu0
    %v906 = vadd.f32 %v857, %v905
    %v907 = vpop.f32.mrf.mxu0
    %v908 = vadd.f32 %v859, %v907
    %909 = vmatmul.bf16.gmra.mxu0 %v153
    %v910 = vpop.f32.mrf.mxu0
    %v911 = vadd.f32 %v862, %v910
    %v912 = vpop.f32.mrf.mxu0
    %v913 = vadd.f32 %v864, %v912
    %914 = vmatmul.bf16.gmra.mxu0 %v155
    %v915 = vpop.f32.mrf.mxu0
    %v916 = vadd.f32 %v867, %v915
    %v917 = vpop.f32.mrf.mxu0
    %v918 = vadd.f32 %v869, %v917
    %919 = vmatmul.bf16.gmra.mxu0 %v157
    %v920 = vpop.f32.mrf.mxu0
    %v921 = vadd.f32 %v872, %v920
    %v922 = vpop.f32.mrf.mxu0
    %v923 = vadd.f32 %v874, %v922
    %924 = vmatmul.bf16.gmra.mxu0 %v159
    %v925 = vpop.f32.mrf.mxu0
    %v926 = vadd.f32 %v877, %v925
    %v927 = vpop.f32.mrf.mxu0
    %v928 = vadd.f32 %v879, %v927
    %929 = vmatmul.bf16.gmra.mxu0 %v161
    %v930 = vpop.f32.mrf.mxu0
    %v931 = vadd.f32 %v882, %v930
    %v932 = vpop.f32.mrf.mxu0
    %v933 = vadd.f32 %v884, %v932
    %934 = vmatmul.bf16.gmra.mxu0 %v163
    %v935 = vpop.f32.mrf.mxu0
    %v936 = vadd.f32 %v887, %v935
    %v937 = vpop.f32.mrf.mxu0
    %v938 = vadd.f32 %v889, %v937
    %939 = vdwg.mxu0
    %v940 = vpack.c.bf16 %v705, %v607
    %v941 = vpack.c.bf16 %v901, %v803
    %v942 = vpack.c.bf16 %v707, %v609
    %v943 = vpack.c.bf16 %v903, %v805
    %v944 = vpack.c.bf16 %v710, %v612
    %v945 = vpack.c.bf16 %v906, %v808
    %v946 = vpack.c.bf16 %v712, %v614
    %v947 = vpack.c.bf16 %v908, %v810
    %v948 = vpack.c.bf16 %v715, %v617
    %v949 = vpack.c.bf16 %v911, %v813
    %v950 = vpack.c.bf16 %v717, %v619
    %v951 = vpack.c.bf16 %v913, %v815
    %v952 = vpack.c.bf16 %v720, %v622
    %v953 = vpack.c.bf16 %v916, %v818
    %v954 = vpack.c.bf16 %v722, %v624
    %v955 = vpack.c.bf16 %v918, %v820
    %v956 = vpack.c.bf16 %v725, %v627
    %v957 = vpack.c.bf16 %v921, %v823
    %v958 = vpack.c.bf16 %v727, %v629
    %v959 = vpack.c.bf16 %v923, %v825
    %v960 = vpack.c.bf16 %v730, %v632
    %v961 = vpack.c.bf16 %v926, %v828
    %v962 = vpack.c.bf16 %v732, %v634
    %v963 = vpack.c.bf16 %v928, %v830
    %v964 = vpack.c.bf16 %v735, %v637
    %v965 = vpack.c.bf16 %v931, %v833
    %v966 = vpack.c.bf16 %v737, %v639
    %v967 = vpack.c.bf16 %v933, %v835
    %v968 = vpack.c.bf16 %v740, %v642
    %v969 = vpack.c.bf16 %v936, %v838
    %v970 = vpack.c.bf16 %v742, %v644
    %v971 = vpack.c.bf16 %v938, %v840
    %v972 = vld [vmem:[#allocation8] sm:$0xf]
    %974 = vst [vmem:[#allocation1] ss:$9 sm:$0xff] %v972
    %v975 = vld [vmem:[#allocation1] sm:$0xff]
    %v976 = vld [vmem:[#allocation1 + $0x9] sm:$0xff]
    %v977 = vld [vmem:[#allocation1 + $0x12] sm:$0xff]
    %v978 = vld [vmem:[#allocation1 + $0x1b] sm:$0xff]
    %v979 = vpack.i.b16 %v975, %v975
    %v981 = vperm.slane %v979, 0
    %v982 = vpack.i.b16 %v976, %v976
    %v984 = vperm.slane %v982, 0
    %v985 = vpack.i.b16 %v977, %v977
    %v987 = vperm.slane %v985, 0
    %v988 = vpack.i.b16 %v978, %v978
    %v990 = vperm.slane %v988, 0
    %v991 = vunpack.c.l.bf16 %v940
    %v992 = vunpack.c.h.bf16 %v940
    %v993 = vunpack.c.l.bf16 %v941
    %v994 = vunpack.c.h.bf16 %v941
    %v995 = vunpack.c.l.bf16 %v942
    %v996 = vunpack.c.h.bf16 %v942
    %v997 = vunpack.c.l.bf16 %v943
    %v998 = vunpack.c.h.bf16 %v943
    %v999 = vunpack.c.l.bf16 %v944
    %v1000 = vunpack.c.h.bf16 %v944
    %v1001 = vunpack.c.l.bf16 %v945
    %v1002 = vunpack.c.h.bf16 %v945
    %v1003 = vunpack.c.l.bf16 %v946
    %v1004 = vunpack.c.h.bf16 %v946
    %v1005 = vunpack.c.l.bf16 %v947
    %v1006 = vunpack.c.h.bf16 %v947
    %v1007 = vunpack.c.l.bf16 %v948
    %v1008 = vunpack.c.h.bf16 %v948
    %v1009 = vunpack.c.l.bf16 %v949
    %v1010 = vunpack.c.h.bf16 %v949
    %v1011 = vunpack.c.l.bf16 %v950
    %v1012 = vunpack.c.h.bf16 %v950
    %v1013 = vunpack.c.l.bf16 %v951
    %v1014 = vunpack.c.h.bf16 %v951
    %v1015 = vunpack.c.l.bf16 %v952
    %v1016 = vunpack.c.h.bf16 %v952
    %v1017 = vunpack.c.l.bf16 %v953
    %v1018 = vunpack.c.h.bf16 %v953
    %v1019 = vunpack.c.l.bf16 %v954
    %v1020 = vunpack.c.h.bf16 %v954
    %v1021 = vunpack.c.l.bf16 %v955
    %v1022 = vunpack.c.h.bf16 %v955
    %v1023 = vunpack.c.l.bf16 %v956
    %v1024 = vunpack.c.h.bf16 %v956
    %v1025 = vunpack.c.l.bf16 %v957
    %v1026 = vunpack.c.h.bf16 %v957
    %v1027 = vunpack.c.l.bf16 %v958
    %v1028 = vunpack.c.h.bf16 %v958
    %v1029 = vunpack.c.l.bf16 %v959
    %v1030 = vunpack.c.h.bf16 %v959
    %v1031 = vunpack.c.l.bf16 %v960
    %v1032 = vunpack.c.h.bf16 %v960
    %v1033 = vunpack.c.l.bf16 %v961
    %v1034 = vunpack.c.h.bf16 %v961
    %v1035 = vunpack.c.l.bf16 %v962
    %v1036 = vunpack.c.h.bf16 %v962
    %v1037 = vunpack.c.l.bf16 %v963
    %v1038 = vunpack.c.h.bf16 %v963
    %v1039 = vunpack.c.l.bf16 %v964
    %v1040 = vunpack.c.h.bf16 %v964
    %v1041 = vunpack.c.l.bf16 %v965
    %v1042 = vunpack.c.h.bf16 %v965
    %v1043 = vunpack.c.l.bf16 %v966
    %v1044 = vunpack.c.h.bf16 %v966
    %v1045 = vunpack.c.l.bf16 %v967
    %v1046 = vunpack.c.h.bf16 %v967
    %v1047 = vunpack.c.l.bf16 %v968
    %v1048 = vunpack.c.h.bf16 %v968
    %v1049 = vunpack.c.l.bf16 %v969
    %v1050 = vunpack.c.h.bf16 %v969
    %v1051 = vunpack.c.l.bf16 %v970
    %v1052 = vunpack.c.h.bf16 %v970
    %v1053 = vunpack.c.l.bf16 %v971
    %v1054 = vunpack.c.h.bf16 %v971
    %v1055 = vunpack.c.l.bf16 %v981
    %v1056 = vunpack.c.l.bf16 %v984
    %v1057 = vunpack.c.l.bf16 %v987
    %v1058 = vunpack.c.l.bf16 %v990
    %v1059 = vadd.f32 %v991, %v1055
    %v1060 = vadd.f32 %v992, %v1056
    %v1061 = vadd.f32 %v993, %v1057
    %v1062 = vadd.f32 %v994, %v1058
    %v1063 = vadd.f32 %v995, %v1055
    %v1064 = vadd.f32 %v996, %v1056
    %v1065 = vadd.f32 %v997, %v1057
    %v1066 = vadd.f32 %v998, %v1058
    %v1067 = vadd.f32 %v999, %v1055
    %v1068 = vadd.f32 %v1000, %v1056
    %v1069 = vadd.f32 %v1001, %v1057
    %v1070 = vadd.f32 %v1002, %v1058
    %v1071 = vadd.f32 %v1003, %v1055
    %v1072 = vadd.f32 %v1004, %v1056
    %v1073 = vadd.f32 %v1005, %v1057
    %v1074 = vadd.f32 %v1006, %v1058
    %v1075 = vadd.f32 %v1007, %v1055
    %v1076 = vadd.f32 %v1008, %v1056
    %v1077 = vadd.f32 %v1009, %v1057
    %v1078 = vadd.f32 %v1010, %v1058
    %v1079 = vadd.f32 %v1011, %v1055
    %v1080 = vadd.f32 %v1012, %v1056
    %v1081 = vadd.f32 %v1013, %v1057
    %v1082 = vadd.f32 %v1014, %v1058
    %v1083 = vadd.f32 %v1015, %v1055
    %v1084 = vadd.f32 %v1016, %v1056
    %v1085 = vadd.f32 %v1017, %v1057
    %v1086 = vadd.f32 %v1018, %v1058
    %v1087 = vadd.f32 %v1019, %v1055
    %v1088 = vadd.f32 %v1020, %v1056
    %v1089 = vadd.f32 %v1021, %v1057
    %v1090 = vadd.f32 %v1022, %v1058
    %v1091 = vadd.f32 %v1023, %v1055
    %v1092 = vadd.f32 %v1024, %v1056
    %v1093 = vadd.f32 %v1025, %v1057
    %v1094 = vadd.f32 %v1026, %v1058
    %v1095 = vadd.f32 %v1027, %v1055
    %v1096 = vadd.f32 %v1028, %v1056
    %v1097 = vadd.f32 %v1029, %v1057
    %v1098 = vadd.f32 %v1030, %v1058
    %v1099 = vadd.f32 %v1031, %v1055
    %v1100 = vadd.f32 %v1032, %v1056
    %v1101 = vadd.f32 %v1033, %v1057
    %v1102 = vadd.f32 %v1034, %v1058
    %v1103 = vadd.f32 %v1035, %v1055
    %v1104 = vadd.f32 %v1036, %v1056
    %v1105 = vadd.f32 %v1037, %v1057
    %v1106 = vadd.f32 %v1038, %v1058
    %v1107 = vadd.f32 %v1039, %v1055
    %v1108 = vadd.f32 %v1040, %v1056
    %v1109 = vadd.f32 %v1041, %v1057
    %v1110 = vadd.f32 %v1042, %v1058
    %v1111 = vadd.f32 %v1043, %v1055
    %v1112 = vadd.f32 %v1044, %v1056
    %v1113 = vadd.f32 %v1045, %v1057
    %v1114 = vadd.f32 %v1046, %v1058
    %v1115 = vadd.f32 %v1047, %v1055
    %v1116 = vadd.f32 %v1048, %v1056
    %v1117 = vadd.f32 %v1049, %v1057
    %v1118 = vadd.f32 %v1050, %v1058
    %v1119 = vadd.f32 %v1051, %v1055
    %v1120 = vadd.f32 %v1052, %v1056
    %v1121 = vadd.f32 %v1053, %v1057
    %v1122 = vadd.f32 %v1054, %v1058
    %v1123 = vpack.c.bf16 %v1060, %v1059
    %v1124 = vpack.c.bf16 %v1062, %v1061
    %v1125 = vpack.c.bf16 %v1064, %v1063
    %v1126 = vpack.c.bf16 %v1066, %v1065
    %v1127 = vpack.c.bf16 %v1068, %v1067
    %v1128 = vpack.c.bf16 %v1070, %v1069
    %v1129 = vpack.c.bf16 %v1072, %v1071
    %v1130 = vpack.c.bf16 %v1074, %v1073
    %v1131 = vpack.c.bf16 %v1076, %v1075
    %v1132 = vpack.c.bf16 %v1078, %v1077
    %v1133 = vpack.c.bf16 %v1080, %v1079
    %v1134 = vpack.c.bf16 %v1082, %v1081
    %v1135 = vpack.c.bf16 %v1084, %v1083
    %v1136 = vpack.c.bf16 %v1086, %v1085
    %v1137 = vpack.c.bf16 %v1088, %v1087
    %v1138 = vpack.c.bf16 %v1090, %v1089
    %v1139 = vpack.c.bf16 %v1092, %v1091
    %v1140 = vpack.c.bf16 %v1094, %v1093
    %v1141 = vpack.c.bf16 %v1096, %v1095
    %v1142 = vpack.c.bf16 %v1098, %v1097
    %v1143 = vpack.c.bf16 %v1100, %v1099
    %v1144 = vpack.c.bf16 %v1102, %v1101
    %v1145 = vpack.c.bf16 %v1104, %v1103
    %v1146 = vpack.c.bf16 %v1106, %v1105
    %v1147 = vpack.c.bf16 %v1108, %v1107
    %v1148 = vpack.c.bf16 %v1110, %v1109
    %v1149 = vpack.c.bf16 %v1112, %v1111
    %v1150 = vpack.c.bf16 %v1114, %v1113
    %v1151 = vpack.c.bf16 %v1116, %v1115
    %v1152 = vpack.c.bf16 %v1118, %v1117
    %v1153 = vpack.c.bf16 %v1120, %v1119
    %v1154 = vpack.c.bf16 %v1122, %v1121
    %v1155 = vunpack.c.l.bf16 %v1123
    %v1156 = vunpack.c.h.bf16 %v1123
    %v1157 = vunpack.c.l.bf16 %v1124
    %v1158 = vunpack.c.h.bf16 %v1124
    %v1159 = vunpack.c.l.bf16 %v1125
    %v1160 = vunpack.c.h.bf16 %v1125
    %v1161 = vunpack.c.l.bf16 %v1126
    %v1162 = vunpack.c.h.bf16 %v1126
    %v1163 = vunpack.c.l.bf16 %v1127
    %v1164 = vunpack.c.h.bf16 %v1127
    %v1165 = vunpack.c.l.bf16 %v1128
    %v1166 = vunpack.c.h.bf16 %v1128
    %v1167 = vunpack.c.l.bf16 %v1129
    %v1168 = vunpack.c.h.bf16 %v1129
    %v1169 = vunpack.c.l.bf16 %v1130
    %v1170 = vunpack.c.h.bf16 %v1130
    %v1171 = vunpack.c.l.bf16 %v1131
    %v1172 = vunpack.c.h.bf16 %v1131
    %v1173 = vunpack.c.l.bf16 %v1132
    %v1174 = vunpack.c.h.bf16 %v1132
    %v1175 = vunpack.c.l.bf16 %v1133
    %v1176 = vunpack.c.h.bf16 %v1133
    %v1177 = vunpack.c.l.bf16 %v1134
    %v1178 = vunpack.c.h.bf16 %v1134
    %v1179 = vunpack.c.l.bf16 %v1135
    %v1180 = vunpack.c.h.bf16 %v1135
    %v1181 = vunpack.c.l.bf16 %v1136
    %v1182 = vunpack.c.h.bf16 %v1136
    %v1183 = vunpack.c.l.bf16 %v1137
    %v1184 = vunpack.c.h.bf16 %v1137
    %v1185 = vunpack.c.l.bf16 %v1138
    %v1186 = vunpack.c.h.bf16 %v1138
    %v1187 = vunpack.c.l.bf16 %v1139
    %v1188 = vunpack.c.h.bf16 %v1139
    %v1189 = vunpack.c.l.bf16 %v1140
    %v1190 = vunpack.c.h.bf16 %v1140
    %v1191 = vunpack.c.l.bf16 %v1141
    %v1192 = vunpack.c.h.bf16 %v1141
    %v1193 = vunpack.c.l.bf16 %v1142
    %v1194 = vunpack.c.h.bf16 %v1142
    %v1195 = vunpack.c.l.bf16 %v1143
    %v1196 = vunpack.c.h.bf16 %v1143
    %v1197 = vunpack.c.l.bf16 %v1144
    %v1198 = vunpack.c.h.bf16 %v1144
    %v1199 = vunpack.c.l.bf16 %v1145
    %v1200 = vunpack.c.h.bf16 %v1145
    %v1201 = vunpack.c.l.bf16 %v1146
    %v1202 = vunpack.c.h.bf16 %v1146
    %v1203 = vunpack.c.l.bf16 %v1147
    %v1204 = vunpack.c.h.bf16 %v1147
    %v1205 = vunpack.c.l.bf16 %v1148
    %v1206 = vunpack.c.h.bf16 %v1148
    %v1207 = vunpack.c.l.bf16 %v1149
    %v1208 = vunpack.c.h.bf16 %v1149
    %v1209 = vunpack.c.l.bf16 %v1150
    %v1210 = vunpack.c.h.bf16 %v1150
    %v1211 = vunpack.c.l.bf16 %v1151
    %v1212 = vunpack.c.h.bf16 %v1151
    %v1213 = vunpack.c.l.bf16 %v1152
    %v1214 = vunpack.c.h.bf16 %v1152
    %v1215 = vunpack.c.l.bf16 %v1153
    %v1216 = vunpack.c.h.bf16 %v1153
    %v1217 = vunpack.c.l.bf16 %v1154
    %v1218 = vunpack.c.h.bf16 %v1154
    %v1219 = vmax.f32 %v1155, 0.0
    %v1220 = vmax.f32 %v1156, 0.0
    %v1221 = vmax.f32 %v1157, 0.0
    %v1222 = vmax.f32 %v1158, 0.0
    %v1223 = vmax.f32 %v1159, 0.0
    %v1224 = vmax.f32 %v1160, 0.0
    %v1225 = vmax.f32 %v1161, 0.0
    %v1226 = vmax.f32 %v1162, 0.0
    %v1227 = vmax.f32 %v1163, 0.0
    %v1228 = vmax.f32 %v1164, 0.0
    %v1229 = vmax.f32 %v1165, 0.0
    %v1230 = vmax.f32 %v1166, 0.0
    %v1231 = vmax.f32 %v1167, 0.0
    %v1232 = vmax.f32 %v1168, 0.0
    %v1233 = vmax.f32 %v1169, 0.0
    %v1234 = vmax.f32 %v1170, 0.0
    %v1235 = vmax.f32 %v1171, 0.0
    %v1236 = vmax.f32 %v1172, 0.0
    %v1237 = vmax.f32 %v1173, 0.0
    %v1238 = vmax.f32 %v1174, 0.0
    %v1239 = vmax.f32 %v1175, 0.0
    %v1240 = vmax.f32 %v1176, 0.0
    %v1241 = vmax.f32 %v1177, 0.0
    %v1242 = vmax.f32 %v1178, 0.0
    %v1243 = vmax.f32 %v1179, 0.0
    %v1244 = vmax.f32 %v1180, 0.0
    %v1245 = vmax.f32 %v1181, 0.0
    %v1246 = vmax.f32 %v1182, 0.0
    %v1247 = vmax.f32 %v1183, 0.0
    %v1248 = vmax.f32 %v1184, 0.0
    %v1249 = vmax.f32 %v1185, 0.0
    %v1250 = vmax.f32 %v1186, 0.0
    %v1251 = vmax.f32 %v1187, 0.0
    %v1252 = vmax.f32 %v1188, 0.0
    %v1253 = vmax.f32 %v1189, 0.0
    %v1254 = vmax.f32 %v1190, 0.0
    %v1255 = vmax.f32 %v1191, 0.0
    %v1256 = vmax.f32 %v1192, 0.0
    %v1257 = vmax.f32 %v1193, 0.0
    %v1258 = vmax.f32 %v1194, 0.0
    %v1259 = vmax.f32 %v1195, 0.0
    %v1260 = vmax.f32 %v1196, 0.0
    %v1261 = vmax.f32 %v1197, 0.0
    %v1262 = vmax.f32 %v1198, 0.0
    %v1263 = vmax.f32 %v1199, 0.0
    %v1264 = vmax.f32 %v1200, 0.0
    %v1265 = vmax.f32 %v1201, 0.0
    %v1266 = vmax.f32 %v1202, 0.0
    %v1267 = vmax.f32 %v1203, 0.0
    %v1268 = vmax.f32 %v1204, 0.0
    %v1269 = vmax.f32 %v1205, 0.0
    %v1270 = vmax.f32 %v1206, 0.0
    %v1271 = vmax.f32 %v1207, 0.0
    %v1272 = vmax.f32 %v1208, 0.0
    %v1273 = vmax.f32 %v1209, 0.0
    %v1274 = vmax.f32 %v1210, 0.0
    %v1275 = vmax.f32 %v1211, 0.0
    %v1276 = vmax.f32 %v1212, 0.0
    %v1277 = vmax.f32 %v1213, 0.0
    %v1278 = vmax.f32 %v1214, 0.0
    %v1279 = vmax.f32 %v1215, 0.0
    %v1280 = vmax.f32 %v1216, 0.0
    %v1281 = vmax.f32 %v1217, 0.0
    %v1282 = vmax.f32 %v1218, 0.0
    %v1283 = vpack.c.bf16 %v1223, %v1219
    %v1284 = vpack.c.bf16 %v1224, %v1220
    %v1285 = vpack.c.bf16 %v1225, %v1221
    %v1286 = vpack.c.bf16 %v1226, %v1222
    %v1287 = vpack.c.bf16 %v1231, %v1227
    %v1288 = vpack.c.bf16 %v1232, %v1228
    %v1289 = vpack.c.bf16 %v1233, %v1229
    %v1290 = vpack.c.bf16 %v1234, %v1230
    %v1291 = vpack.c.bf16 %v1239, %v1235
    %v1292 = vpack.c.bf16 %v1240, %v1236
    %v1293 = vpack.c.bf16 %v1241, %v1237
    %v1294 = vpack.c.bf16 %v1242, %v1238
    %v1295 = vpack.c.bf16 %v1247, %v1243
    %v1296 = vpack.c.bf16 %v1248, %v1244
    %v1297 = vpack.c.bf16 %v1249, %v1245
    %v1298 = vpack.c.bf16 %v1250, %v1246
    %v1299 = vpack.c.bf16 %v1255, %v1251
    %v1300 = vpack.c.bf16 %v1256, %v1252
    %v1301 = vpack.c.bf16 %v1257, %v1253
    %v1302 = vpack.c.bf16 %v1258, %v1254
    %v1303 = vpack.c.bf16 %v1263, %v1259
    %v1304 = vpack.c.bf16 %v1264, %v1260
    %v1305 = vpack.c.bf16 %v1265, %v1261
    %v1306 = vpack.c.bf16 %v1266, %v1262
    %v1307 = vpack.c.bf16 %v1271, %v1267
    %v1308 = vpack.c.bf16 %v1272, %v1268
    %v1309 = vpack.c.bf16 %v1273, %v1269
    %v1310 = vpack.c.bf16 %v1274, %v1270
    %v1311 = vpack.c.bf16 %v1279, %v1275
    %v1312 = vpack.c.bf16 %v1280, %v1276
    %v1313 = vpack.c.bf16 %v1281, %v1277
    %v1314 = vpack.c.bf16 %v1282, %v1278
    %v1315 = vld [vmem:[#allocation9] sm:$0xff]
    %v1316 = vld [vmem:[#allocation9 + $0x8] sm:$0xff]
    %v1317 = vld [vmem:[#allocation9 + $0x10] sm:$0xff]
    %v1318 = vld [vmem:[#allocation9 + $0x18] sm:$0xff]
    %v1319 = vld [vmem:[#allocation9 + $0x20] sm:$0xff]
    %v1320 = vld [vmem:[#allocation9 + $0x28] sm:$0xff]
    %v1321 = vld [vmem:[#allocation9 + $0x30] sm:$0xff]
    %v1322 = vld [vmem:[#allocation9 + $0x38] sm:$0xff]
    %v1323 = vld [vmem:[#allocation9 + $0x40] sm:$0xff]
    %v1324 = vld [vmem:[#allocation9 + $0x48] sm:$0xff]
    %v1325 = vld [vmem:[#allocation9 + $0x50] sm:$0xff]
    %v1326 = vld [vmem:[#allocation9 + $0x58] sm:$0xff]
    %v1327 = vld [vmem:[#allocation9 + $0x60] sm:$0xff]
    %v1328 = vld [vmem:[#allocation9 + $0x68] sm:$0xff]
    %v1329 = vld [vmem:[#allocation9 + $0x70] sm:$0xff]
    %v1330 = vld [vmem:[#allocation9 + $0x78] sm:$0xff]
    %v1331 = vld [vmem:[#allocation9 + $0x80] sm:$0xff]
    %v1332 = vld [vmem:[#allocation9 + $0x88] sm:$0xff]
    %v1333 = vld [vmem:[#allocation9 + $0x90] sm:$0xff]
    %v1334 = vld [vmem:[#allocation9 + $0x98] sm:$0xff]
    %v1335 = vld [vmem:[#allocation9 + $0xa0] sm:$0xff]
    %v1336 = vld [vmem:[#allocation9 + $0xa8] sm:$0xff]
    %v1337 = vld [vmem:[#allocation9 + $0xb0] sm:$0xff]
    %v1338 = vld [vmem:[#allocation9 + $0xb8] sm:$0xff]
    %v1339 = vld [vmem:[#allocation9 + $0xc0] sm:$0xff]
    %v1340 = vld [vmem:[#allocation9 + $0xc8] sm:$0xff]
    %v1341 = vld [vmem:[#allocation9 + $0xd0] sm:$0xff]
    %v1342 = vld [vmem:[#allocation9 + $0xd8] sm:$0xff]
    %v1343 = vld [vmem:[#allocation9 + $0xe0] sm:$0xff]
    %v1344 = vld [vmem:[#allocation9 + $0xe8] sm:$0xff]
    %v1345 = vld [vmem:[#allocation9 + $0xf0] sm:$0xff]
    %v1346 = vld [vmem:[#allocation9 + $0xf8] sm:$0xff]
    %v1347 = vld [vmem:[#allocation9 + $0x100] sm:$0xff]
    %v1348 = vld [vmem:[#allocation9 + $0x108] sm:$0xff]
    %v1349 = vld [vmem:[#allocation9 + $0x110] sm:$0xff]
    %v1350 = vld [vmem:[#allocation9 + $0x118] sm:$0xff]
    %v1351 = vld [vmem:[#allocation9 + $0x120] sm:$0xff]
    %v1352 = vld [vmem:[#allocation9 + $0x128] sm:$0xff]
    %v1353 = vld [vmem:[#allocation9 + $0x130] sm:$0xff]
    %v1354 = vld [vmem:[#allocation9 + $0x138] sm:$0xff]
    %v1355 = vld [vmem:[#allocation9 + $0x140] sm:$0xff]
    %v1356 = vld [vmem:[#allocation9 + $0x148] sm:$0xff]
    %v1357 = vld [vmem:[#allocation9 + $0x150] sm:$0xff]
    %v1358 = vld [vmem:[#allocation9 + $0x158] sm:$0xff]
    %v1359 = vld [vmem:[#allocation9 + $0x160] sm:$0xff]
    %v1360 = vld [vmem:[#allocation9 + $0x168] sm:$0xff]
    %v1361 = vld [vmem:[#allocation9 + $0x170] sm:$0xff]
    %v1362 = vld [vmem:[#allocation9 + $0x178] sm:$0xff]
    %v1363 = vld [vmem:[#allocation9 + $0x180] sm:$0xff]
    %v1364 = vld [vmem:[#allocation9 + $0x188] sm:$0xff]
    %v1365 = vld [vmem:[#allocation9 + $0x190] sm:$0xff]
    %v1366 = vld [vmem:[#allocation9 + $0x198] sm:$0xff]
    %v1367 = vld [vmem:[#allocation9 + $0x1a0] sm:$0xff]
    %v1368 = vld [vmem:[#allocation9 + $0x1a8] sm:$0xff]
    %v1369 = vld [vmem:[#allocation9 + $0x1b0] sm:$0xff]
    %v1370 = vld [vmem:[#allocation9 + $0x1b8] sm:$0xff]
    %v1371 = vld [vmem:[#allocation9 + $0x1c0] sm:$0xff]
    %v1372 = vld [vmem:[#allocation9 + $0x1c8] sm:$0xff]
    %v1373 = vld [vmem:[#allocation9 + $0x1d0] sm:$0xff]
    %v1374 = vld [vmem:[#allocation9 + $0x1d8] sm:$0xff]
    %v1375 = vld [vmem:[#allocation9 + $0x1e0] sm:$0xff]
    %v1376 = vld [vmem:[#allocation9 + $0x1e8] sm:$0xff]
    %v1377 = vld [vmem:[#allocation9 + $0x1f0] sm:$0xff]
    %v1378 = vld [vmem:[#allocation9 + $0x1f8] sm:$0xff]
    %v1379 = vld [vmem:[#allocation9 + $0x200] sm:$0xff]
    %v1380 = vld [vmem:[#allocation9 + $0x208] sm:$0xff]
    %v1381 = vld [vmem:[#allocation9 + $0x210] sm:$0xff]
    %v1382 = vld [vmem:[#allocation9 + $0x218] sm:$0xff]
    %v1383 = vld [vmem:[#allocation9 + $0x220] sm:$0xff]
    %v1384 = vld [vmem:[#allocation9 + $0x228] sm:$0xff]
    %v1385 = vld [vmem:[#allocation9 + $0x230] sm:$0xff]
    %v1386 = vld [vmem:[#allocation9 + $0x238] sm:$0xff]
    %v1387 = vld [vmem:[#allocation9 + $0x240] sm:$0xff]
    %v1388 = vld [vmem:[#allocation9 + $0x248] sm:$0xff]
    %v1389 = vld [vmem:[#allocation9 + $0x250] sm:$0xff]
    %v1390 = vld [vmem:[#allocation9 + $0x258] sm:$0xff]
    %v1391 = vld [vmem:[#allocation9 + $0x260] sm:$0xff]
    %v1392 = vld [vmem:[#allocation9 + $0x268] sm:$0xff]
    %v1393 = vld [vmem:[#allocation9 + $0x270] sm:$0xff]
    %v1394 = vld [vmem:[#allocation9 + $0x278] sm:$0xff]
    %v1395 = vld [vmem:[#allocation9 + $0x280] sm:$0xff]
    %v1396 = vld [vmem:[#allocation9 + $0x288] sm:$0xff]
    %v1397 = vld [vmem:[#allocation9 + $0x290] sm:$0xff]
    %v1398 = vld [vmem:[#allocation9 + $0x298] sm:$0xff]
    %v1399 = vld [vmem:[#allocation9 + $0x2a0] sm:$0xff]
    %v1400 = vld [vmem:[#allocation9 + $0x2a8] sm:$0xff]
    %v1401 = vld [vmem:[#allocation9 + $0x2b0] sm:$0xff]
    %v1402 = vld [vmem:[#allocation9 + $0x2b8] sm:$0xff]
    %v1403 = vld [vmem:[#allocation9 + $0x2c0] sm:$0xff]
    %v1404 = vld [vmem:[#allocation9 + $0x2c8] sm:$0xff]
    %v1405 = vld [vmem:[#allocation9 + $0x2d0] sm:$0xff]
    %v1406 = vld [vmem:[#allocation9 + $0x2d8] sm:$0xff]
    %v1407 = vld [vmem:[#allocation9 + $0x2e0] sm:$0xff]
    %v1408 = vld [vmem:[#allocation9 + $0x2e8] sm:$0xff]
    %v1409 = vld [vmem:[#allocation9 + $0x2f0] sm:$0xff]
    %v1410 = vld [vmem:[#allocation9 + $0x2f8] sm:$0xff]
    %v1411 = vld [vmem:[#allocation9 + $0x300] sm:$0xff]
    %v1412 = vld [vmem:[#allocation9 + $0x308] sm:$0xff]
    %v1413 = vld [vmem:[#allocation9 + $0x310] sm:$0xff]
    %v1414 = vld [vmem:[#allocation9 + $0x318] sm:$0xff]
    %v1415 = vld [vmem:[#allocation9 + $0x320] sm:$0xff]
    %v1416 = vld [vmem:[#allocation9 + $0x328] sm:$0xff]
    %v1417 = vld [vmem:[#allocation9 + $0x330] sm:$0xff]
    %v1418 = vld [vmem:[#allocation9 + $0x338] sm:$0xff]
    %v1419 = vld [vmem:[#allocation9 + $0x340] sm:$0xff]
    %v1420 = vld [vmem:[#allocation9 + $0x348] sm:$0xff]
    %v1421 = vld [vmem:[#allocation9 + $0x350] sm:$0xff]
    %v1422 = vld [vmem:[#allocation9 + $0x358] sm:$0xff]
    %v1423 = vld [vmem:[#allocation9 + $0x360] sm:$0xff]
    %v1424 = vld [vmem:[#allocation9 + $0x368] sm:$0xff]
    %v1425 = vld [vmem:[#allocation9 + $0x370] sm:$0xff]
    %v1426 = vld [vmem:[#allocation9 + $0x378] sm:$0xff]
    %v1427 = vld [vmem:[#allocation9 + $0x380] sm:$0xff]
    %v1428 = vld [vmem:[#allocation9 + $0x388] sm:$0xff]
    %v1429 = vld [vmem:[#allocation9 + $0x390] sm:$0xff]
    %v1430 = vld [vmem:[#allocation9 + $0x398] sm:$0xff]
    %v1431 = vld [vmem:[#allocation9 + $0x3a0] sm:$0xff]
    %v1432 = vld [vmem:[#allocation9 + $0x3a8] sm:$0xff]
    %v1433 = vld [vmem:[#allocation9 + $0x3b0] sm:$0xff]
    %v1434 = vld [vmem:[#allocation9 + $0x3b8] sm:$0xff]
    %v1435 = vld [vmem:[#allocation9 + $0x3c0] sm:$0xff]
    %v1436 = vld [vmem:[#allocation9 + $0x3c8] sm:$0xff]
    %v1437 = vld [vmem:[#allocation9 + $0x3d0] sm:$0xff]
    %v1438 = vld [vmem:[#allocation9 + $0x3d8] sm:$0xff]
    %v1439 = vld [vmem:[#allocation9 + $0x3e0] sm:$0xff]
    %v1440 = vld [vmem:[#allocation9 + $0x3e8] sm:$0xff]
    %v1441 = vld [vmem:[#allocation9 + $0x3f0] sm:$0xff]
    %v1442 = vld [vmem:[#allocation9 + $0x3f8] sm:$0xff]
    %v1443 = vld [vmem:[#allocation9 + $0x400] sm:$0xff]
    %v1444 = vld [vmem:[#allocation9 + $0x408] sm:$0xff]
    %v1445 = vld [vmem:[#allocation9 + $0x410] sm:$0xff]
    %v1446 = vld [vmem:[#allocation9 + $0x418] sm:$0xff]
    %v1447 = vld [vmem:[#allocation9 + $0x420] sm:$0xff]
    %v1448 = vld [vmem:[#allocation9 + $0x428] sm:$0xff]
    %v1449 = vld [vmem:[#allocation9 + $0x430] sm:$0xff]
    %v1450 = vld [vmem:[#allocation9 + $0x438] sm:$0xff]
    %v1451 = vld [vmem:[#allocation9 + $0x440] sm:$0xff]
    %v1452 = vld [vmem:[#allocation9 + $0x448] sm:$0xff]
    %v1453 = vld [vmem:[#allocation9 + $0x450] sm:$0xff]
    %v1454 = vld [vmem:[#allocation9 + $0x458] sm:$0xff]
    %v1455 = vld [vmem:[#allocation9 + $0x460] sm:$0xff]
    %v1456 = vld [vmem:[#allocation9 + $0x468] sm:$0xff]
    %v1457 = vld [vmem:[#allocation9 + $0x470] sm:$0xff]
    %v1458 = vld [vmem:[#allocation9 + $0x478] sm:$0xff]
    %v1459 = vld [vmem:[#allocation9 + $0x480] sm:$0xff]
    %v1460 = vld [vmem:[#allocation9 + $0x488] sm:$0xff]
    %v1461 = vld [vmem:[#allocation9 + $0x490] sm:$0xff]
    %v1462 = vld [vmem:[#allocation9 + $0x498] sm:$0xff]
    %v1463 = vld [vmem:[#allocation9 + $0x4a0] sm:$0xff]
    %v1464 = vld [vmem:[#allocation9 + $0x4a8] sm:$0xff]
    %v1465 = vld [vmem:[#allocation9 + $0x4b0] sm:$0xff]
    %v1466 = vld [vmem:[#allocation9 + $0x4b8] sm:$0xff]
    %v1467 = vld [vmem:[#allocation9 + $0x4c0] sm:$0xff]
    %v1468 = vld [vmem:[#allocation9 + $0x4c8] sm:$0xff]
    %v1469 = vld [vmem:[#allocation9 + $0x4d0] sm:$0xff]
    %v1470 = vld [vmem:[#allocation9 + $0x4d8] sm:$0xff]
    %v1471 = vld [vmem:[#allocation9 + $0x4e0] sm:$0xff]
    %v1472 = vld [vmem:[#allocation9 + $0x4e8] sm:$0xff]
    %v1473 = vld [vmem:[#allocation9 + $0x4f0] sm:$0xff]
    %v1474 = vld [vmem:[#allocation9 + $0x4f8] sm:$0xff]
    %v1475 = vld [vmem:[#allocation9 + $0x500] sm:$0xff]
    %v1476 = vld [vmem:[#allocation9 + $0x508] sm:$0xff]
    %v1477 = vld [vmem:[#allocation9 + $0x510] sm:$0xff]
    %v1478 = vld [vmem:[#allocation9 + $0x518] sm:$0xff]
    %v1479 = vld [vmem:[#allocation9 + $0x520] sm:$0xff]
    %v1480 = vld [vmem:[#allocation9 + $0x528] sm:$0xff]
    %v1481 = vld [vmem:[#allocation9 + $0x530] sm:$0xff]
    %v1482 = vld [vmem:[#allocation9 + $0x538] sm:$0xff]
    %v1483 = vld [vmem:[#allocation9 + $0x540] sm:$0xff]
    %v1484 = vld [vmem:[#allocation9 + $0x548] sm:$0xff]
    %v1485 = vld [vmem:[#allocation9 + $0x550] sm:$0xff]
    %v1486 = vld [vmem:[#allocation9 + $0x558] sm:$0xff]
    %v1487 = vld [vmem:[#allocation9 + $0x560] sm:$0xff]
    %v1488 = vld [vmem:[#allocation9 + $0x568] sm:$0xff]
    %v1489 = vld [vmem:[#allocation9 + $0x570] sm:$0xff]
    %v1490 = vld [vmem:[#allocation9 + $0x578] sm:$0xff]
    %v1491 = vld [vmem:[#allocation9 + $0x580] sm:$0xff]
    %v1492 = vld [vmem:[#allocation9 + $0x588] sm:$0xff]
    %v1493 = vld [vmem:[#allocation9 + $0x590] sm:$0xff]
    %v1494 = vld [vmem:[#allocation9 + $0x598] sm:$0xff]
    %v1495 = vld [vmem:[#allocation9 + $0x5a0] sm:$0xff]
    %v1496 = vld [vmem:[#allocation9 + $0x5a8] sm:$0xff]
    %v1497 = vld [vmem:[#allocation9 + $0x5b0] sm:$0xff]
    %v1498 = vld [vmem:[#allocation9 + $0x5b8] sm:$0xff]
    %v1499 = vld [vmem:[#allocation9 + $0x5c0] sm:$0xff]
    %v1500 = vld [vmem:[#allocation9 + $0x5c8] sm:$0xff]
    %v1501 = vld [vmem:[#allocation9 + $0x5d0] sm:$0xff]
    %v1502 = vld [vmem:[#allocation9 + $0x5d8] sm:$0xff]
    %v1503 = vld [vmem:[#allocation9 + $0x5e0] sm:$0xff]
    %v1504 = vld [vmem:[#allocation9 + $0x5e8] sm:$0xff]
    %v1505 = vld [vmem:[#allocation9 + $0x5f0] sm:$0xff]
    %v1506 = vld [vmem:[#allocation9 + $0x5f8] sm:$0xff]
    %v1507 = vld [vmem:[#allocation9 + $0x600] sm:$0xff]
    %v1508 = vld [vmem:[#allocation9 + $0x608] sm:$0xff]
    %v1509 = vld [vmem:[#allocation9 + $0x610] sm:$0xff]
    %v1510 = vld [vmem:[#allocation9 + $0x618] sm:$0xff]
    %v1511 = vld [vmem:[#allocation9 + $0x620] sm:$0xff]
    %v1512 = vld [vmem:[#allocation9 + $0x628] sm:$0xff]
    %v1513 = vld [vmem:[#allocation9 + $0x630] sm:$0xff]
    %v1514 = vld [vmem:[#allocation9 + $0x638] sm:$0xff]
    %v1515 = vld [vmem:[#allocation9 + $0x640] sm:$0xff]
    %v1516 = vld [vmem:[#allocation9 + $0x648] sm:$0xff]
    %v1517 = vld [vmem:[#allocation9 + $0x650] sm:$0xff]
    %v1518 = vld [vmem:[#allocation9 + $0x658] sm:$0xff]
    %v1519 = vld [vmem:[#allocation9 + $0x660] sm:$0xff]
    %v1520 = vld [vmem:[#allocation9 + $0x668] sm:$0xff]
    %v1521 = vld [vmem:[#allocation9 + $0x670] sm:$0xff]
    %v1522 = vld [vmem:[#allocation9 + $0x678] sm:$0xff]
    %v1523 = vld [vmem:[#allocation9 + $0x680] sm:$0xff]
    %v1524 = vld [vmem:[#allocation9 + $0x688] sm:$0xff]
    %v1525 = vld [vmem:[#allocation9 + $0x690] sm:$0xff]
    %v1526 = vld [vmem:[#allocation9 + $0x698] sm:$0xff]
    %v1527 = vld [vmem:[#allocation9 + $0x6a0] sm:$0xff]
    %v1528 = vld [vmem:[#allocation9 + $0x6a8] sm:$0xff]
    %v1529 = vld [vmem:[#allocation9 + $0x6b0] sm:$0xff]
    %v1530 = vld [vmem:[#allocation9 + $0x6b8] sm:$0xff]
    %v1531 = vld [vmem:[#allocation9 + $0x6c0] sm:$0xff]
    %v1532 = vld [vmem:[#allocation9 + $0x6c8] sm:$0xff]
    %v1533 = vld [vmem:[#allocation9 + $0x6d0] sm:$0xff]
    %v1534 = vld [vmem:[#allocation9 + $0x6d8] sm:$0xff]
    %v1535 = vld [vmem:[#allocation9 + $0x6e0] sm:$0xff]
    %v1536 = vld [vmem:[#allocation9 + $0x6e8] sm:$0xff]
    %v1537 = vld [vmem:[#allocation9 + $0x6f0] sm:$0xff]
    %v1538 = vld [vmem:[#allocation9 + $0x6f8] sm:$0xff]
    %v1539 = vld [vmem:[#allocation9 + $0x700] sm:$0xff]
    %v1540 = vld [vmem:[#allocation9 + $0x708] sm:$0xff]
    %v1541 = vld [vmem:[#allocation9 + $0x710] sm:$0xff]
    %v1542 = vld [vmem:[#allocation9 + $0x718] sm:$0xff]
    %v1543 = vld [vmem:[#allocation9 + $0x720] sm:$0xff]
    %v1544 = vld [vmem:[#allocation9 + $0x728] sm:$0xff]
    %v1545 = vld [vmem:[#allocation9 + $0x730] sm:$0xff]
    %v1546 = vld [vmem:[#allocation9 + $0x738] sm:$0xff]
    %v1547 = vld [vmem:[#allocation9 + $0x740] sm:$0xff]
    %v1548 = vld [vmem:[#allocation9 + $0x748] sm:$0xff]
    %v1549 = vld [vmem:[#allocation9 + $0x750] sm:$0xff]
    %v1550 = vld [vmem:[#allocation9 + $0x758] sm:$0xff]
    %v1551 = vld [vmem:[#allocation9 + $0x760] sm:$0xff]
    %v1552 = vld [vmem:[#allocation9 + $0x768] sm:$0xff]
    %v1553 = vld [vmem:[#allocation9 + $0x770] sm:$0xff]
    %v1554 = vld [vmem:[#allocation9 + $0x778] sm:$0xff]
    %v1555 = vld [vmem:[#allocation9 + $0x780] sm:$0xff]
    %v1556 = vld [vmem:[#allocation9 + $0x788] sm:$0xff]
    %v1557 = vld [vmem:[#allocation9 + $0x790] sm:$0xff]
    %v1558 = vld [vmem:[#allocation9 + $0x798] sm:$0xff]
    %v1559 = vld [vmem:[#allocation9 + $0x7a0] sm:$0xff]
    %v1560 = vld [vmem:[#allocation9 + $0x7a8] sm:$0xff]
    %v1561 = vld [vmem:[#allocation9 + $0x7b0] sm:$0xff]
    %v1562 = vld [vmem:[#allocation9 + $0x7b8] sm:$0xff]
    %v1563 = vld [vmem:[#allocation9 + $0x7c0] sm:$0xff]
    %v1564 = vld [vmem:[#allocation9 + $0x7c8] sm:$0xff]
    %v1565 = vld [vmem:[#allocation9 + $0x7d0] sm:$0xff]
    %v1566 = vld [vmem:[#allocation9 + $0x7d8] sm:$0xff]
    %v1567 = vld [vmem:[#allocation9 + $0x7e0] sm:$0xff]
    %v1568 = vld [vmem:[#allocation9 + $0x7e8] sm:$0xff]
    %v1569 = vld [vmem:[#allocation9 + $0x7f0] sm:$0xff]
    %v1570 = vld [vmem:[#allocation9 + $0x7f8] sm:$0xff]
    %v1827 = vunpack.c.l.b16 %v1315
    %v1828 = vunpack.c.h.b16 %v1315
    %v1829 = vunpack.c.l.b16 %v1316
    %v1830 = vunpack.c.h.b16 %v1316
    %v1831 = vunpack.c.l.b16 %v1317
    %v1832 = vunpack.c.h.b16 %v1317
    %v1833 = vunpack.c.l.b16 %v1318
    %v1834 = vunpack.c.h.b16 %v1318
    %v1835 = vunpack.c.l.b16 %v1319
    %v1836 = vunpack.c.h.b16 %v1319
    %v1837 = vunpack.c.l.b16 %v1320
    %v1838 = vunpack.c.h.b16 %v1320
    %v1839 = vunpack.c.l.b16 %v1321
    %v1840 = vunpack.c.h.b16 %v1321
    %v1841 = vunpack.c.l.b16 %v1322
    %v1842 = vunpack.c.h.b16 %v1322
    %v1843 = vunpack.c.l.b16 %v1323
    %v1844 = vunpack.c.h.b16 %v1323
    %v1845 = vunpack.c.l.b16 %v1324
    %v1846 = vunpack.c.h.b16 %v1324
    %v1847 = vunpack.c.l.b16 %v1325
    %v1848 = vunpack.c.h.b16 %v1325
    %v1849 = vunpack.c.l.b16 %v1326
    %v1850 = vunpack.c.h.b16 %v1326
    %v1851 = vunpack.c.l.b16 %v1327
    %v1852 = vunpack.c.h.b16 %v1327
    %v1853 = vunpack.c.l.b16 %v1328
    %v1854 = vunpack.c.h.b16 %v1328
    %v1855 = vunpack.c.l.b16 %v1329
    %v1856 = vunpack.c.h.b16 %v1329
    %v1857 = vunpack.c.l.b16 %v1330
    %v1858 = vunpack.c.h.b16 %v1330
    %v1859 = vunpack.c.l.b16 %v1331
    %v1860 = vunpack.c.h.b16 %v1331
    %v1861 = vunpack.c.l.b16 %v1332
    %v1862 = vunpack.c.h.b16 %v1332
    %v1863 = vunpack.c.l.b16 %v1333
    %v1864 = vunpack.c.h.b16 %v1333
    %v1865 = vunpack.c.l.b16 %v1334
    %v1866 = vunpack.c.h.b16 %v1334
    %v1867 = vunpack.c.l.b16 %v1335
    %v1868 = vunpack.c.h.b16 %v1335
    %v1869 = vunpack.c.l.b16 %v1336
    %v1870 = vunpack.c.h.b16 %v1336
    %v1871 = vunpack.c.l.b16 %v1337
    %v1872 = vunpack.c.h.b16 %v1337
    %v1873 = vunpack.c.l.b16 %v1338
    %v1874 = vunpack.c.h.b16 %v1338
    %v1875 = vunpack.c.l.b16 %v1339
    %v1876 = vunpack.c.h.b16 %v1339
    %v1877 = vunpack.c.l.b16 %v1340
    %v1878 = vunpack.c.h.b16 %v1340
    %v1879 = vunpack.c.l.b16 %v1341
    %v1880 = vunpack.c.h.b16 %v1341
    %v1881 = vunpack.c.l.b16 %v1342
    %v1882 = vunpack.c.h.b16 %v1342
    %v1883 = vunpack.c.l.b16 %v1343
    %v1884 = vunpack.c.h.b16 %v1343
    %v1885 = vunpack.c.l.b16 %v1344
    %v1886 = vunpack.c.h.b16 %v1344
    %v1887 = vunpack.c.l.b16 %v1345
    %v1888 = vunpack.c.h.b16 %v1345
    %v1889 = vunpack.c.l.b16 %v1346
    %v1890 = vunpack.c.h.b16 %v1346
    %v1891 = vunpack.c.l.b16 %v1347
    %v1892 = vunpack.c.h.b16 %v1347
    %v1893 = vunpack.c.l.b16 %v1348
    %v1894 = vunpack.c.h.b16 %v1348
    %v1895 = vunpack.c.l.b16 %v1349
    %v1896 = vunpack.c.h.b16 %v1349
    %v1897 = vunpack.c.l.b16 %v1350
    %v1898 = vunpack.c.h.b16 %v1350
    %v1899 = vunpack.c.l.b16 %v1351
    %v1900 = vunpack.c.h.b16 %v1351
    %v1901 = vunpack.c.l.b16 %v1352
    %v1902 = vunpack.c.h.b16 %v1352
    %v1903 = vunpack.c.l.b16 %v1353
    %v1904 = vunpack.c.h.b16 %v1353
    %v1905 = vunpack.c.l.b16 %v1354
    %v1906 = vunpack.c.h.b16 %v1354
    %v1907 = vunpack.c.l.b16 %v1355
    %v1908 = vunpack.c.h.b16 %v1355
    %v1909 = vunpack.c.l.b16 %v1356
    %v1910 = vunpack.c.h.b16 %v1356
    %v1911 = vunpack.c.l.b16 %v1357
    %v1912 = vunpack.c.h.b16 %v1357
    %v1913 = vunpack.c.l.b16 %v1358
    %v1914 = vunpack.c.h.b16 %v1358
    %v1915 = vunpack.c.l.b16 %v1359
    %v1916 = vunpack.c.h.b16 %v1359
    %v1917 = vunpack.c.l.b16 %v1360
    %v1918 = vunpack.c.h.b16 %v1360
    %v1919 = vunpack.c.l.b16 %v1361
    %v1920 = vunpack.c.h.b16 %v1361
    %v1921 = vunpack.c.l.b16 %v1362
    %v1922 = vunpack.c.h.b16 %v1362
    %v1923 = vunpack.c.l.b16 %v1363
    %v1924 = vunpack.c.h.b16 %v1363
    %v1925 = vunpack.c.l.b16 %v1364
    %v1926 = vunpack.c.h.b16 %v1364
    %v1927 = vunpack.c.l.b16 %v1365
    %v1928 = vunpack.c.h.b16 %v1365
    %v1929 = vunpack.c.l.b16 %v1366
    %v1930 = vunpack.c.h.b16 %v1366
    %v1931 = vunpack.c.l.b16 %v1367
    %v1932 = vunpack.c.h.b16 %v1367
    %v1933 = vunpack.c.l.b16 %v1368
    %v1934 = vunpack.c.h.b16 %v1368
    %v1935 = vunpack.c.l.b16 %v1369
    %v1936 = vunpack.c.h.b16 %v1369
    %v1937 = vunpack.c.l.b16 %v1370
    %v1938 = vunpack.c.h.b16 %v1370
    %v1939 = vunpack.c.l.b16 %v1371
    %v1940 = vunpack.c.h.b16 %v1371
    %v1941 = vunpack.c.l.b16 %v1372
    %v1942 = vunpack.c.h.b16 %v1372
    %v1943 = vunpack.c.l.b16 %v1373
    %v1944 = vunpack.c.h.b16 %v1373
    %v1945 = vunpack.c.l.b16 %v1374
    %v1946 = vunpack.c.h.b16 %v1374
    %v1947 = vunpack.c.l.b16 %v1375
    %v1948 = vunpack.c.h.b16 %v1375
    %v1949 = vunpack.c.l.b16 %v1376
    %v1950 = vunpack.c.h.b16 %v1376
    %v1951 = vunpack.c.l.b16 %v1377
    %v1952 = vunpack.c.h.b16 %v1377
    %v1953 = vunpack.c.l.b16 %v1378
    %v1954 = vunpack.c.h.b16 %v1378
    %v1955 = vunpack.c.l.b16 %v1379
    %v1956 = vunpack.c.h.b16 %v1379
    %v1957 = vunpack.c.l.b16 %v1380
    %v1958 = vunpack.c.h.b16 %v1380
    %v1959 = vunpack.c.l.b16 %v1381
    %v1960 = vunpack.c.h.b16 %v1381
    %v1961 = vunpack.c.l.b16 %v1382
    %v1962 = vunpack.c.h.b16 %v1382
    %v1963 = vunpack.c.l.b16 %v1383
    %v1964 = vunpack.c.h.b16 %v1383
    %v1965 = vunpack.c.l.b16 %v1384
    %v1966 = vunpack.c.h.b16 %v1384
    %v1967 = vunpack.c.l.b16 %v1385
    %v1968 = vunpack.c.h.b16 %v1385
    %v1969 = vunpack.c.l.b16 %v1386
    %v1970 = vunpack.c.h.b16 %v1386
    %v1971 = vunpack.c.l.b16 %v1387
    %v1972 = vunpack.c.h.b16 %v1387
    %v1973 = vunpack.c.l.b16 %v1388
    %v1974 = vunpack.c.h.b16 %v1388
    %v1975 = vunpack.c.l.b16 %v1389
    %v1976 = vunpack.c.h.b16 %v1389
    %v1977 = vunpack.c.l.b16 %v1390
    %v1978 = vunpack.c.h.b16 %v1390
    %v1979 = vunpack.c.l.b16 %v1391
    %v1980 = vunpack.c.h.b16 %v1391
    %v1981 = vunpack.c.l.b16 %v1392
    %v1982 = vunpack.c.h.b16 %v1392
    %v1983 = vunpack.c.l.b16 %v1393
    %v1984 = vunpack.c.h.b16 %v1393
    %v1985 = vunpack.c.l.b16 %v1394
    %v1986 = vunpack.c.h.b16 %v1394
    %v1987 = vunpack.c.l.b16 %v1395
    %v1988 = vunpack.c.h.b16 %v1395
    %v1989 = vunpack.c.l.b16 %v1396
    %v1990 = vunpack.c.h.b16 %v1396
    %v1991 = vunpack.c.l.b16 %v1397
    %v1992 = vunpack.c.h.b16 %v1397
    %v1993 = vunpack.c.l.b16 %v1398
    %v1994 = vunpack.c.h.b16 %v1398
    %v1995 = vunpack.c.l.b16 %v1399
    %v1996 = vunpack.c.h.b16 %v1399
    %v1997 = vunpack.c.l.b16 %v1400
    %v1998 = vunpack.c.h.b16 %v1400
    %v1999 = vunpack.c.l.b16 %v1401
    %v2000 = vunpack.c.h.b16 %v1401
    %v2001 = vunpack.c.l.b16 %v1402
    %v2002 = vunpack.c.h.b16 %v1402
    %v2003 = vunpack.c.l.b16 %v1403
    %v2004 = vunpack.c.h.b16 %v1403
    %v2005 = vunpack.c.l.b16 %v1404
    %v2006 = vunpack.c.h.b16 %v1404
    %v2007 = vunpack.c.l.b16 %v1405
    %v2008 = vunpack.c.h.b16 %v1405
    %v2009 = vunpack.c.l.b16 %v1406
    %v2010 = vunpack.c.h.b16 %v1406
    %v2011 = vunpack.c.l.b16 %v1407
    %v2012 = vunpack.c.h.b16 %v1407
    %v2013 = vunpack.c.l.b16 %v1408
    %v2014 = vunpack.c.h.b16 %v1408
    %v2015 = vunpack.c.l.b16 %v1409
    %v2016 = vunpack.c.h.b16 %v1409
    %v2017 = vunpack.c.l.b16 %v1410
    %v2018 = vunpack.c.h.b16 %v1410
    %v2019 = vunpack.c.l.b16 %v1411
    %v2020 = vunpack.c.h.b16 %v1411
    %v2021 = vunpack.c.l.b16 %v1412
    %v2022 = vunpack.c.h.b16 %v1412
    %v2023 = vunpack.c.l.b16 %v1413
    %v2024 = vunpack.c.h.b16 %v1413
    %v2025 = vunpack.c.l.b16 %v1414
    %v2026 = vunpack.c.h.b16 %v1414
    %v2027 = vunpack.c.l.b16 %v1415
    %v2028 = vunpack.c.h.b16 %v1415
    %v2029 = vunpack.c.l.b16 %v1416
    %v2030 = vunpack.c.h.b16 %v1416
    %v2031 = vunpack.c.l.b16 %v1417
    %v2032 = vunpack.c.h.b16 %v1417
    %v2033 = vunpack.c.l.b16 %v1418
    %v2034 = vunpack.c.h.b16 %v1418
    %v2035 = vunpack.c.l.b16 %v1419
    %v2036 = vunpack.c.h.b16 %v1419
    %v2037 = vunpack.c.l.b16 %v1420
    %v2038 = vunpack.c.h.b16 %v1420
    %v2039 = vunpack.c.l.b16 %v1421
    %v2040 = vunpack.c.h.b16 %v1421
    %v2041 = vunpack.c.l.b16 %v1422
    %v2042 = vunpack.c.h.b16 %v1422
    %v2043 = vunpack.c.l.b16 %v1423
    %v2044 = vunpack.c.h.b16 %v1423
    %v2045 = vunpack.c.l.b16 %v1424
    %v2046 = vunpack.c.h.b16 %v1424
    %v2047 = vunpack.c.l.b16 %v1425
    %v2048 = vunpack.c.h.b16 %v1425
    %v2049 = vunpack.c.l.b16 %v1426
    %v2050 = vunpack.c.h.b16 %v1426
    %v2051 = vunpack.c.l.b16 %v1427
    %v2052 = vunpack.c.h.b16 %v1427
    %v2053 = vunpack.c.l.b16 %v1428
    %v2054 = vunpack.c.h.b16 %v1428
    %v2055 = vunpack.c.l.b16 %v1429
    %v2056 = vunpack.c.h.b16 %v1429
    %v2057 = vunpack.c.l.b16 %v1430
    %v2058 = vunpack.c.h.b16 %v1430
    %v2059 = vunpack.c.l.b16 %v1431
    %v2060 = vunpack.c.h.b16 %v1431
    %v2061 = vunpack.c.l.b16 %v1432
    %v2062 = vunpack.c.h.b16 %v1432
    %v2063 = vunpack.c.l.b16 %v1433
    %v2064 = vunpack.c.h.b16 %v1433
    %v2065 = vunpack.c.l.b16 %v1434
    %v2066 = vunpack.c.h.b16 %v1434
    %v2067 = vunpack.c.l.b16 %v1435
    %v2068 = vunpack.c.h.b16 %v1435
    %v2069 = vunpack.c.l.b16 %v1436
    %v2070 = vunpack.c.h.b16 %v1436
    %v2071 = vunpack.c.l.b16 %v1437
    %v2072 = vunpack.c.h.b16 %v1437
    %v2073 = vunpack.c.l.b16 %v1438
    %v2074 = vunpack.c.h.b16 %v1438
    %v2075 = vunpack.c.l.b16 %v1439
    %v2076 = vunpack.c.h.b16 %v1439
    %v2077 = vunpack.c.l.b16 %v1440
    %v2078 = vunpack.c.h.b16 %v1440
    %v2079 = vunpack.c.l.b16 %v1441
    %v2080 = vunpack.c.h.b16 %v1441
    %v2081 = vunpack.c.l.b16 %v1442
    %v2082 = vunpack.c.h.b16 %v1442
    %v2083 = vunpack.c.l.b16 %v1443
    %v2084 = vunpack.c.h.b16 %v1443
    %v2085 = vunpack.c.l.b16 %v1444
    %v2086 = vunpack.c.h.b16 %v1444
    %v2087 = vunpack.c.l.b16 %v1445
    %v2088 = vunpack.c.h.b16 %v1445
    %v2089 = vunpack.c.l.b16 %v1446
    %v2090 = vunpack.c.h.b16 %v1446
    %v2091 = vunpack.c.l.b16 %v1447
    %v2092 = vunpack.c.h.b16 %v1447
    %v2093 = vunpack.c.l.b16 %v1448
    %v2094 = vunpack.c.h.b16 %v1448
    %v2095 = vunpack.c.l.b16 %v1449
    %v2096 = vunpack.c.h.b16 %v1449
    %v2097 = vunpack.c.l.b16 %v1450
    %v2098 = vunpack.c.h.b16 %v1450
    %v2099 = vunpack.c.l.b16 %v1451
    %v2100 = vunpack.c.h.b16 %v1451
    %v2101 = vunpack.c.l.b16 %v1452
    %v2102 = vunpack.c.h.b16 %v1452
    %v2103 = vunpack.c.l.b16 %v1453
    %v2104 = vunpack.c.h.b16 %v1453
    %v2105 = vunpack.c.l.b16 %v1454
    %v2106 = vunpack.c.h.b16 %v1454
    %v2107 = vunpack.c.l.b16 %v1455
    %v2108 = vunpack.c.h.b16 %v1455
    %v2109 = vunpack.c.l.b16 %v1456
    %v2110 = vunpack.c.h.b16 %v1456
    %v2111 = vunpack.c.l.b16 %v1457
    %v2112 = vunpack.c.h.b16 %v1457
    %v2113 = vunpack.c.l.b16 %v1458
    %v2114 = vunpack.c.h.b16 %v1458
    %v2115 = vunpack.c.l.b16 %v1459
    %v2116 = vunpack.c.h.b16 %v1459
    %v2117 = vunpack.c.l.b16 %v1460
    %v2118 = vunpack.c.h.b16 %v1460
    %v2119 = vunpack.c.l.b16 %v1461
    %v2120 = vunpack.c.h.b16 %v1461
    %v2121 = vunpack.c.l.b16 %v1462
    %v2122 = vunpack.c.h.b16 %v1462
    %v2123 = vunpack.c.l.b16 %v1463
    %v2124 = vunpack.c.h.b16 %v1463
    %v2125 = vunpack.c.l.b16 %v1464
    %v2126 = vunpack.c.h.b16 %v1464
    %v2127 = vunpack.c.l.b16 %v1465
    %v2128 = vunpack.c.h.b16 %v1465
    %v2129 = vunpack.c.l.b16 %v1466
    %v2130 = vunpack.c.h.b16 %v1466
    %v2131 = vunpack.c.l.b16 %v1467
    %v2132 = vunpack.c.h.b16 %v1467
    %v2133 = vunpack.c.l.b16 %v1468
    %v2134 = vunpack.c.h.b16 %v1468
    %v2135 = vunpack.c.l.b16 %v1469
    %v2136 = vunpack.c.h.b16 %v1469
    %v2137 = vunpack.c.l.b16 %v1470
    %v2138 = vunpack.c.h.b16 %v1470
    %v2139 = vunpack.c.l.b16 %v1471
    %v2140 = vunpack.c.h.b16 %v1471
    %v2141 = vunpack.c.l.b16 %v1472
    %v2142 = vunpack.c.h.b16 %v1472
    %v2143 = vunpack.c.l.b16 %v1473
    %v2144 = vunpack.c.h.b16 %v1473
    %v2145 = vunpack.c.l.b16 %v1474
    %v2146 = vunpack.c.h.b16 %v1474
    %v2147 = vunpack.c.l.b16 %v1475
    %v2148 = vunpack.c.h.b16 %v1475
    %v2149 = vunpack.c.l.b16 %v1476
    %v2150 = vunpack.c.h.b16 %v1476
    %v2151 = vunpack.c.l.b16 %v1477
    %v2152 = vunpack.c.h.b16 %v1477
    %v2153 = vunpack.c.l.b16 %v1478
    %v2154 = vunpack.c.h.b16 %v1478
    %v2155 = vunpack.c.l.b16 %v1479
    %v2156 = vunpack.c.h.b16 %v1479
    %v2157 = vunpack.c.l.b16 %v1480
    %v2158 = vunpack.c.h.b16 %v1480
    %v2159 = vunpack.c.l.b16 %v1481
    %v2160 = vunpack.c.h.b16 %v1481
    %v2161 = vunpack.c.l.b16 %v1482
    %v2162 = vunpack.c.h.b16 %v1482
    %v2163 = vunpack.c.l.b16 %v1483
    %v2164 = vunpack.c.h.b16 %v1483
    %v2165 = vunpack.c.l.b16 %v1484
    %v2166 = vunpack.c.h.b16 %v1484
    %v2167 = vunpack.c.l.b16 %v1485
    %v2168 = vunpack.c.h.b16 %v1485
    %v2169 = vunpack.c.l.b16 %v1486
    %v2170 = vunpack.c.h.b16 %v1486
    %v2171 = vunpack.c.l.b16 %v1487
    %v2172 = vunpack.c.h.b16 %v1487
    %v2173 = vunpack.c.l.b16 %v1488
    %v2174 = vunpack.c.h.b16 %v1488
    %v2175 = vunpack.c.l.b16 %v1489
    %v2176 = vunpack.c.h.b16 %v1489
    %v2177 = vunpack.c.l.b16 %v1490
    %v2178 = vunpack.c.h.b16 %v1490
    %v2179 = vunpack.c.l.b16 %v1491
    %v2180 = vunpack.c.h.b16 %v1491
    %v2181 = vunpack.c.l.b16 %v1492
    %v2182 = vunpack.c.h.b16 %v1492
    %v2183 = vunpack.c.l.b16 %v1493
    %v2184 = vunpack.c.h.b16 %v1493
    %v2185 = vunpack.c.l.b16 %v1494
    %v2186 = vunpack.c.h.b16 %v1494
    %v2187 = vunpack.c.l.b16 %v1495
    %v2188 = vunpack.c.h.b16 %v1495
    %v2189 = vunpack.c.l.b16 %v1496
    %v2190 = vunpack.c.h.b16 %v1496
    %v2191 = vunpack.c.l.b16 %v1497
    %v2192 = vunpack.c.h.b16 %v1497
    %v2193 = vunpack.c.l.b16 %v1498
    %v2194 = vunpack.c.h.b16 %v1498
    %v2195 = vunpack.c.l.b16 %v1499
    %v2196 = vunpack.c.h.b16 %v1499
    %v2197 = vunpack.c.l.b16 %v1500
    %v2198 = vunpack.c.h.b16 %v1500
    %v2199 = vunpack.c.l.b16 %v1501
    %v2200 = vunpack.c.h.b16 %v1501
    %v2201 = vunpack.c.l.b16 %v1502
    %v2202 = vunpack.c.h.b16 %v1502
    %v2203 = vunpack.c.l.b16 %v1503
    %v2204 = vunpack.c.h.b16 %v1503
    %v2205 = vunpack.c.l.b16 %v1504
    %v2206 = vunpack.c.h.b16 %v1504
    %v2207 = vunpack.c.l.b16 %v1505
    %v2208 = vunpack.c.h.b16 %v1505
    %v2209 = vunpack.c.l.b16 %v1506
    %v2210 = vunpack.c.h.b16 %v1506
    %v2211 = vunpack.c.l.b16 %v1507
    %v2212 = vunpack.c.h.b16 %v1507
    %v2213 = vunpack.c.l.b16 %v1508
    %v2214 = vunpack.c.h.b16 %v1508
    %v2215 = vunpack.c.l.b16 %v1509
    %v2216 = vunpack.c.h.b16 %v1509
    %v2217 = vunpack.c.l.b16 %v1510
    %v2218 = vunpack.c.h.b16 %v1510
    %v2219 = vunpack.c.l.b16 %v1511
    %v2220 = vunpack.c.h.b16 %v1511
    %v2221 = vunpack.c.l.b16 %v1512
    %v2222 = vunpack.c.h.b16 %v1512
    %v2223 = vunpack.c.l.b16 %v1513
    %v2224 = vunpack.c.h.b16 %v1513
    %v2225 = vunpack.c.l.b16 %v1514
    %v2226 = vunpack.c.h.b16 %v1514
    %v2227 = vunpack.c.l.b16 %v1515
    %v2228 = vunpack.c.h.b16 %v1515
    %v2229 = vunpack.c.l.b16 %v1516
    %v2230 = vunpack.c.h.b16 %v1516
    %v2231 = vunpack.c.l.b16 %v1517
    %v2232 = vunpack.c.h.b16 %v1517
    %v2233 = vunpack.c.l.b16 %v1518
    %v2234 = vunpack.c.h.b16 %v1518
    %v2235 = vunpack.c.l.b16 %v1519
    %v2236 = vunpack.c.h.b16 %v1519
    %v2237 = vunpack.c.l.b16 %v1520
    %v2238 = vunpack.c.h.b16 %v1520
    %v2239 = vunpack.c.l.b16 %v1521
    %v2240 = vunpack.c.h.b16 %v1521
    %v2241 = vunpack.c.l.b16 %v1522
    %v2242 = vunpack.c.h.b16 %v1522
    %v2243 = vunpack.c.l.b16 %v1523
    %v2244 = vunpack.c.h.b16 %v1523
    %v2245 = vunpack.c.l.b16 %v1524
    %v2246 = vunpack.c.h.b16 %v1524
    %v2247 = vunpack.c.l.b16 %v1525
    %v2248 = vunpack.c.h.b16 %v1525
    %v2249 = vunpack.c.l.b16 %v1526
    %v2250 = vunpack.c.h.b16 %v1526
    %v2251 = vunpack.c.l.b16 %v1527
    %v2252 = vunpack.c.h.b16 %v1527
    %v2253 = vunpack.c.l.b16 %v1528
    %v2254 = vunpack.c.h.b16 %v1528
    %v2255 = vunpack.c.l.b16 %v1529
    %v2256 = vunpack.c.h.b16 %v1529
    %v2257 = vunpack.c.l.b16 %v1530
    %v2258 = vunpack.c.h.b16 %v1530
    %v2259 = vunpack.c.l.b16 %v1531
    %v2260 = vunpack.c.h.b16 %v1531
    %v2261 = vunpack.c.l.b16 %v1532
    %v2262 = vunpack.c.h.b16 %v1532
    %v2263 = vunpack.c.l.b16 %v1533
    %v2264 = vunpack.c.h.b16 %v1533
    %v2265 = vunpack.c.l.b16 %v1534
    %v2266 = vunpack.c.h.b16 %v1534
    %v2267 = vunpack.c.l.b16 %v1535
    %v2268 = vunpack.c.h.b16 %v1535
    %v2269 = vunpack.c.l.b16 %v1536
    %v2270 = vunpack.c.h.b16 %v1536
    %v2271 = vunpack.c.l.b16 %v1537
    %v2272 = vunpack.c.h.b16 %v1537
    %v2273 = vunpack.c.l.b16 %v1538
    %v2274 = vunpack.c.h.b16 %v1538
    %v2275 = vunpack.c.l.b16 %v1539
    %v2276 = vunpack.c.h.b16 %v1539
    %v2277 = vunpack.c.l.b16 %v1540
    %v2278 = vunpack.c.h.b16 %v1540
    %v2279 = vunpack.c.l.b16 %v1541
    %v2280 = vunpack.c.h.b16 %v1541
    %v2281 = vunpack.c.l.b16 %v1542
    %v2282 = vunpack.c.h.b16 %v1542
    %v2283 = vunpack.c.l.b16 %v1543
    %v2284 = vunpack.c.h.b16 %v1543
    %v2285 = vunpack.c.l.b16 %v1544
    %v2286 = vunpack.c.h.b16 %v1544
    %v2287 = vunpack.c.l.b16 %v1545
    %v2288 = vunpack.c.h.b16 %v1545
    %v2289 = vunpack.c.l.b16 %v1546
    %v2290 = vunpack.c.h.b16 %v1546
    %v2291 = vunpack.c.l.b16 %v1547
    %v2292 = vunpack.c.h.b16 %v1547
    %v2293 = vunpack.c.l.b16 %v1548
    %v2294 = vunpack.c.h.b16 %v1548
    %v2295 = vunpack.c.l.b16 %v1549
    %v2296 = vunpack.c.h.b16 %v1549
    %v2297 = vunpack.c.l.b16 %v1550
    %v2298 = vunpack.c.h.b16 %v1550
    %v2299 = vunpack.c.l.b16 %v1551
    %v2300 = vunpack.c.h.b16 %v1551
    %v2301 = vunpack.c.l.b16 %v1552
    %v2302 = vunpack.c.h.b16 %v1552
    %v2303 = vunpack.c.l.b16 %v1553
    %v2304 = vunpack.c.h.b16 %v1553
    %v2305 = vunpack.c.l.b16 %v1554
    %v2306 = vunpack.c.h.b16 %v1554
    %v2307 = vunpack.c.l.b16 %v1555
    %v2308 = vunpack.c.h.b16 %v1555
    %v2309 = vunpack.c.l.b16 %v1556
    %v2310 = vunpack.c.h.b16 %v1556
    %v2311 = vunpack.c.l.b16 %v1557
    %v2312 = vunpack.c.h.b16 %v1557
    %v2313 = vunpack.c.l.b16 %v1558
    %v2314 = vunpack.c.h.b16 %v1558
    %v2315 = vunpack.c.l.b16 %v1559
    %v2316 = vunpack.c.h.b16 %v1559
    %v2317 = vunpack.c.l.b16 %v1560
    %v2318 = vunpack.c.h.b16 %v1560
    %v2319 = vunpack.c.l.b16 %v1561
    %v2320 = vunpack.c.h.b16 %v1561
    %v2321 = vunpack.c.l.b16 %v1562
    %v2322 = vunpack.c.h.b16 %v1562
    %v2323 = vunpack.c.l.b16 %v1563
    %v2324 = vunpack.c.h.b16 %v1563
    %v2325 = vunpack.c.l.b16 %v1564
    %v2326 = vunpack.c.h.b16 %v1564
    %v2327 = vunpack.c.l.b16 %v1565
    %v2328 = vunpack.c.h.b16 %v1565
    %v2329 = vunpack.c.l.b16 %v1566
    %v2330 = vunpack.c.h.b16 %v1566
    %v2331 = vunpack.c.l.b16 %v1567
    %v2332 = vunpack.c.h.b16 %v1567
    %v2333 = vunpack.c.l.b16 %v1568
    %v2334 = vunpack.c.h.b16 %v1568
    %v2335 = vunpack.c.l.b16 %v1569
    %v2336 = vunpack.c.h.b16 %v1569
    %v2337 = vunpack.c.l.b16 %v1570
    %v2338 = vunpack.c.h.b16 %v1570
    %v2339 = vpack.c.b16 %v1835, %v1827
    %v2340 = vpack.c.b16 %v1836, %v1828
    %v2341 = vpack.c.b16 %v1837, %v1829
    %v2342 = vpack.c.b16 %v1838, %v1830
    %v2343 = vpack.c.b16 %v1839, %v1831
    %v2344 = vpack.c.b16 %v1840, %v1832
    %v2345 = vpack.c.b16 %v1841, %v1833
    %v2346 = vpack.c.b16 %v1842, %v1834
    %v2347 = vpack.c.b16 %v1851, %v1843
    %v2348 = vpack.c.b16 %v1852, %v1844
    %v2349 = vpack.c.b16 %v1853, %v1845
    %v2350 = vpack.c.b16 %v1854, %v1846
    %v2351 = vpack.c.b16 %v1855, %v1847
    %v2352 = vpack.c.b16 %v1856, %v1848
    %v2353 = vpack.c.b16 %v1857, %v1849
    %v2354 = vpack.c.b16 %v1858, %v1850
    %v2355 = vpack.c.b16 %v1867, %v1859
    %v2356 = vpack.c.b16 %v1868, %v1860
    %v2357 = vpack.c.b16 %v1869, %v1861
    %v2358 = vpack.c.b16 %v1870, %v1862
    %v2359 = vpack.c.b16 %v1871, %v1863
    %v2360 = vpack.c.b16 %v1872, %v1864
    %v2361 = vpack.c.b16 %v1873, %v1865
    %v2362 = vpack.c.b16 %v1874, %v1866
    %v2363 = vpack.c.b16 %v1883, %v1875
    %v2364 = vpack.c.b16 %v1884, %v1876
    %v2365 = vpack.c.b16 %v1885, %v1877
    %v2366 = vpack.c.b16 %v1886, %v1878
    %v2367 = vpack.c.b16 %v1887, %v1879
    %v2368 = vpack.c.b16 %v1888, %v1880
    %v2369 = vpack.c.b16 %v1889, %v1881
    %v2370 = vpack.c.b16 %v1890, %v1882
    %v2371 = vpack.c.b16 %v1899, %v1891
    %v2372 = vpack.c.b16 %v1900, %v1892
    %v2373 = vpack.c.b16 %v1901, %v1893
    %v2374 = vpack.c.b16 %v1902, %v1894
    %v2375 = vpack.c.b16 %v1903, %v1895
    %v2376 = vpack.c.b16 %v1904, %v1896
    %v2377 = vpack.c.b16 %v1905, %v1897
    %v2378 = vpack.c.b16 %v1906, %v1898
    %v2379 = vpack.c.b16 %v1915, %v1907
    %v2380 = vpack.c.b16 %v1916, %v1908
    %v2381 = vpack.c.b16 %v1917, %v1909
    %v2382 = vpack.c.b16 %v1918, %v1910
    %v2383 = vpack.c.b16 %v1919, %v1911
    %v2384 = vpack.c.b16 %v1920, %v1912
    %v2385 = vpack.c.b16 %v1921, %v1913
    %v2386 = vpack.c.b16 %v1922, %v1914
    %v2387 = vpack.c.b16 %v1931, %v1923
    %v2388 = vpack.c.b16 %v1932, %v1924
    %v2389 = vpack.c.b16 %v1933, %v1925
    %v2390 = vpack.c.b16 %v1934, %v1926
    %v2391 = vpack.c.b16 %v1935, %v1927
    %v2392 = vpack.c.b16 %v1936, %v1928
    %v2393 = vpack.c.b16 %v1937, %v1929
    %v2394 = vpack.c.b16 %v1938, %v1930
    %v2395 = vpack.c.b16 %v1947, %v1939
    %v2396 = vpack.c.b16 %v1948, %v1940
    %v2397 = vpack.c.b16 %v1949, %v1941
    %v2398 = vpack.c.b16 %v1950, %v1942
    %v2399 = vpack.c.b16 %v1951, %v1943
    %v2400 = vpack.c.b16 %v1952, %v1944
    %v2401 = vpack.c.b16 %v1953, %v1945
    %v2402 = vpack.c.b16 %v1954, %v1946
    %v2403 = vpack.c.b16 %v1963, %v1955
    %v2404 = vpack.c.b16 %v1964, %v1956
    %v2405 = vpack.c.b16 %v1965, %v1957
    %v2406 = vpack.c.b16 %v1966, %v1958
    %v2407 = vpack.c.b16 %v1967, %v1959
    %v2408 = vpack.c.b16 %v1968, %v1960
    %v2409 = vpack.c.b16 %v1969, %v1961
    %v2410 = vpack.c.b16 %v1970, %v1962
    %v2411 = vpack.c.b16 %v1979, %v1971
    %v2412 = vpack.c.b16 %v1980, %v1972
    %v2413 = vpack.c.b16 %v1981, %v1973
    %v2414 = vpack.c.b16 %v1982, %v1974
    %v2415 = vpack.c.b16 %v1983, %v1975
    %v2416 = vpack.c.b16 %v1984, %v1976
    %v2417 = vpack.c.b16 %v1985, %v1977
    %v2418 = vpack.c.b16 %v1986, %v1978
    %v2419 = vpack.c.b16 %v1995, %v1987
    %v2420 = vpack.c.b16 %v1996, %v1988
    %v2421 = vpack.c.b16 %v1997, %v1989
    %v2422 = vpack.c.b16 %v1998, %v1990
    %v2423 = vpack.c.b16 %v1999, %v1991
    %v2424 = vpack.c.b16 %v2000, %v1992
    %v2425 = vpack.c.b16 %v2001, %v1993
    %v2426 = vpack.c.b16 %v2002, %v1994
    %v2427 = vpack.c.b16 %v2011, %v2003
    %v2428 = vpack.c.b16 %v2012, %v2004
    %v2429 = vpack.c.b16 %v2013, %v2005
    %v2430 = vpack.c.b16 %v2014, %v2006
    %v2431 = vpack.c.b16 %v2015, %v2007
    %v2432 = vpack.c.b16 %v2016, %v2008
    %v2433 = vpack.c.b16 %v2017, %v2009
    %v2434 = vpack.c.b16 %v2018, %v2010
    %v2435 = vpack.c.b16 %v2027, %v2019
    %v2436 = vpack.c.b16 %v2028, %v2020
    %v2437 = vpack.c.b16 %v2029, %v2021
    %v2438 = vpack.c.b16 %v2030, %v2022
    %v2439 = vpack.c.b16 %v2031, %v2023
    %v2440 = vpack.c.b16 %v2032, %v2024
    %v2441 = vpack.c.b16 %v2033, %v2025
    %v2442 = vpack.c.b16 %v2034, %v2026
    %v2443 = vpack.c.b16 %v2043, %v2035
    %v2444 = vpack.c.b16 %v2044, %v2036
    %v2445 = vpack.c.b16 %v2045, %v2037
    %v2446 = vpack.c.b16 %v2046, %v2038
    %v2447 = vpack.c.b16 %v2047, %v2039
    %v2448 = vpack.c.b16 %v2048, %v2040
    %v2449 = vpack.c.b16 %v2049, %v2041
    %v2450 = vpack.c.b16 %v2050, %v2042
    %v2451 = vpack.c.b16 %v2059, %v2051
    %v2452 = vpack.c.b16 %v2060, %v2052
    %v2453 = vpack.c.b16 %v2061, %v2053
    %v2454 = vpack.c.b16 %v2062, %v2054
    %v2455 = vpack.c.b16 %v2063, %v2055
    %v2456 = vpack.c.b16 %v2064, %v2056
    %v2457 = vpack.c.b16 %v2065, %v2057
    %v2458 = vpack.c.b16 %v2066, %v2058
    %v2459 = vpack.c.b16 %v2075, %v2067
    %v2460 = vpack.c.b16 %v2076, %v2068
    %v2461 = vpack.c.b16 %v2077, %v2069
    %v2462 = vpack.c.b16 %v2078, %v2070
    %v2463 = vpack.c.b16 %v2079, %v2071
    %v2464 = vpack.c.b16 %v2080, %v2072
    %v2465 = vpack.c.b16 %v2081, %v2073
    %v2466 = vpack.c.b16 %v2082, %v2074
    %v2467 = vpack.c.b16 %v2091, %v2083
    %v2468 = vpack.c.b16 %v2092, %v2084
    %v2469 = vpack.c.b16 %v2093, %v2085
    %v2470 = vpack.c.b16 %v2094, %v2086
    %v2471 = vpack.c.b16 %v2095, %v2087
    %v2472 = vpack.c.b16 %v2096, %v2088
    %v2473 = vpack.c.b16 %v2097, %v2089
    %v2474 = vpack.c.b16 %v2098, %v2090
    %v2475 = vpack.c.b16 %v2107, %v2099
    %v2476 = vpack.c.b16 %v2108, %v2100
    %v2477 = vpack.c.b16 %v2109, %v2101
    %v2478 = vpack.c.b16 %v2110, %v2102
    %v2479 = vpack.c.b16 %v2111, %v2103
    %v2480 = vpack.c.b16 %v2112, %v2104
    %v2481 = vpack.c.b16 %v2113, %v2105
    %v2482 = vpack.c.b16 %v2114, %v2106
    %v2483 = vpack.c.b16 %v2123, %v2115
    %v2484 = vpack.c.b16 %v2124, %v2116
    %v2485 = vpack.c.b16 %v2125, %v2117
    %v2486 = vpack.c.b16 %v2126, %v2118
    %v2487 = vpack.c.b16 %v2127, %v2119
    %v2488 = vpack.c.b16 %v2128, %v2120
    %v2489 = vpack.c.b16 %v2129, %v2121
    %v2490 = vpack.c.b16 %v2130, %v2122
    %v2491 = vpack.c.b16 %v2139, %v2131
    %v2492 = vpack.c.b16 %v2140, %v2132
    %v2493 = vpack.c.b16 %v2141, %v2133
    %v2494 = vpack.c.b16 %v2142, %v2134
    %v2495 = vpack.c.b16 %v2143, %v2135
    %v2496 = vpack.c.b16 %v2144, %v2136
    %v2497 = vpack.c.b16 %v2145, %v2137
    %v2498 = vpack.c.b16 %v2146, %v2138
    %v2499 = vpack.c.b16 %v2155, %v2147
    %v2500 = vpack.c.b16 %v2156, %v2148
    %v2501 = vpack.c.b16 %v2157, %v2149
    %v2502 = vpack.c.b16 %v2158, %v2150
    %v2503 = vpack.c.b16 %v2159, %v2151
    %v2504 = vpack.c.b16 %v2160, %v2152
    %v2505 = vpack.c.b16 %v2161, %v2153
    %v2506 = vpack.c.b16 %v2162, %v2154
    %v2507 = vpack.c.b16 %v2171, %v2163
    %v2508 = vpack.c.b16 %v2172, %v2164
    %v2509 = vpack.c.b16 %v2173, %v2165
    %v2510 = vpack.c.b16 %v2174, %v2166
    %v2511 = vpack.c.b16 %v2175, %v2167
    %v2512 = vpack.c.b16 %v2176, %v2168
    %v2513 = vpack.c.b16 %v2177, %v2169
    %v2514 = vpack.c.b16 %v2178, %v2170
    %v2515 = vpack.c.b16 %v2187, %v2179
    %v2516 = vpack.c.b16 %v2188, %v2180
    %v2517 = vpack.c.b16 %v2189, %v2181
    %v2518 = vpack.c.b16 %v2190, %v2182
    %v2519 = vpack.c.b16 %v2191, %v2183
    %v2520 = vpack.c.b16 %v2192, %v2184
    %v2521 = vpack.c.b16 %v2193, %v2185
    %v2522 = vpack.c.b16 %v2194, %v2186
    %v2523 = vpack.c.b16 %v2203, %v2195
    %v2524 = vpack.c.b16 %v2204, %v2196
    %v2525 = vpack.c.b16 %v2205, %v2197
    %v2526 = vpack.c.b16 %v2206, %v2198
    %v2527 = vpack.c.b16 %v2207, %v2199
    %v2528 = vpack.c.b16 %v2208, %v2200
    %v2529 = vpack.c.b16 %v2209, %v2201
    %v2530 = vpack.c.b16 %v2210, %v2202
    %v2531 = vpack.c.b16 %v2219, %v2211
    %v2532 = vpack.c.b16 %v2220, %v2212
    %v2533 = vpack.c.b16 %v2221, %v2213
    %v2534 = vpack.c.b16 %v2222, %v2214
    %v2535 = vpack.c.b16 %v2223, %v2215
    %v2536 = vpack.c.b16 %v2224, %v2216
    %v2537 = vpack.c.b16 %v2225, %v2217
    %v2538 = vpack.c.b16 %v2226, %v2218
    %v2539 = vpack.c.b16 %v2235, %v2227
    %v2540 = vpack.c.b16 %v2236, %v2228
    %v2541 = vpack.c.b16 %v2237, %v2229
    %v2542 = vpack.c.b16 %v2238, %v2230
    %v2543 = vpack.c.b16 %v2239, %v2231
    %v2544 = vpack.c.b16 %v2240, %v2232
    %v2545 = vpack.c.b16 %v2241, %v2233
    %v2546 = vpack.c.b16 %v2242, %v2234
    %v2547 = vpack.c.b16 %v2251, %v2243
    %v2548 = vpack.c.b16 %v2252, %v2244
    %v2549 = vpack.c.b16 %v2253, %v2245
    %v2550 = vpack.c.b16 %v2254, %v2246
    %v2551 = vpack.c.b16 %v2255, %v2247
    %v2552 = vpack.c.b16 %v2256, %v2248
    %v2553 = vpack.c.b16 %v2257, %v2249
    %v2554 = vpack.c.b16 %v2258, %v2250
    %v2555 = vpack.c.b16 %v2267, %v2259
    %v2556 = vpack.c.b16 %v2268, %v2260
    %v2557 = vpack.c.b16 %v2269, %v2261
    %v2558 = vpack.c.b16 %v2270, %v2262
    %v2559 = vpack.c.b16 %v2271, %v2263
    %v2560 = vpack.c.b16 %v2272, %v2264
    %v2561 = vpack.c.b16 %v2273, %v2265
    %v2562 = vpack.c.b16 %v2274, %v2266
    %v2563 = vpack.c.b16 %v2283, %v2275
    %v2564 = vpack.c.b16 %v2284, %v2276
    %v2565 = vpack.c.b16 %v2285, %v2277
    %v2566 = vpack.c.b16 %v2286, %v2278
    %v2567 = vpack.c.b16 %v2287, %v2279
    %v2568 = vpack.c.b16 %v2288, %v2280
    %v2569 = vpack.c.b16 %v2289, %v2281
    %v2570 = vpack.c.b16 %v2290, %v2282
    %v2571 = vpack.c.b16 %v2299, %v2291
    %v2572 = vpack.c.b16 %v2300, %v2292
    %v2573 = vpack.c.b16 %v2301, %v2293
    %v2574 = vpack.c.b16 %v2302, %v2294
    %v2575 = vpack.c.b16 %v2303, %v2295
    %v2576 = vpack.c.b16 %v2304, %v2296
    %v2577 = vpack.c.b16 %v2305, %v2297
    %v2578 = vpack.c.b16 %v2306, %v2298
    %v2579 = vpack.c.b16 %v2315, %v2307
    %v2580 = vpack.c.b16 %v2316, %v2308
    %v2581 = vpack.c.b16 %v2317, %v2309
    %v2582 = vpack.c.b16 %v2318, %v2310
    %v2583 = vpack.c.b16 %v2319, %v2311
    %v2584 = vpack.c.b16 %v2320, %v2312
    %v2585 = vpack.c.b16 %v2321, %v2313
    %v2586 = vpack.c.b16 %v2322, %v2314
    %v2587 = vpack.c.b16 %v2331, %v2323
    %v2588 = vpack.c.b16 %v2332, %v2324
    %v2589 = vpack.c.b16 %v2333, %v2325
    %v2590 = vpack.c.b16 %v2334, %v2326
    %v2591 = vpack.c.b16 %v2335, %v2327
    %v2592 = vpack.c.b16 %v2336, %v2328
    %v2593 = vpack.c.b16 %v2337, %v2329
    %v2594 = vpack.c.b16 %v2338, %v2330
    %2851 = vmatpush.bf16.msra.mxu0 %v2395
    %2852 = vmatpush.bf16.msra.mxu0 %v2387
    %2853 = vmatpush.bf16.msra.mxu0 %v2379
    %2854 = vmatpush.bf16.msra.mxu0 %v2371
    %2855 = vmatpush.bf16.msra.mxu0 %v2363
    %2856 = vmatpush.bf16.msra.mxu0 %v2355
    %2857 = vmatpush.bf16.msra.mxu0 %v2347
    %2858 = vmatpush.bf16.msra.mxu0 %v2339
    %2859 = vmatmul.bf16.gmra.mxu0 %v1283
    %v2860 = vpop.f32.mrf.mxu0
    %v2861 = vadd.f32 0.0, %v2860
    %v2862 = vpop.f32.mrf.mxu0
    %v2863 = vadd.f32 0.0, %v2862
    %2864 = vmatmul.bf16.gmra.mxu0 %v1287
    %v2865 = vpop.f32.mrf.mxu0
    %v2866 = vadd.f32 0.0, %v2865
    %v2867 = vpop.f32.mrf.mxu0
    %v2868 = vadd.f32 0.0, %v2867
    %2869 = vmatmul.bf16.gmra.mxu0 %v1291
    %v2870 = vpop.f32.mrf.mxu0
    %v2871 = vadd.f32 0.0, %v2870
    %v2872 = vpop.f32.mrf.mxu0
    %v2873 = vadd.f32 0.0, %v2872
    %2874 = vmatmul.bf16.gmra.mxu0 %v1295
    %v2875 = vpop.f32.mrf.mxu0
    %v2876 = vadd.f32 0.0, %v2875
    %v2877 = vpop.f32.mrf.mxu0
    %v2878 = vadd.f32 0.0, %v2877
    %2879 = vmatmul.bf16.gmra.mxu0 %v1299
    %v2880 = vpop.f32.mrf.mxu0
    %v2881 = vadd.f32 0.0, %v2880
    %v2882 = vpop.f32.mrf.mxu0
    %v2883 = vadd.f32 0.0, %v2882
    %2884 = vmatmul.bf16.gmra.mxu0 %v1303
    %v2885 = vpop.f32.mrf.mxu0
    %v2886 = vadd.f32 0.0, %v2885
    %v2887 = vpop.f32.mrf.mxu0
    %v2888 = vadd.f32 0.0, %v2887
    %2889 = vmatmul.bf16.gmra.mxu0 %v1307
    %v2890 = vpop.f32.mrf.mxu0
    %v2891 = vadd.f32 0.0, %v2890
    %v2892 = vpop.f32.mrf.mxu0
    %v2893 = vadd.f32 0.0, %v2892
    %2894 = vmatmul.bf16.gmra.mxu0 %v1311
    %v2895 = vpop.f32.mrf.mxu0
    %v2896 = vadd.f32 0.0, %v2895
    %v2897 = vpop.f32.mrf.mxu0
    %v2898 = vadd.f32 0.0, %v2897
    %2899 = vdwg.mxu0
    %2900 = vmatpush.bf16.msra.mxu0 %v2459
    %2901 = vmatpush.bf16.msra.mxu0 %v2451
    %2902 = vmatpush.bf16.msra.mxu0 %v2443
    %2903 = vmatpush.bf16.msra.mxu0 %v2435
    %2904 = vmatpush.bf16.msra.mxu0 %v2427
    %2905 = vmatpush.bf16.msra.mxu0 %v2419
    %2906 = vmatpush.bf16.msra.mxu0 %v2411
    %2907 = vmatpush.bf16.msra.mxu0 %v2403
    %2908 = vmatmul.bf16.gmra.mxu0 %v1284
    %v2909 = vpop.f32.mrf.mxu0
    %v2910 = vadd.f32 %v2861, %v2909
    %v2911 = vpop.f32.mrf.mxu0
    %v2912 = vadd.f32 %v2863, %v2911
    %2913 = vmatmul.bf16.gmra.mxu0 %v1288
    %v2914 = vpop.f32.mrf.mxu0
    %v2915 = vadd.f32 %v2866, %v2914
    %v2916 = vpop.f32.mrf.mxu0
    %v2917 = vadd.f32 %v2868, %v2916
    %2918 = vmatmul.bf16.gmra.mxu0 %v1292
    %v2919 = vpop.f32.mrf.mxu0
    %v2920 = vadd.f32 %v2871, %v2919
    %v2921 = vpop.f32.mrf.mxu0
    %v2922 = vadd.f32 %v2873, %v2921
    %2923 = vmatmul.bf16.gmra.mxu0 %v1296
    %v2924 = vpop.f32.mrf.mxu0
    %v2925 = vadd.f32 %v2876, %v2924
    %v2926 = vpop.f32.mrf.mxu0
    %v2927 = vadd.f32 %v2878, %v2926
    %2928 = vmatmul.bf16.gmra.mxu0 %v1300
    %v2929 = vpop.f32.mrf.mxu0
    %v2930 = vadd.f32 %v2881, %v2929
    %v2931 = vpop.f32.mrf.mxu0
    %v2932 = vadd.f32 %v2883, %v2931
    %2933 = vmatmul.bf16.gmra.mxu0 %v1304
    %v2934 = vpop.f32.mrf.mxu0
    %v2935 = vadd.f32 %v2886, %v2934
    %v2936 = vpop.f32.mrf.mxu0
    %v2937 = vadd.f32 %v2888, %v2936
    %2938 = vmatmul.bf16.gmra.mxu0 %v1308
    %v2939 = vpop.f32.mrf.mxu0
    %v2940 = vadd.f32 %v2891, %v2939
    %v2941 = vpop.f32.mrf.mxu0
    %v2942 = vadd.f32 %v2893, %v2941
    %2943 = vmatmul.bf16.gmra.mxu0 %v1312
    %v2944 = vpop.f32.mrf.mxu0
    %v2945 = vadd.f32 %v2896, %v2944
    %v2946 = vpop.f32.mrf.mxu0
    %v2947 = vadd.f32 %v2898, %v2946
    %2948 = vdwg.mxu0
    %2949 = vmatpush.bf16.msra.mxu0 %v2523
    %2950 = vmatpush.bf16.msra.mxu0 %v2515
    %2951 = vmatpush.bf16.msra.mxu0 %v2507
    %2952 = vmatpush.bf16.msra.mxu0 %v2499
    %2953 = vmatpush.bf16.msra.mxu0 %v2491
    %2954 = vmatpush.bf16.msra.mxu0 %v2483
    %2955 = vmatpush.bf16.msra.mxu0 %v2475
    %2956 = vmatpush.bf16.msra.mxu0 %v2467
    %2957 = vmatmul.bf16.gmra.mxu0 %v1285
    %v2958 = vpop.f32.mrf.mxu0
    %v2959 = vadd.f32 %v2910, %v2958
    %v2960 = vpop.f32.mrf.mxu0
    %v2961 = vadd.f32 %v2912, %v2960
    %2962 = vmatmul.bf16.gmra.mxu0 %v1289
    %v2963 = vpop.f32.mrf.mxu0
    %v2964 = vadd.f32 %v2915, %v2963
    %v2965 = vpop.f32.mrf.mxu0
    %v2966 = vadd.f32 %v2917, %v2965
    %2967 = vmatmul.bf16.gmra.mxu0 %v1293
    %v2968 = vpop.f32.mrf.mxu0
    %v2969 = vadd.f32 %v2920, %v2968
    %v2970 = vpop.f32.mrf.mxu0
    %v2971 = vadd.f32 %v2922, %v2970
    %2972 = vmatmul.bf16.gmra.mxu0 %v1297
    %v2973 = vpop.f32.mrf.mxu0
    %v2974 = vadd.f32 %v2925, %v2973
    %v2975 = vpop.f32.mrf.mxu0
    %v2976 = vadd.f32 %v2927, %v2975
    %2977 = vmatmul.bf16.gmra.mxu0 %v1301
    %v2978 = vpop.f32.mrf.mxu0
    %v2979 = vadd.f32 %v2930, %v2978
    %v2980 = vpop.f32.mrf.mxu0
    %v2981 = vadd.f32 %v2932, %v2980
    %2982 = vmatmul.bf16.gmra.mxu0 %v1305
    %v2983 = vpop.f32.mrf.mxu0
    %v2984 = vadd.f32 %v2935, %v2983
    %v2985 = vpop.f32.mrf.mxu0
    %v2986 = vadd.f32 %v2937, %v2985
    %2987 = vmatmul.bf16.gmra.mxu0 %v1309
    %v2988 = vpop.f32.mrf.mxu0
    %v2989 = vadd.f32 %v2940, %v2988
    %v2990 = vpop.f32.mrf.mxu0
    %v2991 = vadd.f32 %v2942, %v2990
    %2992 = vmatmul.bf16.gmra.mxu0 %v1313
    %v2993 = vpop.f32.mrf.mxu0
    %v2994 = vadd.f32 %v2945, %v2993
    %v2995 = vpop.f32.mrf.mxu0
    %v2996 = vadd.f32 %v2947, %v2995
    %2997 = vdwg.mxu0
    %2998 = vmatpush.bf16.msra.mxu0 %v2587
    %2999 = vmatpush.bf16.msra.mxu0 %v2579
    %3000 = vmatpush.bf16.msra.mxu0 %v2571
    %3001 = vmatpush.bf16.msra.mxu0 %v2563
    %3002 = vmatpush.bf16.msra.mxu0 %v2555
    %3003 = vmatpush.bf16.msra.mxu0 %v2547
    %3004 = vmatpush.bf16.msra.mxu0 %v2539
    %3005 = vmatpush.bf16.msra.mxu0 %v2531
    %3006 = vmatmul.bf16.gmra.mxu0 %v1286
    %v3007 = vpop.f32.mrf.mxu0
    %v3008 = vadd.f32 %v2959, %v3007
    %v3009 = vpop.f32.mrf.mxu0
    %v3010 = vadd.f32 %v2961, %v3009
    %3011 = vmatmul.bf16.gmra.mxu0 %v1290
    %v3012 = vpop.f32.mrf.mxu0
    %v3013 = vadd.f32 %v2964, %v3012
    %v3014 = vpop.f32.mrf.mxu0
    %v3015 = vadd.f32 %v2966, %v3014
    %3016 = vmatmul.bf16.gmra.mxu0 %v1294
    %v3017 = vpop.f32.mrf.mxu0
    %v3018 = vadd.f32 %v2969, %v3017
    %v3019 = vpop.f32.mrf.mxu0
    %v3020 = vadd.f32 %v2971, %v3019
    %3021 = vmatmul.bf16.gmra.mxu0 %v1298
    %v3022 = vpop.f32.mrf.mxu0
    %v3023 = vadd.f32 %v2974, %v3022
    %v3024 = vpop.f32.mrf.mxu0
    %v3025 = vadd.f32 %v2976, %v3024
    %3026 = vmatmul.bf16.gmra.mxu0 %v1302
    %v3027 = vpop.f32.mrf.mxu0
    %v3028 = vadd.f32 %v2979, %v3027
    %v3029 = vpop.f32.mrf.mxu0
    %v3030 = vadd.f32 %v2981, %v3029
    %3031 = vmatmul.bf16.gmra.mxu0 %v1306
    %v3032 = vpop.f32.mrf.mxu0
    %v3033 = vadd.f32 %v2984, %v3032
    %v3034 = vpop.f32.mrf.mxu0
    %v3035 = vadd.f32 %v2986, %v3034
    %3036 = vmatmul.bf16.gmra.mxu0 %v1310
    %v3037 = vpop.f32.mrf.mxu0
    %v3038 = vadd.f32 %v2989, %v3037
    %v3039 = vpop.f32.mrf.mxu0
    %v3040 = vadd.f32 %v2991, %v3039
    %3041 = vmatmul.bf16.gmra.mxu0 %v1314
    %v3042 = vpop.f32.mrf.mxu0
    %v3043 = vadd.f32 %v2994, %v3042
    %v3044 = vpop.f32.mrf.mxu0
    %v3045 = vadd.f32 %v2996, %v3044
    %3046 = vdwg.mxu0
    %3047 = vmatpush.bf16.msra.mxu0 %v2396
    %3048 = vmatpush.bf16.msra.mxu0 %v2388
    %3049 = vmatpush.bf16.msra.mxu0 %v2380
    %3050 = vmatpush.bf16.msra.mxu0 %v2372
    %3051 = vmatpush.bf16.msra.mxu0 %v2364
    %3052 = vmatpush.bf16.msra.mxu0 %v2356
    %3053 = vmatpush.bf16.msra.mxu0 %v2348
    %3054 = vmatpush.bf16.msra.mxu0 %v2340
    %3055 = vmatmul.bf16.gmra.mxu0 %v1283
    %v3056 = vpop.f32.mrf.mxu0
    %v3057 = vadd.f32 0.0, %v3056
    %v3058 = vpop.f32.mrf.mxu0
    %v3059 = vadd.f32 0.0, %v3058
    %3060 = vmatmul.bf16.gmra.mxu0 %v1287
    %v3061 = vpop.f32.mrf.mxu0
    %v3062 = vadd.f32 0.0, %v3061
    %v3063 = vpop.f32.mrf.mxu0
    %v3064 = vadd.f32 0.0, %v3063
    %3065 = vmatmul.bf16.gmra.mxu0 %v1291
    %v3066 = vpop.f32.mrf.mxu0
    %v3067 = vadd.f32 0.0, %v3066
    %v3068 = vpop.f32.mrf.mxu0
    %v3069 = vadd.f32 0.0, %v3068
    %3070 = vmatmul.bf16.gmra.mxu0 %v1295
    %v3071 = vpop.f32.mrf.mxu0
    %v3072 = vadd.f32 0.0, %v3071
    %v3073 = vpop.f32.mrf.mxu0
    %v3074 = vadd.f32 0.0, %v3073
    %3075 = vmatmul.bf16.gmra.mxu0 %v1299
    %v3076 = vpop.f32.mrf.mxu0
    %v3077 = vadd.f32 0.0, %v3076
    %v3078 = vpop.f32.mrf.mxu0
    %v3079 = vadd.f32 0.0, %v3078
    %3080 = vmatmul.bf16.gmra.mxu0 %v1303
    %v3081 = vpop.f32.mrf.mxu0
    %v3082 = vadd.f32 0.0, %v3081
    %v3083 = vpop.f32.mrf.mxu0
    %v3084 = vadd.f32 0.0, %v3083
    %3085 = vmatmul.bf16.gmra.mxu0 %v1307
    %v3086 = vpop.f32.mrf.mxu0
    %v3087 = vadd.f32 0.0, %v3086
    %v3088 = vpop.f32.mrf.mxu0
    %v3089 = vadd.f32 0.0, %v3088
    %3090 = vmatmul.bf16.gmra.mxu0 %v1311
    %v3091 = vpop.f32.mrf.mxu0
    %v3092 = vadd.f32 0.0, %v3091
    %v3093 = vpop.f32.mrf.mxu0
    %v3094 = vadd.f32 0.0, %v3093
    %3095 = vdwg.mxu0
    %3096 = vmatpush.bf16.msra.mxu0 %v2460
    %3097 = vmatpush.bf16.msra.mxu0 %v2452
    %3098 = vmatpush.bf16.msra.mxu0 %v2444
    %3099 = vmatpush.bf16.msra.mxu0 %v2436
    %3100 = vmatpush.bf16.msra.mxu0 %v2428
    %3101 = vmatpush.bf16.msra.mxu0 %v2420
    %3102 = vmatpush.bf16.msra.mxu0 %v2412
    %3103 = vmatpush.bf16.msra.mxu0 %v2404
    %3104 = vmatmul.bf16.gmra.mxu0 %v1284
    %v3105 = vpop.f32.mrf.mxu0
    %v3106 = vadd.f32 %v3057, %v3105
    %v3107 = vpop.f32.mrf.mxu0
    %v3108 = vadd.f32 %v3059, %v3107
    %3109 = vmatmul.bf16.gmra.mxu0 %v1288
    %v3110 = vpop.f32.mrf.mxu0
    %v3111 = vadd.f32 %v3062, %v3110
    %v3112 = vpop.f32.mrf.mxu0
    %v3113 = vadd.f32 %v3064, %v3112
    %3114 = vmatmul.bf16.gmra.mxu0 %v1292
    %v3115 = vpop.f32.mrf.mxu0
    %v3116 = vadd.f32 %v3067, %v3115
    %v3117 = vpop.f32.mrf.mxu0
    %v3118 = vadd.f32 %v3069, %v3117
    %3119 = vmatmul.bf16.gmra.mxu0 %v1296
    %v3120 = vpop.f32.mrf.mxu0
    %v3121 = vadd.f32 %v3072, %v3120
    %v3122 = vpop.f32.mrf.mxu0
    %v3123 = vadd.f32 %v3074, %v3122
    %3124 = vmatmul.bf16.gmra.mxu0 %v1300
    %v3125 = vpop.f32.mrf.mxu0
    %v3126 = vadd.f32 %v3077, %v3125
    %v3127 = vpop.f32.mrf.mxu0
    %v3128 = vadd.f32 %v3079, %v3127
    %3129 = vmatmul.bf16.gmra.mxu0 %v1304
    %v3130 = vpop.f32.mrf.mxu0
    %v3131 = vadd.f32 %v3082, %v3130
    %v3132 = vpop.f32.mrf.mxu0
    %v3133 = vadd.f32 %v3084, %v3132
    %3134 = vmatmul.bf16.gmra.mxu0 %v1308
    %v3135 = vpop.f32.mrf.mxu0
    %v3136 = vadd.f32 %v3087, %v3135
    %v3137 = vpop.f32.mrf.mxu0
    %v3138 = vadd.f32 %v3089, %v3137
    %3139 = vmatmul.bf16.gmra.mxu0 %v1312
    %v3140 = vpop.f32.mrf.mxu0
    %v3141 = vadd.f32 %v3092, %v3140
    %v3142 = vpop.f32.mrf.mxu0
    %v3143 = vadd.f32 %v3094, %v3142
    %3144 = vdwg.mxu0
    %3145 = vmatpush.bf16.msra.mxu0 %v2524
    %3146 = vmatpush.bf16.msra.mxu0 %v2516
    %3147 = vmatpush.bf16.msra.mxu0 %v2508
    %3148 = vmatpush.bf16.msra.mxu0 %v2500
    %3149 = vmatpush.bf16.msra.mxu0 %v2492
    %3150 = vmatpush.bf16.msra.mxu0 %v2484
    %3151 = vmatpush.bf16.msra.mxu0 %v2476
    %3152 = vmatpush.bf16.msra.mxu0 %v2468
    %3153 = vmatmul.bf16.gmra.mxu0 %v1285
    %v3154 = vpop.f32.mrf.mxu0
    %v3155 = vadd.f32 %v3106, %v3154
    %v3156 = vpop.f32.mrf.mxu0
    %v3157 = vadd.f32 %v3108, %v3156
    %3158 = vmatmul.bf16.gmra.mxu0 %v1289
    %v3159 = vpop.f32.mrf.mxu0
    %v3160 = vadd.f32 %v3111, %v3159
    %v3161 = vpop.f32.mrf.mxu0
    %v3162 = vadd.f32 %v3113, %v3161
    %3163 = vmatmul.bf16.gmra.mxu0 %v1293
    %v3164 = vpop.f32.mrf.mxu0
    %v3165 = vadd.f32 %v3116, %v3164
    %v3166 = vpop.f32.mrf.mxu0
    %v3167 = vadd.f32 %v3118, %v3166
    %3168 = vmatmul.bf16.gmra.mxu0 %v1297
    %v3169 = vpop.f32.mrf.mxu0
    %v3170 = vadd.f32 %v3121, %v3169
    %v3171 = vpop.f32.mrf.mxu0
    %v3172 = vadd.f32 %v3123, %v3171
    %3173 = vmatmul.bf16.gmra.mxu0 %v1301
    %v3174 = vpop.f32.mrf.mxu0
    %v3175 = vadd.f32 %v3126, %v3174
    %v3176 = vpop.f32.mrf.mxu0
    %v3177 = vadd.f32 %v3128, %v3176
    %3178 = vmatmul.bf16.gmra.mxu0 %v1305
    %v3179 = vpop.f32.mrf.mxu0
    %v3180 = vadd.f32 %v3131, %v3179
    %v3181 = vpop.f32.mrf.mxu0
    %v3182 = vadd.f32 %v3133, %v3181
    %3183 = vmatmul.bf16.gmra.mxu0 %v1309
    %v3184 = vpop.f32.mrf.mxu0
    %v3185 = vadd.f32 %v3136, %v3184
    %v3186 = vpop.f32.mrf.mxu0
    %v3187 = vadd.f32 %v3138, %v3186
    %3188 = vmatmul.bf16.gmra.mxu0 %v1313
    %v3189 = vpop.f32.mrf.mxu0
    %v3190 = vadd.f32 %v3141, %v3189
    %v3191 = vpop.f32.mrf.mxu0
    %v3192 = vadd.f32 %v3143, %v3191
    %3193 = vdwg.mxu0
    %3194 = vmatpush.bf16.msra.mxu0 %v2588
    %3195 = vmatpush.bf16.msra.mxu0 %v2580
    %3196 = vmatpush.bf16.msra.mxu0 %v2572
    %3197 = vmatpush.bf16.msra.mxu0 %v2564
    %3198 = vmatpush.bf16.msra.mxu0 %v2556
    %3199 = vmatpush.bf16.msra.mxu0 %v2548
    %3200 = vmatpush.bf16.msra.mxu0 %v2540
    %3201 = vmatpush.bf16.msra.mxu0 %v2532
    %3202 = vmatmul.bf16.gmra.mxu0 %v1286
    %v3203 = vpop.f32.mrf.mxu0
    %v3204 = vadd.f32 %v3155, %v3203
    %v3205 = vpop.f32.mrf.mxu0
    %v3206 = vadd.f32 %v3157, %v3205
    %3207 = vmatmul.bf16.gmra.mxu0 %v1290
    %v3208 = vpop.f32.mrf.mxu0
    %v3209 = vadd.f32 %v3160, %v3208
    %v3210 = vpop.f32.mrf.mxu0
    %v3211 = vadd.f32 %v3162, %v3210
    %3212 = vmatmul.bf16.gmra.mxu0 %v1294
    %v3213 = vpop.f32.mrf.mxu0
    %v3214 = vadd.f32 %v3165, %v3213
    %v3215 = vpop.f32.mrf.mxu0
    %v3216 = vadd.f32 %v3167, %v3215
    %3217 = vmatmul.bf16.gmra.mxu0 %v1298
    %v3218 = vpop.f32.mrf.mxu0
    %v3219 = vadd.f32 %v3170, %v3218
    %v3220 = vpop.f32.mrf.mxu0
    %v3221 = vadd.f32 %v3172, %v3220
    %3222 = vmatmul.bf16.gmra.mxu0 %v1302
    %v3223 = vpop.f32.mrf.mxu0
    %v3224 = vadd.f32 %v3175, %v3223
    %v3225 = vpop.f32.mrf.mxu0
    %v3226 = vadd.f32 %v3177, %v3225
    %3227 = vmatmul.bf16.gmra.mxu0 %v1306
    %v3228 = vpop.f32.mrf.mxu0
    %v3229 = vadd.f32 %v3180, %v3228
    %v3230 = vpop.f32.mrf.mxu0
    %v3231 = vadd.f32 %v3182, %v3230
    %3232 = vmatmul.bf16.gmra.mxu0 %v1310
    %v3233 = vpop.f32.mrf.mxu0
    %v3234 = vadd.f32 %v3185, %v3233
    %v3235 = vpop.f32.mrf.mxu0
    %v3236 = vadd.f32 %v3187, %v3235
    %3237 = vmatmul.bf16.gmra.mxu0 %v1314
    %v3238 = vpop.f32.mrf.mxu0
    %v3239 = vadd.f32 %v3190, %v3238
    %v3240 = vpop.f32.mrf.mxu0
    %v3241 = vadd.f32 %v3192, %v3240
    %3242 = vdwg.mxu0
    %3243 = vmatpush.bf16.msra.mxu0 %v2397
    %3244 = vmatpush.bf16.msra.mxu0 %v2389
    %3245 = vmatpush.bf16.msra.mxu0 %v2381
    %3246 = vmatpush.bf16.msra.mxu0 %v2373
    %3247 = vmatpush.bf16.msra.mxu0 %v2365
    %3248 = vmatpush.bf16.msra.mxu0 %v2357
    %3249 = vmatpush.bf16.msra.mxu0 %v2349
    %3250 = vmatpush.bf16.msra.mxu0 %v2341
    %3251 = vmatmul.bf16.gmra.mxu0 %v1283
    %v3252 = vpop.f32.mrf.mxu0
    %v3253 = vadd.f32 0.0, %v3252
    %v3254 = vpop.f32.mrf.mxu0
    %v3255 = vadd.f32 0.0, %v3254
    %3256 = vmatmul.bf16.gmra.mxu0 %v1287
    %v3257 = vpop.f32.mrf.mxu0
    %v3258 = vadd.f32 0.0, %v3257
    %v3259 = vpop.f32.mrf.mxu0
    %v3260 = vadd.f32 0.0, %v3259
    %3261 = vmatmul.bf16.gmra.mxu0 %v1291
    %v3262 = vpop.f32.mrf.mxu0
    %v3263 = vadd.f32 0.0, %v3262
    %v3264 = vpop.f32.mrf.mxu0
    %v3265 = vadd.f32 0.0, %v3264
    %3266 = vmatmul.bf16.gmra.mxu0 %v1295
    %v3267 = vpop.f32.mrf.mxu0
    %v3268 = vadd.f32 0.0, %v3267
    %v3269 = vpop.f32.mrf.mxu0
    %v3270 = vadd.f32 0.0, %v3269
    %3271 = vmatmul.bf16.gmra.mxu0 %v1299
    %v3272 = vpop.f32.mrf.mxu0
    %v3273 = vadd.f32 0.0, %v3272
    %v3274 = vpop.f32.mrf.mxu0
    %v3275 = vadd.f32 0.0, %v3274
    %3276 = vmatmul.bf16.gmra.mxu0 %v1303
    %v3277 = vpop.f32.mrf.mxu0
    %v3278 = vadd.f32 0.0, %v3277
    %v3279 = vpop.f32.mrf.mxu0
    %v3280 = vadd.f32 0.0, %v3279
    %3281 = vmatmul.bf16.gmra.mxu0 %v1307
    %v3282 = vpop.f32.mrf.mxu0
    %v3283 = vadd.f32 0.0, %v3282
    %v3284 = vpop.f32.mrf.mxu0
    %v3285 = vadd.f32 0.0, %v3284
    %3286 = vmatmul.bf16.gmra.mxu0 %v1311
    %v3287 = vpop.f32.mrf.mxu0
    %v3288 = vadd.f32 0.0, %v3287
    %v3289 = vpop.f32.mrf.mxu0
    %v3290 = vadd.f32 0.0, %v3289
    %3291 = vdwg.mxu0
    %3292 = vmatpush.bf16.msra.mxu0 %v2461
    %3293 = vmatpush.bf16.msra.mxu0 %v2453
    %3294 = vmatpush.bf16.msra.mxu0 %v2445
    %3295 = vmatpush.bf16.msra.mxu0 %v2437
    %3296 = vmatpush.bf16.msra.mxu0 %v2429
    %3297 = vmatpush.bf16.msra.mxu0 %v2421
    %3298 = vmatpush.bf16.msra.mxu0 %v2413
    %3299 = vmatpush.bf16.msra.mxu0 %v2405
    %3300 = vmatmul.bf16.gmra.mxu0 %v1284
    %v3301 = vpop.f32.mrf.mxu0
    %v3302 = vadd.f32 %v3253, %v3301
    %v3303 = vpop.f32.mrf.mxu0
    %v3304 = vadd.f32 %v3255, %v3303
    %3305 = vmatmul.bf16.gmra.mxu0 %v1288
    %v3306 = vpop.f32.mrf.mxu0
    %v3307 = vadd.f32 %v3258, %v3306
    %v3308 = vpop.f32.mrf.mxu0
    %v3309 = vadd.f32 %v3260, %v3308
    %3310 = vmatmul.bf16.gmra.mxu0 %v1292
    %v3311 = vpop.f32.mrf.mxu0
    %v3312 = vadd.f32 %v3263, %v3311
    %v3313 = vpop.f32.mrf.mxu0
    %v3314 = vadd.f32 %v3265, %v3313
    %3315 = vmatmul.bf16.gmra.mxu0 %v1296
    %v3316 = vpop.f32.mrf.mxu0
    %v3317 = vadd.f32 %v3268, %v3316
    %v3318 = vpop.f32.mrf.mxu0
    %v3319 = vadd.f32 %v3270, %v3318
    %3320 = vmatmul.bf16.gmra.mxu0 %v1300
    %v3321 = vpop.f32.mrf.mxu0
    %v3322 = vadd.f32 %v3273, %v3321
    %v3323 = vpop.f32.mrf.mxu0
    %v3324 = vadd.f32 %v3275, %v3323
    %3325 = vmatmul.bf16.gmra.mxu0 %v1304
    %v3326 = vpop.f32.mrf.mxu0
    %v3327 = vadd.f32 %v3278, %v3326
    %v3328 = vpop.f32.mrf.mxu0
    %v3329 = vadd.f32 %v3280, %v3328
    %3330 = vmatmul.bf16.gmra.mxu0 %v1308
    %v3331 = vpop.f32.mrf.mxu0
    %v3332 = vadd.f32 %v3283, %v3331
    %v3333 = vpop.f32.mrf.mxu0
    %v3334 = vadd.f32 %v3285, %v3333
    %3335 = vmatmul.bf16.gmra.mxu0 %v1312
    %v3336 = vpop.f32.mrf.mxu0
    %v3337 = vadd.f32 %v3288, %v3336
    %v3338 = vpop.f32.mrf.mxu0
    %v3339 = vadd.f32 %v3290, %v3338
    %3340 = vdwg.mxu0
    %3341 = vmatpush.bf16.msra.mxu0 %v2525
    %3342 = vmatpush.bf16.msra.mxu0 %v2517
    %3343 = vmatpush.bf16.msra.mxu0 %v2509
    %3344 = vmatpush.bf16.msra.mxu0 %v2501
    %3345 = vmatpush.bf16.msra.mxu0 %v2493
    %3346 = vmatpush.bf16.msra.mxu0 %v2485
    %3347 = vmatpush.bf16.msra.mxu0 %v2477
    %3348 = vmatpush.bf16.msra.mxu0 %v2469
    %3349 = vmatmul.bf16.gmra.mxu0 %v1285
    %v3350 = vpop.f32.mrf.mxu0
    %v3351 = vadd.f32 %v3302, %v3350
    %v3352 = vpop.f32.mrf.mxu0
    %v3353 = vadd.f32 %v3304, %v3352
    %3354 = vmatmul.bf16.gmra.mxu0 %v1289
    %v3355 = vpop.f32.mrf.mxu0
    %v3356 = vadd.f32 %v3307, %v3355
    %v3357 = vpop.f32.mrf.mxu0
    %v3358 = vadd.f32 %v3309, %v3357
    %3359 = vmatmul.bf16.gmra.mxu0 %v1293
    %v3360 = vpop.f32.mrf.mxu0
    %v3361 = vadd.f32 %v3312, %v3360
    %v3362 = vpop.f32.mrf.mxu0
    %v3363 = vadd.f32 %v3314, %v3362
    %3364 = vmatmul.bf16.gmra.mxu0 %v1297
    %v3365 = vpop.f32.mrf.mxu0
    %v3366 = vadd.f32 %v3317, %v3365
    %v3367 = vpop.f32.mrf.mxu0
    %v3368 = vadd.f32 %v3319, %v3367
    %3369 = vmatmul.bf16.gmra.mxu0 %v1301
    %v3370 = vpop.f32.mrf.mxu0
    %v3371 = vadd.f32 %v3322, %v3370
    %v3372 = vpop.f32.mrf.mxu0
    %v3373 = vadd.f32 %v3324, %v3372
    %3374 = vmatmul.bf16.gmra.mxu0 %v1305
    %v3375 = vpop.f32.mrf.mxu0
    %v3376 = vadd.f32 %v3327, %v3375
    %v3377 = vpop.f32.mrf.mxu0
    %v3378 = vadd.f32 %v3329, %v3377
    %3379 = vmatmul.bf16.gmra.mxu0 %v1309
    %v3380 = vpop.f32.mrf.mxu0
    %v3381 = vadd.f32 %v3332, %v3380
    %v3382 = vpop.f32.mrf.mxu0
    %v3383 = vadd.f32 %v3334, %v3382
    %3384 = vmatmul.bf16.gmra.mxu0 %v1313
    %v3385 = vpop.f32.mrf.mxu0
    %v3386 = vadd.f32 %v3337, %v3385
    %v3387 = vpop.f32.mrf.mxu0
    %v3388 = vadd.f32 %v3339, %v3387
    %3389 = vdwg.mxu0
    %3390 = vmatpush.bf16.msra.mxu0 %v2589
    %3391 = vmatpush.bf16.msra.mxu0 %v2581
    %3392 = vmatpush.bf16.msra.mxu0 %v2573
    %3393 = vmatpush.bf16.msra.mxu0 %v2565
    %3394 = vmatpush.bf16.msra.mxu0 %v2557
    %3395 = vmatpush.bf16.msra.mxu0 %v2549
    %3396 = vmatpush.bf16.msra.mxu0 %v2541
    %3397 = vmatpush.bf16.msra.mxu0 %v2533
    %3398 = vmatmul.bf16.gmra.mxu0 %v1286
    %v3399 = vpop.f32.mrf.mxu0
    %v3400 = vadd.f32 %v3351, %v3399
    %v3401 = vpop.f32.mrf.mxu0
    %v3402 = vadd.f32 %v3353, %v3401
    %3403 = vmatmul.bf16.gmra.mxu0 %v1290
    %v3404 = vpop.f32.mrf.mxu0
    %v3405 = vadd.f32 %v3356, %v3404
    %v3406 = vpop.f32.mrf.mxu0
    %v3407 = vadd.f32 %v3358, %v3406
    %3408 = vmatmul.bf16.gmra.mxu0 %v1294
    %v3409 = vpop.f32.mrf.mxu0
    %v3410 = vadd.f32 %v3361, %v3409
    %v3411 = vpop.f32.mrf.mxu0
    %v3412 = vadd.f32 %v3363, %v3411
    %3413 = vmatmul.bf16.gmra.mxu0 %v1298
    %v3414 = vpop.f32.mrf.mxu0
    %v3415 = vadd.f32 %v3366, %v3414
    %v3416 = vpop.f32.mrf.mxu0
    %v3417 = vadd.f32 %v3368, %v3416
    %3418 = vmatmul.bf16.gmra.mxu0 %v1302
    %v3419 = vpop.f32.mrf.mxu0
    %v3420 = vadd.f32 %v3371, %v3419
    %v3421 = vpop.f32.mrf.mxu0
    %v3422 = vadd.f32 %v3373, %v3421
    %3423 = vmatmul.bf16.gmra.mxu0 %v1306
    %v3424 = vpop.f32.mrf.mxu0
    %v3425 = vadd.f32 %v3376, %v3424
    %v3426 = vpop.f32.mrf.mxu0
    %v3427 = vadd.f32 %v3378, %v3426
    %3428 = vmatmul.bf16.gmra.mxu0 %v1310
    %v3429 = vpop.f32.mrf.mxu0
    %v3430 = vadd.f32 %v3381, %v3429
    %v3431 = vpop.f32.mrf.mxu0
    %v3432 = vadd.f32 %v3383, %v3431
    %3433 = vmatmul.bf16.gmra.mxu0 %v1314
    %v3434 = vpop.f32.mrf.mxu0
    %v3435 = vadd.f32 %v3386, %v3434
    %v3436 = vpop.f32.mrf.mxu0
    %v3437 = vadd.f32 %v3388, %v3436
    %3438 = vdwg.mxu0
    %3439 = vmatpush.bf16.msra.mxu0 %v2398
    %3440 = vmatpush.bf16.msra.mxu0 %v2390
    %3441 = vmatpush.bf16.msra.mxu0 %v2382
    %3442 = vmatpush.bf16.msra.mxu0 %v2374
    %3443 = vmatpush.bf16.msra.mxu0 %v2366
    %3444 = vmatpush.bf16.msra.mxu0 %v2358
    %3445 = vmatpush.bf16.msra.mxu0 %v2350
    %3446 = vmatpush.bf16.msra.mxu0 %v2342
    %3447 = vmatmul.bf16.gmra.mxu0 %v1283
    %v3448 = vpop.f32.mrf.mxu0
    %v3449 = vadd.f32 0.0, %v3448
    %v3450 = vpop.f32.mrf.mxu0
    %v3451 = vadd.f32 0.0, %v3450
    %3452 = vmatmul.bf16.gmra.mxu0 %v1287
    %v3453 = vpop.f32.mrf.mxu0
    %v3454 = vadd.f32 0.0, %v3453
    %v3455 = vpop.f32.mrf.mxu0
    %v3456 = vadd.f32 0.0, %v3455
    %3457 = vmatmul.bf16.gmra.mxu0 %v1291
    %v3458 = vpop.f32.mrf.mxu0
    %v3459 = vadd.f32 0.0, %v3458
    %v3460 = vpop.f32.mrf.mxu0
    %v3461 = vadd.f32 0.0, %v3460
    %3462 = vmatmul.bf16.gmra.mxu0 %v1295
    %v3463 = vpop.f32.mrf.mxu0
    %v3464 = vadd.f32 0.0, %v3463
    %v3465 = vpop.f32.mrf.mxu0
    %v3466 = vadd.f32 0.0, %v3465
    %3467 = vmatmul.bf16.gmra.mxu0 %v1299
    %v3468 = vpop.f32.mrf.mxu0
    %v3469 = vadd.f32 0.0, %v3468
    %v3470 = vpop.f32.mrf.mxu0
    %v3471 = vadd.f32 0.0, %v3470
    %3472 = vmatmul.bf16.gmra.mxu0 %v1303
    %v3473 = vpop.f32.mrf.mxu0
    %v3474 = vadd.f32 0.0, %v3473
    %v3475 = vpop.f32.mrf.mxu0
    %v3476 = vadd.f32 0.0, %v3475
    %3477 = vmatmul.bf16.gmra.mxu0 %v1307
    %v3478 = vpop.f32.mrf.mxu0
    %v3479 = vadd.f32 0.0, %v3478
    %v3480 = vpop.f32.mrf.mxu0
    %v3481 = vadd.f32 0.0, %v3480
    %3482 = vmatmul.bf16.gmra.mxu0 %v1311
    %v3483 = vpop.f32.mrf.mxu0
    %v3484 = vadd.f32 0.0, %v3483
    %v3485 = vpop.f32.mrf.mxu0
    %v3486 = vadd.f32 0.0, %v3485
    %3487 = vdwg.mxu0
    %3488 = vmatpush.bf16.msra.mxu0 %v2462
    %3489 = vmatpush.bf16.msra.mxu0 %v2454
    %3490 = vmatpush.bf16.msra.mxu0 %v2446
    %3491 = vmatpush.bf16.msra.mxu0 %v2438
    %3492 = vmatpush.bf16.msra.mxu0 %v2430
    %3493 = vmatpush.bf16.msra.mxu0 %v2422
    %3494 = vmatpush.bf16.msra.mxu0 %v2414
    %3495 = vmatpush.bf16.msra.mxu0 %v2406
    %3496 = vmatmul.bf16.gmra.mxu0 %v1284
    %v3497 = vpop.f32.mrf.mxu0
    %v3498 = vadd.f32 %v3449, %v3497
    %v3499 = vpop.f32.mrf.mxu0
    %v3500 = vadd.f32 %v3451, %v3499
    %3501 = vmatmul.bf16.gmra.mxu0 %v1288
    %v3502 = vpop.f32.mrf.mxu0
    %v3503 = vadd.f32 %v3454, %v3502
    %v3504 = vpop.f32.mrf.mxu0
    %v3505 = vadd.f32 %v3456, %v3504
    %3506 = vmatmul.bf16.gmra.mxu0 %v1292
    %v3507 = vpop.f32.mrf.mxu0
    %v3508 = vadd.f32 %v3459, %v3507
    %v3509 = vpop.f32.mrf.mxu0
    %v3510 = vadd.f32 %v3461, %v3509
    %3511 = vmatmul.bf16.gmra.mxu0 %v1296
    %v3512 = vpop.f32.mrf.mxu0
    %v3513 = vadd.f32 %v3464, %v3512
    %v3514 = vpop.f32.mrf.mxu0
    %v3515 = vadd.f32 %v3466, %v3514
    %3516 = vmatmul.bf16.gmra.mxu0 %v1300
    %v3517 = vpop.f32.mrf.mxu0
    %v3518 = vadd.f32 %v3469, %v3517
    %v3519 = vpop.f32.mrf.mxu0
    %v3520 = vadd.f32 %v3471, %v3519
    %3521 = vmatmul.bf16.gmra.mxu0 %v1304
    %v3522 = vpop.f32.mrf.mxu0
    %v3523 = vadd.f32 %v3474, %v3522
    %v3524 = vpop.f32.mrf.mxu0
    %v3525 = vadd.f32 %v3476, %v3524
    %3526 = vmatmul.bf16.gmra.mxu0 %v1308
    %v3527 = vpop.f32.mrf.mxu0
    %v3528 = vadd.f32 %v3479, %v3527
    %v3529 = vpop.f32.mrf.mxu0
    %v3530 = vadd.f32 %v3481, %v3529
    %3531 = vmatmul.bf16.gmra.mxu0 %v1312
    %v3532 = vpop.f32.mrf.mxu0
    %v3533 = vadd.f32 %v3484, %v3532
    %v3534 = vpop.f32.mrf.mxu0
    %v3535 = vadd.f32 %v3486, %v3534
    %3536 = vdwg.mxu0
    %3537 = vmatpush.bf16.msra.mxu0 %v2526
    %3538 = vmatpush.bf16.msra.mxu0 %v2518
    %3539 = vmatpush.bf16.msra.mxu0 %v2510
    %3540 = vmatpush.bf16.msra.mxu0 %v2502
    %3541 = vmatpush.bf16.msra.mxu0 %v2494
    %3542 = vmatpush.bf16.msra.mxu0 %v2486
    %3543 = vmatpush.bf16.msra.mxu0 %v2478
    %3544 = vmatpush.bf16.msra.mxu0 %v2470
    %3545 = vmatmul.bf16.gmra.mxu0 %v1285
    %v3546 = vpop.f32.mrf.mxu0
    %v3547 = vadd.f32 %v3498, %v3546
    %v3548 = vpop.f32.mrf.mxu0
    %v3549 = vadd.f32 %v3500, %v3548
    %3550 = vmatmul.bf16.gmra.mxu0 %v1289
    %v3551 = vpop.f32.mrf.mxu0
    %v3552 = vadd.f32 %v3503, %v3551
    %v3553 = vpop.f32.mrf.mxu0
    %v3554 = vadd.f32 %v3505, %v3553
    %3555 = vmatmul.bf16.gmra.mxu0 %v1293
    %v3556 = vpop.f32.mrf.mxu0
    %v3557 = vadd.f32 %v3508, %v3556
    %v3558 = vpop.f32.mrf.mxu0
    %v3559 = vadd.f32 %v3510, %v3558
    %3560 = vmatmul.bf16.gmra.mxu0 %v1297
    %v3561 = vpop.f32.mrf.mxu0
    %v3562 = vadd.f32 %v3513, %v3561
    %v3563 = vpop.f32.mrf.mxu0
    %v3564 = vadd.f32 %v3515, %v3563
    %3565 = vmatmul.bf16.gmra.mxu0 %v1301
    %v3566 = vpop.f32.mrf.mxu0
    %v3567 = vadd.f32 %v3518, %v3566
    %v3568 = vpop.f32.mrf.mxu0
    %v3569 = vadd.f32 %v3520, %v3568
    %3570 = vmatmul.bf16.gmra.mxu0 %v1305
    %v3571 = vpop.f32.mrf.mxu0
    %v3572 = vadd.f32 %v3523, %v3571
    %v3573 = vpop.f32.mrf.mxu0
    %v3574 = vadd.f32 %v3525, %v3573
    %3575 = vmatmul.bf16.gmra.mxu0 %v1309
    %v3576 = vpop.f32.mrf.mxu0
    %v3577 = vadd.f32 %v3528, %v3576
    %v3578 = vpop.f32.mrf.mxu0
    %v3579 = vadd.f32 %v3530, %v3578
    %3580 = vmatmul.bf16.gmra.mxu0 %v1313
    %v3581 = vpop.f32.mrf.mxu0
    %v3582 = vadd.f32 %v3533, %v3581
    %v3583 = vpop.f32.mrf.mxu0
    %v3584 = vadd.f32 %v3535, %v3583
    %3585 = vdwg.mxu0
    %3586 = vmatpush.bf16.msra.mxu0 %v2590
    %3587 = vmatpush.bf16.msra.mxu0 %v2582
    %3588 = vmatpush.bf16.msra.mxu0 %v2574
    %3589 = vmatpush.bf16.msra.mxu0 %v2566
    %3590 = vmatpush.bf16.msra.mxu0 %v2558
    %3591 = vmatpush.bf16.msra.mxu0 %v2550
    %3592 = vmatpush.bf16.msra.mxu0 %v2542
    %3593 = vmatpush.bf16.msra.mxu0 %v2534
    %3594 = vmatmul.bf16.gmra.mxu0 %v1286
    %v3595 = vpop.f32.mrf.mxu0
    %v3596 = vadd.f32 %v3547, %v3595
    %v3597 = vpop.f32.mrf.mxu0
    %v3598 = vadd.f32 %v3549, %v3597
    %3599 = vmatmul.bf16.gmra.mxu0 %v1290
    %v3600 = vpop.f32.mrf.mxu0
    %v3601 = vadd.f32 %v3552, %v3600
    %v3602 = vpop.f32.mrf.mxu0
    %v3603 = vadd.f32 %v3554, %v3602
    %3604 = vmatmul.bf16.gmra.mxu0 %v1294
    %v3605 = vpop.f32.mrf.mxu0
    %v3606 = vadd.f32 %v3557, %v3605
    %v3607 = vpop.f32.mrf.mxu0
    %v3608 = vadd.f32 %v3559, %v3607
    %3609 = vmatmul.bf16.gmra.mxu0 %v1298
    %v3610 = vpop.f32.mrf.mxu0
    %v3611 = vadd.f32 %v3562, %v3610
    %v3612 = vpop.f32.mrf.mxu0
    %v3613 = vadd.f32 %v3564, %v3612
    %3614 = vmatmul.bf16.gmra.mxu0 %v1302
    %v3615 = vpop.f32.mrf.mxu0
    %v3616 = vadd.f32 %v3567, %v3615
    %v3617 = vpop.f32.mrf.mxu0
    %v3618 = vadd.f32 %v3569, %v3617
    %3619 = vmatmul.bf16.gmra.mxu0 %v1306
    %v3620 = vpop.f32.mrf.mxu0
    %v3621 = vadd.f32 %v3572, %v3620
    %v3622 = vpop.f32.mrf.mxu0
    %v3623 = vadd.f32 %v3574, %v3622
    %3624 = vmatmul.bf16.gmra.mxu0 %v1310
    %v3625 = vpop.f32.mrf.mxu0
    %v3626 = vadd.f32 %v3577, %v3625
    %v3627 = vpop.f32.mrf.mxu0
    %v3628 = vadd.f32 %v3579, %v3627
    %3629 = vmatmul.bf16.gmra.mxu0 %v1314
    %v3630 = vpop.f32.mrf.mxu0
    %v3631 = vadd.f32 %v3582, %v3630
    %v3632 = vpop.f32.mrf.mxu0
    %v3633 = vadd.f32 %v3584, %v3632
    %3634 = vdwg.mxu0
    %3635 = vmatpush.bf16.msra.mxu0 %v2399
    %3636 = vmatpush.bf16.msra.mxu0 %v2391
    %3637 = vmatpush.bf16.msra.mxu0 %v2383
    %3638 = vmatpush.bf16.msra.mxu0 %v2375
    %3639 = vmatpush.bf16.msra.mxu0 %v2367
    %3640 = vmatpush.bf16.msra.mxu0 %v2359
    %3641 = vmatpush.bf16.msra.mxu0 %v2351
    %3642 = vmatpush.bf16.msra.mxu0 %v2343
    %3643 = vmatmul.bf16.gmra.mxu0 %v1283
    %v3644 = vpop.f32.mrf.mxu0
    %v3645 = vadd.f32 0.0, %v3644
    %v3646 = vpop.f32.mrf.mxu0
    %v3647 = vadd.f32 0.0, %v3646
    %3648 = vmatmul.bf16.gmra.mxu0 %v1287
    %v3649 = vpop.f32.mrf.mxu0
    %v3650 = vadd.f32 0.0, %v3649
    %v3651 = vpop.f32.mrf.mxu0
    %v3652 = vadd.f32 0.0, %v3651
    %3653 = vmatmul.bf16.gmra.mxu0 %v1291
    %v3654 = vpop.f32.mrf.mxu0
    %v3655 = vadd.f32 0.0, %v3654
    %v3656 = vpop.f32.mrf.mxu0
    %v3657 = vadd.f32 0.0, %v3656
    %3658 = vmatmul.bf16.gmra.mxu0 %v1295
    %v3659 = vpop.f32.mrf.mxu0
    %v3660 = vadd.f32 0.0, %v3659
    %v3661 = vpop.f32.mrf.mxu0
    %v3662 = vadd.f32 0.0, %v3661
    %3663 = vmatmul.bf16.gmra.mxu0 %v1299
    %v3664 = vpop.f32.mrf.mxu0
    %v3665 = vadd.f32 0.0, %v3664
    %v3666 = vpop.f32.mrf.mxu0
    %v3667 = vadd.f32 0.0, %v3666
    %3668 = vmatmul.bf16.gmra.mxu0 %v1303
    %v3669 = vpop.f32.mrf.mxu0
    %v3670 = vadd.f32 0.0, %v3669
    %v3671 = vpop.f32.mrf.mxu0
    %v3672 = vadd.f32 0.0, %v3671
    %3673 = vmatmul.bf16.gmra.mxu0 %v1307
    %v3674 = vpop.f32.mrf.mxu0
    %v3675 = vadd.f32 0.0, %v3674
    %v3676 = vpop.f32.mrf.mxu0
    %v3677 = vadd.f32 0.0, %v3676
    %3678 = vmatmul.bf16.gmra.mxu0 %v1311
    %v3679 = vpop.f32.mrf.mxu0
    %v3680 = vadd.f32 0.0, %v3679
    %v3681 = vpop.f32.mrf.mxu0
    %v3682 = vadd.f32 0.0, %v3681
    %3683 = vdwg.mxu0
    %3684 = vmatpush.bf16.msra.mxu0 %v2463
    %3685 = vmatpush.bf16.msra.mxu0 %v2455
    %3686 = vmatpush.bf16.msra.mxu0 %v2447
    %3687 = vmatpush.bf16.msra.mxu0 %v2439
    %3688 = vmatpush.bf16.msra.mxu0 %v2431
    %3689 = vmatpush.bf16.msra.mxu0 %v2423
    %3690 = vmatpush.bf16.msra.mxu0 %v2415
    %3691 = vmatpush.bf16.msra.mxu0 %v2407
    %3692 = vmatmul.bf16.gmra.mxu0 %v1284
    %v3693 = vpop.f32.mrf.mxu0
    %v3694 = vadd.f32 %v3645, %v3693
    %v3695 = vpop.f32.mrf.mxu0
    %v3696 = vadd.f32 %v3647, %v3695
    %3697 = vmatmul.bf16.gmra.mxu0 %v1288
    %v3698 = vpop.f32.mrf.mxu0
    %v3699 = vadd.f32 %v3650, %v3698
    %v3700 = vpop.f32.mrf.mxu0
    %v3701 = vadd.f32 %v3652, %v3700
    %3702 = vmatmul.bf16.gmra.mxu0 %v1292
    %v3703 = vpop.f32.mrf.mxu0
    %v3704 = vadd.f32 %v3655, %v3703
    %v3705 = vpop.f32.mrf.mxu0
    %v3706 = vadd.f32 %v3657, %v3705
    %3707 = vmatmul.bf16.gmra.mxu0 %v1296
    %v3708 = vpop.f32.mrf.mxu0
    %v3709 = vadd.f32 %v3660, %v3708
    %v3710 = vpop.f32.mrf.mxu0
    %v3711 = vadd.f32 %v3662, %v3710
    %3712 = vmatmul.bf16.gmra.mxu0 %v1300
    %v3713 = vpop.f32.mrf.mxu0
    %v3714 = vadd.f32 %v3665, %v3713
    %v3715 = vpop.f32.mrf.mxu0
    %v3716 = vadd.f32 %v3667, %v3715
    %3717 = vmatmul.bf16.gmra.mxu0 %v1304
    %v3718 = vpop.f32.mrf.mxu0
    %v3719 = vadd.f32 %v3670, %v3718
    %v3720 = vpop.f32.mrf.mxu0
    %v3721 = vadd.f32 %v3672, %v3720
    %3722 = vmatmul.bf16.gmra.mxu0 %v1308
    %v3723 = vpop.f32.mrf.mxu0
    %v3724 = vadd.f32 %v3675, %v3723
    %v3725 = vpop.f32.mrf.mxu0
    %v3726 = vadd.f32 %v3677, %v3725
    %3727 = vmatmul.bf16.gmra.mxu0 %v1312
    %v3728 = vpop.f32.mrf.mxu0
    %v3729 = vadd.f32 %v3680, %v3728
    %v3730 = vpop.f32.mrf.mxu0
    %v3731 = vadd.f32 %v3682, %v3730
    %3732 = vdwg.mxu0
    %3733 = vmatpush.bf16.msra.mxu0 %v2527
    %3734 = vmatpush.bf16.msra.mxu0 %v2519
    %3735 = vmatpush.bf16.msra.mxu0 %v2511
    %3736 = vmatpush.bf16.msra.mxu0 %v2503
    %3737 = vmatpush.bf16.msra.mxu0 %v2495
    %3738 = vmatpush.bf16.msra.mxu0 %v2487
    %3739 = vmatpush.bf16.msra.mxu0 %v2479
    %3740 = vmatpush.bf16.msra.mxu0 %v2471
    %3741 = vmatmul.bf16.gmra.mxu0 %v1285
    %v3742 = vpop.f32.mrf.mxu0
    %v3743 = vadd.f32 %v3694, %v3742
    %v3744 = vpop.f32.mrf.mxu0
    %v3745 = vadd.f32 %v3696, %v3744
    %3746 = vmatmul.bf16.gmra.mxu0 %v1289
    %v3747 = vpop.f32.mrf.mxu0
    %v3748 = vadd.f32 %v3699, %v3747
    %v3749 = vpop.f32.mrf.mxu0
    %v3750 = vadd.f32 %v3701, %v3749
    %3751 = vmatmul.bf16.gmra.mxu0 %v1293
    %v3752 = vpop.f32.mrf.mxu0
    %v3753 = vadd.f32 %v3704, %v3752
    %v3754 = vpop.f32.mrf.mxu0
    %v3755 = vadd.f32 %v3706, %v3754
    %3756 = vmatmul.bf16.gmra.mxu0 %v1297
    %v3757 = vpop.f32.mrf.mxu0
    %v3758 = vadd.f32 %v3709, %v3757
    %v3759 = vpop.f32.mrf.mxu0
    %v3760 = vadd.f32 %v3711, %v3759
    %3761 = vmatmul.bf16.gmra.mxu0 %v1301
    %v3762 = vpop.f32.mrf.mxu0
    %v3763 = vadd.f32 %v3714, %v3762
    %v3764 = vpop.f32.mrf.mxu0
    %v3765 = vadd.f32 %v3716, %v3764
    %3766 = vmatmul.bf16.gmra.mxu0 %v1305
    %v3767 = vpop.f32.mrf.mxu0
    %v3768 = vadd.f32 %v3719, %v3767
    %v3769 = vpop.f32.mrf.mxu0
    %v3770 = vadd.f32 %v3721, %v3769
    %3771 = vmatmul.bf16.gmra.mxu0 %v1309
    %v3772 = vpop.f32.mrf.mxu0
    %v3773 = vadd.f32 %v3724, %v3772
    %v3774 = vpop.f32.mrf.mxu0
    %v3775 = vadd.f32 %v3726, %v3774
    %3776 = vmatmul.bf16.gmra.mxu0 %v1313
    %v3777 = vpop.f32.mrf.mxu0
    %v3778 = vadd.f32 %v3729, %v3777
    %v3779 = vpop.f32.mrf.mxu0
    %v3780 = vadd.f32 %v3731, %v3779
    %3781 = vdwg.mxu0
    %3782 = vmatpush.bf16.msra.mxu0 %v2591
    %3783 = vmatpush.bf16.msra.mxu0 %v2583
    %3784 = vmatpush.bf16.msra.mxu0 %v2575
    %3785 = vmatpush.bf16.msra.mxu0 %v2567
    %3786 = vmatpush.bf16.msra.mxu0 %v2559
    %3787 = vmatpush.bf16.msra.mxu0 %v2551
    %3788 = vmatpush.bf16.msra.mxu0 %v2543
    %3789 = vmatpush.bf16.msra.mxu0 %v2535
    %3790 = vmatmul.bf16.gmra.mxu0 %v1286
    %v3791 = vpop.f32.mrf.mxu0
    %v3792 = vadd.f32 %v3743, %v3791
    %v3793 = vpop.f32.mrf.mxu0
    %v3794 = vadd.f32 %v3745, %v3793
    %3795 = vmatmul.bf16.gmra.mxu0 %v1290
    %v3796 = vpop.f32.mrf.mxu0
    %v3797 = vadd.f32 %v3748, %v3796
    %v3798 = vpop.f32.mrf.mxu0
    %v3799 = vadd.f32 %v3750, %v3798
    %3800 = vmatmul.bf16.gmra.mxu0 %v1294
    %v3801 = vpop.f32.mrf.mxu0
    %v3802 = vadd.f32 %v3753, %v3801
    %v3803 = vpop.f32.mrf.mxu0
    %v3804 = vadd.f32 %v3755, %v3803
    %3805 = vmatmul.bf16.gmra.mxu0 %v1298
    %v3806 = vpop.f32.mrf.mxu0
    %v3807 = vadd.f32 %v3758, %v3806
    %v3808 = vpop.f32.mrf.mxu0
    %v3809 = vadd.f32 %v3760, %v3808
    %3810 = vmatmul.bf16.gmra.mxu0 %v1302
    %v3811 = vpop.f32.mrf.mxu0
    %v3812 = vadd.f32 %v3763, %v3811
    %v3813 = vpop.f32.mrf.mxu0
    %v3814 = vadd.f32 %v3765, %v3813
    %3815 = vmatmul.bf16.gmra.mxu0 %v1306
    %v3816 = vpop.f32.mrf.mxu0
    %v3817 = vadd.f32 %v3768, %v3816
    %v3818 = vpop.f32.mrf.mxu0
    %v3819 = vadd.f32 %v3770, %v3818
    %3820 = vmatmul.bf16.gmra.mxu0 %v1310
    %v3821 = vpop.f32.mrf.mxu0
    %v3822 = vadd.f32 %v3773, %v3821
    %v3823 = vpop.f32.mrf.mxu0
    %v3824 = vadd.f32 %v3775, %v3823
    %3825 = vmatmul.bf16.gmra.mxu0 %v1314
    %v3826 = vpop.f32.mrf.mxu0
    %v3827 = vadd.f32 %v3778, %v3826
    %v3828 = vpop.f32.mrf.mxu0
    %v3829 = vadd.f32 %v3780, %v3828
    %3830 = vdwg.mxu0
    %3831 = vmatpush.bf16.msra.mxu0 %v2400
    %3832 = vmatpush.bf16.msra.mxu0 %v2392
    %3833 = vmatpush.bf16.msra.mxu0 %v2384
    %3834 = vmatpush.bf16.msra.mxu0 %v2376
    %3835 = vmatpush.bf16.msra.mxu0 %v2368
    %3836 = vmatpush.bf16.msra.mxu0 %v2360
    %3837 = vmatpush.bf16.msra.mxu0 %v2352
    %3838 = vmatpush.bf16.msra.mxu0 %v2344
    %3839 = vmatmul.bf16.gmra.mxu0 %v1283
    %v3840 = vpop.f32.mrf.mxu0
    %v3841 = vadd.f32 0.0, %v3840
    %v3842 = vpop.f32.mrf.mxu0
    %v3843 = vadd.f32 0.0, %v3842
    %3844 = vmatmul.bf16.gmra.mxu0 %v1287
    %v3845 = vpop.f32.mrf.mxu0
    %v3846 = vadd.f32 0.0, %v3845
    %v3847 = vpop.f32.mrf.mxu0
    %v3848 = vadd.f32 0.0, %v3847
    %3849 = vmatmul.bf16.gmra.mxu0 %v1291
    %v3850 = vpop.f32.mrf.mxu0
    %v3851 = vadd.f32 0.0, %v3850
    %v3852 = vpop.f32.mrf.mxu0
    %v3853 = vadd.f32 0.0, %v3852
    %3854 = vmatmul.bf16.gmra.mxu0 %v1295
    %v3855 = vpop.f32.mrf.mxu0
    %v3856 = vadd.f32 0.0, %v3855
    %v3857 = vpop.f32.mrf.mxu0
    %v3858 = vadd.f32 0.0, %v3857
    %3859 = vmatmul.bf16.gmra.mxu0 %v1299
    %v3860 = vpop.f32.mrf.mxu0
    %v3861 = vadd.f32 0.0, %v3860
    %v3862 = vpop.f32.mrf.mxu0
    %v3863 = vadd.f32 0.0, %v3862
    %3864 = vmatmul.bf16.gmra.mxu0 %v1303
    %v3865 = vpop.f32.mrf.mxu0
    %v3866 = vadd.f32 0.0, %v3865
    %v3867 = vpop.f32.mrf.mxu0
    %v3868 = vadd.f32 0.0, %v3867
    %3869 = vmatmul.bf16.gmra.mxu0 %v1307
    %v3870 = vpop.f32.mrf.mxu0
    %v3871 = vadd.f32 0.0, %v3870
    %v3872 = vpop.f32.mrf.mxu0
    %v3873 = vadd.f32 0.0, %v3872
    %3874 = vmatmul.bf16.gmra.mxu0 %v1311
    %v3875 = vpop.f32.mrf.mxu0
    %v3876 = vadd.f32 0.0, %v3875
    %v3877 = vpop.f32.mrf.mxu0
    %v3878 = vadd.f32 0.0, %v3877
    %3879 = vdwg.mxu0
    %3880 = vmatpush.bf16.msra.mxu0 %v2464
    %3881 = vmatpush.bf16.msra.mxu0 %v2456
    %3882 = vmatpush.bf16.msra.mxu0 %v2448
    %3883 = vmatpush.bf16.msra.mxu0 %v2440
    %3884 = vmatpush.bf16.msra.mxu0 %v2432
    %3885 = vmatpush.bf16.msra.mxu0 %v2424
    %3886 = vmatpush.bf16.msra.mxu0 %v2416
    %3887 = vmatpush.bf16.msra.mxu0 %v2408
    %3888 = vmatmul.bf16.gmra.mxu0 %v1284
    %v3889 = vpop.f32.mrf.mxu0
    %v3890 = vadd.f32 %v3841, %v3889
    %v3891 = vpop.f32.mrf.mxu0
    %v3892 = vadd.f32 %v3843, %v3891
    %3893 = vmatmul.bf16.gmra.mxu0 %v1288
    %v3894 = vpop.f32.mrf.mxu0
    %v3895 = vadd.f32 %v3846, %v3894
    %v3896 = vpop.f32.mrf.mxu0
    %v3897 = vadd.f32 %v3848, %v3896
    %3898 = vmatmul.bf16.gmra.mxu0 %v1292
    %v3899 = vpop.f32.mrf.mxu0
    %v3900 = vadd.f32 %v3851, %v3899
    %v3901 = vpop.f32.mrf.mxu0
    %v3902 = vadd.f32 %v3853, %v3901
    %3903 = vmatmul.bf16.gmra.mxu0 %v1296
    %v3904 = vpop.f32.mrf.mxu0
    %v3905 = vadd.f32 %v3856, %v3904
    %v3906 = vpop.f32.mrf.mxu0
    %v3907 = vadd.f32 %v3858, %v3906
    %3908 = vmatmul.bf16.gmra.mxu0 %v1300
    %v3909 = vpop.f32.mrf.mxu0
    %v3910 = vadd.f32 %v3861, %v3909
    %v3911 = vpop.f32.mrf.mxu0
    %v3912 = vadd.f32 %v3863, %v3911
    %3913 = vmatmul.bf16.gmra.mxu0 %v1304
    %v3914 = vpop.f32.mrf.mxu0
    %v3915 = vadd.f32 %v3866, %v3914
    %v3916 = vpop.f32.mrf.mxu0
    %v3917 = vadd.f32 %v3868, %v3916
    %3918 = vmatmul.bf16.gmra.mxu0 %v1308
    %v3919 = vpop.f32.mrf.mxu0
    %v3920 = vadd.f32 %v3871, %v3919
    %v3921 = vpop.f32.mrf.mxu0
    %v3922 = vadd.f32 %v3873, %v3921
    %3923 = vmatmul.bf16.gmra.mxu0 %v1312
    %v3924 = vpop.f32.mrf.mxu0
    %v3925 = vadd.f32 %v3876, %v3924
    %v3926 = vpop.f32.mrf.mxu0
    %v3927 = vadd.f32 %v3878, %v3926
    %3928 = vdwg.mxu0
    %3929 = vmatpush.bf16.msra.mxu0 %v2528
    %3930 = vmatpush.bf16.msra.mxu0 %v2520
    %3931 = vmatpush.bf16.msra.mxu0 %v2512
    %3932 = vmatpush.bf16.msra.mxu0 %v2504
    %3933 = vmatpush.bf16.msra.mxu0 %v2496
    %3934 = vmatpush.bf16.msra.mxu0 %v2488
    %3935 = vmatpush.bf16.msra.mxu0 %v2480
    %3936 = vmatpush.bf16.msra.mxu0 %v2472
    %3937 = vmatmul.bf16.gmra.mxu0 %v1285
    %v3938 = vpop.f32.mrf.mxu0
    %v3939 = vadd.f32 %v3890, %v3938
    %v3940 = vpop.f32.mrf.mxu0
    %v3941 = vadd.f32 %v3892, %v3940
    %3942 = vmatmul.bf16.gmra.mxu0 %v1289
    %v3943 = vpop.f32.mrf.mxu0
    %v3944 = vadd.f32 %v3895, %v3943
    %v3945 = vpop.f32.mrf.mxu0
    %v3946 = vadd.f32 %v3897, %v3945
    %3947 = vmatmul.bf16.gmra.mxu0 %v1293
    %v3948 = vpop.f32.mrf.mxu0
    %v3949 = vadd.f32 %v3900, %v3948
    %v3950 = vpop.f32.mrf.mxu0
    %v3951 = vadd.f32 %v3902, %v3950
    %3952 = vmatmul.bf16.gmra.mxu0 %v1297
    %v3953 = vpop.f32.mrf.mxu0
    %v3954 = vadd.f32 %v3905, %v3953
    %v3955 = vpop.f32.mrf.mxu0
    %v3956 = vadd.f32 %v3907, %v3955
    %3957 = vmatmul.bf16.gmra.mxu0 %v1301
    %v3958 = vpop.f32.mrf.mxu0
    %v3959 = vadd.f32 %v3910, %v3958
    %v3960 = vpop.f32.mrf.mxu0
    %v3961 = vadd.f32 %v3912, %v3960
    %3962 = vmatmul.bf16.gmra.mxu0 %v1305
    %v3963 = vpop.f32.mrf.mxu0
    %v3964 = vadd.f32 %v3915, %v3963
    %v3965 = vpop.f32.mrf.mxu0
    %v3966 = vadd.f32 %v3917, %v3965
    %3967 = vmatmul.bf16.gmra.mxu0 %v1309
    %v3968 = vpop.f32.mrf.mxu0
    %v3969 = vadd.f32 %v3920, %v3968
    %v3970 = vpop.f32.mrf.mxu0
    %v3971 = vadd.f32 %v3922, %v3970
    %3972 = vmatmul.bf16.gmra.mxu0 %v1313
    %v3973 = vpop.f32.mrf.mxu0
    %v3974 = vadd.f32 %v3925, %v3973
    %v3975 = vpop.f32.mrf.mxu0
    %v3976 = vadd.f32 %v3927, %v3975
    %3977 = vdwg.mxu0
    %3978 = vmatpush.bf16.msra.mxu0 %v2592
    %3979 = vmatpush.bf16.msra.mxu0 %v2584
    %3980 = vmatpush.bf16.msra.mxu0 %v2576
    %3981 = vmatpush.bf16.msra.mxu0 %v2568
    %3982 = vmatpush.bf16.msra.mxu0 %v2560
    %3983 = vmatpush.bf16.msra.mxu0 %v2552
    %3984 = vmatpush.bf16.msra.mxu0 %v2544
    %3985 = vmatpush.bf16.msra.mxu0 %v2536
    %3986 = vmatmul.bf16.gmra.mxu0 %v1286
    %v3987 = vpop.f32.mrf.mxu0
    %v3988 = vadd.f32 %v3939, %v3987
    %v3989 = vpop.f32.mrf.mxu0
    %v3990 = vadd.f32 %v3941, %v3989
    %3991 = vmatmul.bf16.gmra.mxu0 %v1290
    %v3992 = vpop.f32.mrf.mxu0
    %v3993 = vadd.f32 %v3944, %v3992
    %v3994 = vpop.f32.mrf.mxu0
    %v3995 = vadd.f32 %v3946, %v3994
    %3996 = vmatmul.bf16.gmra.mxu0 %v1294
    %v3997 = vpop.f32.mrf.mxu0
    %v3998 = vadd.f32 %v3949, %v3997
    %v3999 = vpop.f32.mrf.mxu0
    %v4000 = vadd.f32 %v3951, %v3999
    %4001 = vmatmul.bf16.gmra.mxu0 %v1298
    %v4002 = vpop.f32.mrf.mxu0
    %v4003 = vadd.f32 %v3954, %v4002
    %v4004 = vpop.f32.mrf.mxu0
    %v4005 = vadd.f32 %v3956, %v4004
    %4006 = vmatmul.bf16.gmra.mxu0 %v1302
    %v4007 = vpop.f32.mrf.mxu0
    %v4008 = vadd.f32 %v3959, %v4007
    %v4009 = vpop.f32.mrf.mxu0
    %v4010 = vadd.f32 %v3961, %v4009
    %4011 = vmatmul.bf16.gmra.mxu0 %v1306
    %v4012 = vpop.f32.mrf.mxu0
    %v4013 = vadd.f32 %v3964, %v4012
    %v4014 = vpop.f32.mrf.mxu0
    %v4015 = vadd.f32 %v3966, %v4014
    %4016 = vmatmul.bf16.gmra.mxu0 %v1310
    %v4017 = vpop.f32.mrf.mxu0
    %v4018 = vadd.f32 %v3969, %v4017
    %v4019 = vpop.f32.mrf.mxu0
    %v4020 = vadd.f32 %v3971, %v4019
    %4021 = vmatmul.bf16.gmra.mxu0 %v1314
    %v4022 = vpop.f32.mrf.mxu0
    %v4023 = vadd.f32 %v3974, %v4022
    %v4024 = vpop.f32.mrf.mxu0
    %v4025 = vadd.f32 %v3976, %v4024
    %4026 = vdwg.mxu0
    %4027 = vmatpush.bf16.msra.mxu0 %v2401
    %4028 = vmatpush.bf16.msra.mxu0 %v2393
    %4029 = vmatpush.bf16.msra.mxu0 %v2385
    %4030 = vmatpush.bf16.msra.mxu0 %v2377
    %4031 = vmatpush.bf16.msra.mxu0 %v2369
    %4032 = vmatpush.bf16.msra.mxu0 %v2361
    %4033 = vmatpush.bf16.msra.mxu0 %v2353
    %4034 = vmatpush.bf16.msra.mxu0 %v2345
    %4035 = vmatmul.bf16.gmra.mxu0 %v1283
    %v4036 = vpop.f32.mrf.mxu0
    %v4037 = vadd.f32 0.0, %v4036
    %v4038 = vpop.f32.mrf.mxu0
    %v4039 = vadd.f32 0.0, %v4038
    %4040 = vmatmul.bf16.gmra.mxu0 %v1287
    %v4041 = vpop.f32.mrf.mxu0
    %v4042 = vadd.f32 0.0, %v4041
    %v4043 = vpop.f32.mrf.mxu0
    %v4044 = vadd.f32 0.0, %v4043
    %4045 = vmatmul.bf16.gmra.mxu0 %v1291
    %v4046 = vpop.f32.mrf.mxu0
    %v4047 = vadd.f32 0.0, %v4046
    %v4048 = vpop.f32.mrf.mxu0
    %v4049 = vadd.f32 0.0, %v4048
    %4050 = vmatmul.bf16.gmra.mxu0 %v1295
    %v4051 = vpop.f32.mrf.mxu0
    %v4052 = vadd.f32 0.0, %v4051
    %v4053 = vpop.f32.mrf.mxu0
    %v4054 = vadd.f32 0.0, %v4053
    %4055 = vmatmul.bf16.gmra.mxu0 %v1299
    %v4056 = vpop.f32.mrf.mxu0
    %v4057 = vadd.f32 0.0, %v4056
    %v4058 = vpop.f32.mrf.mxu0
    %v4059 = vadd.f32 0.0, %v4058
    %4060 = vmatmul.bf16.gmra.mxu0 %v1303
    %v4061 = vpop.f32.mrf.mxu0
    %v4062 = vadd.f32 0.0, %v4061
    %v4063 = vpop.f32.mrf.mxu0
    %v4064 = vadd.f32 0.0, %v4063
    %4065 = vmatmul.bf16.gmra.mxu0 %v1307
    %v4066 = vpop.f32.mrf.mxu0
    %v4067 = vadd.f32 0.0, %v4066
    %v4068 = vpop.f32.mrf.mxu0
    %v4069 = vadd.f32 0.0, %v4068
    %4070 = vmatmul.bf16.gmra.mxu0 %v1311
    %v4071 = vpop.f32.mrf.mxu0
    %v4072 = vadd.f32 0.0, %v4071
    %v4073 = vpop.f32.mrf.mxu0
    %v4074 = vadd.f32 0.0, %v4073
    %4075 = vdwg.mxu0
    %4076 = vmatpush.bf16.msra.mxu0 %v2465
    %4077 = vmatpush.bf16.msra.mxu0 %v2457
    %4078 = vmatpush.bf16.msra.mxu0 %v2449
    %4079 = vmatpush.bf16.msra.mxu0 %v2441
    %4080 = vmatpush.bf16.msra.mxu0 %v2433
    %4081 = vmatpush.bf16.msra.mxu0 %v2425
    %4082 = vmatpush.bf16.msra.mxu0 %v2417
    %4083 = vmatpush.bf16.msra.mxu0 %v2409
    %4084 = vmatmul.bf16.gmra.mxu0 %v1284
    %v4085 = vpop.f32.mrf.mxu0
    %v4086 = vadd.f32 %v4037, %v4085
    %v4087 = vpop.f32.mrf.mxu0
    %v4088 = vadd.f32 %v4039, %v4087
    %4089 = vmatmul.bf16.gmra.mxu0 %v1288
    %v4090 = vpop.f32.mrf.mxu0
    %v4091 = vadd.f32 %v4042, %v4090
    %v4092 = vpop.f32.mrf.mxu0
    %v4093 = vadd.f32 %v4044, %v4092
    %4094 = vmatmul.bf16.gmra.mxu0 %v1292
    %v4095 = vpop.f32.mrf.mxu0
    %v4096 = vadd.f32 %v4047, %v4095
    %v4097 = vpop.f32.mrf.mxu0
    %v4098 = vadd.f32 %v4049, %v4097
    %4099 = vmatmul.bf16.gmra.mxu0 %v1296
    %v4100 = vpop.f32.mrf.mxu0
    %v4101 = vadd.f32 %v4052, %v4100
    %v4102 = vpop.f32.mrf.mxu0
    %v4103 = vadd.f32 %v4054, %v4102
    %4104 = vmatmul.bf16.gmra.mxu0 %v1300
    %v4105 = vpop.f32.mrf.mxu0
    %v4106 = vadd.f32 %v4057, %v4105
    %v4107 = vpop.f32.mrf.mxu0
    %v4108 = vadd.f32 %v4059, %v4107
    %4109 = vmatmul.bf16.gmra.mxu0 %v1304
    %v4110 = vpop.f32.mrf.mxu0
    %v4111 = vadd.f32 %v4062, %v4110
    %v4112 = vpop.f32.mrf.mxu0
    %v4113 = vadd.f32 %v4064, %v4112
    %4114 = vmatmul.bf16.gmra.mxu0 %v1308
    %v4115 = vpop.f32.mrf.mxu0
    %v4116 = vadd.f32 %v4067, %v4115
    %v4117 = vpop.f32.mrf.mxu0
    %v4118 = vadd.f32 %v4069, %v4117
    %4119 = vmatmul.bf16.gmra.mxu0 %v1312
    %v4120 = vpop.f32.mrf.mxu0
    %v4121 = vadd.f32 %v4072, %v4120
    %v4122 = vpop.f32.mrf.mxu0
    %v4123 = vadd.f32 %v4074, %v4122
    %4124 = vdwg.mxu0
    %4125 = vmatpush.bf16.msra.mxu0 %v2529
    %4126 = vmatpush.bf16.msra.mxu0 %v2521
    %4127 = vmatpush.bf16.msra.mxu0 %v2513
    %4128 = vmatpush.bf16.msra.mxu0 %v2505
    %4129 = vmatpush.bf16.msra.mxu0 %v2497
    %4130 = vmatpush.bf16.msra.mxu0 %v2489
    %4131 = vmatpush.bf16.msra.mxu0 %v2481
    %4132 = vmatpush.bf16.msra.mxu0 %v2473
    %4133 = vmatmul.bf16.gmra.mxu0 %v1285
    %v4134 = vpop.f32.mrf.mxu0
    %v4135 = vadd.f32 %v4086, %v4134
    %v4136 = vpop.f32.mrf.mxu0
    %v4137 = vadd.f32 %v4088, %v4136
    %4138 = vmatmul.bf16.gmra.mxu0 %v1289
    %v4139 = vpop.f32.mrf.mxu0
    %v4140 = vadd.f32 %v4091, %v4139
    %v4141 = vpop.f32.mrf.mxu0
    %v4142 = vadd.f32 %v4093, %v4141
    %4143 = vmatmul.bf16.gmra.mxu0 %v1293
    %v4144 = vpop.f32.mrf.mxu0
    %v4145 = vadd.f32 %v4096, %v4144
    %v4146 = vpop.f32.mrf.mxu0
    %v4147 = vadd.f32 %v4098, %v4146
    %4148 = vmatmul.bf16.gmra.mxu0 %v1297
    %v4149 = vpop.f32.mrf.mxu0
    %v4150 = vadd.f32 %v4101, %v4149
    %v4151 = vpop.f32.mrf.mxu0
    %v4152 = vadd.f32 %v4103, %v4151
    %4153 = vmatmul.bf16.gmra.mxu0 %v1301
    %v4154 = vpop.f32.mrf.mxu0
    %v4155 = vadd.f32 %v4106, %v4154
    %v4156 = vpop.f32.mrf.mxu0
    %v4157 = vadd.f32 %v4108, %v4156
    %4158 = vmatmul.bf16.gmra.mxu0 %v1305
    %v4159 = vpop.f32.mrf.mxu0
    %v4160 = vadd.f32 %v4111, %v4159
    %v4161 = vpop.f32.mrf.mxu0
    %v4162 = vadd.f32 %v4113, %v4161
    %4163 = vmatmul.bf16.gmra.mxu0 %v1309
    %v4164 = vpop.f32.mrf.mxu0
    %v4165 = vadd.f32 %v4116, %v4164
    %v4166 = vpop.f32.mrf.mxu0
    %v4167 = vadd.f32 %v4118, %v4166
    %4168 = vmatmul.bf16.gmra.mxu0 %v1313
    %v4169 = vpop.f32.mrf.mxu0
    %v4170 = vadd.f32 %v4121, %v4169
    %v4171 = vpop.f32.mrf.mxu0
    %v4172 = vadd.f32 %v4123, %v4171
    %4173 = vdwg.mxu0
    %4174 = vmatpush.bf16.msra.mxu0 %v2593
    %4175 = vmatpush.bf16.msra.mxu0 %v2585
    %4176 = vmatpush.bf16.msra.mxu0 %v2577
    %4177 = vmatpush.bf16.msra.mxu0 %v2569
    %4178 = vmatpush.bf16.msra.mxu0 %v2561
    %4179 = vmatpush.bf16.msra.mxu0 %v2553
    %4180 = vmatpush.bf16.msra.mxu0 %v2545
    %4181 = vmatpush.bf16.msra.mxu0 %v2537
    %4182 = vmatmul.bf16.gmra.mxu0 %v1286
    %v4183 = vpop.f32.mrf.mxu0
    %v4184 = vadd.f32 %v4135, %v4183
    %v4185 = vpop.f32.mrf.mxu0
    %v4186 = vadd.f32 %v4137, %v4185
    %4187 = vmatmul.bf16.gmra.mxu0 %v1290
    %v4188 = vpop.f32.mrf.mxu0
    %v4189 = vadd.f32 %v4140, %v4188
    %v4190 = vpop.f32.mrf.mxu0
    %v4191 = vadd.f32 %v4142, %v4190
    %4192 = vmatmul.bf16.gmra.mxu0 %v1294
    %v4193 = vpop.f32.mrf.mxu0
    %v4194 = vadd.f32 %v4145, %v4193
    %v4195 = vpop.f32.mrf.mxu0
    %v4196 = vadd.f32 %v4147, %v4195
    %4197 = vmatmul.bf16.gmra.mxu0 %v1298
    %v4198 = vpop.f32.mrf.mxu0
    %v4199 = vadd.f32 %v4150, %v4198
    %v4200 = vpop.f32.mrf.mxu0
    %v4201 = vadd.f32 %v4152, %v4200
    %4202 = vmatmul.bf16.gmra.mxu0 %v1302
    %v4203 = vpop.f32.mrf.mxu0
    %v4204 = vadd.f32 %v4155, %v4203
    %v4205 = vpop.f32.mrf.mxu0
    %v4206 = vadd.f32 %v4157, %v4205
    %4207 = vmatmul.bf16.gmra.mxu0 %v1306
    %v4208 = vpop.f32.mrf.mxu0
    %v4209 = vadd.f32 %v4160, %v4208
    %v4210 = vpop.f32.mrf.mxu0
    %v4211 = vadd.f32 %v4162, %v4210
    %4212 = vmatmul.bf16.gmra.mxu0 %v1310
    %v4213 = vpop.f32.mrf.mxu0
    %v4214 = vadd.f32 %v4165, %v4213
    %v4215 = vpop.f32.mrf.mxu0
    %v4216 = vadd.f32 %v4167, %v4215
    %4217 = vmatmul.bf16.gmra.mxu0 %v1314
    %v4218 = vpop.f32.mrf.mxu0
    %v4219 = vadd.f32 %v4170, %v4218
    %v4220 = vpop.f32.mrf.mxu0
    %v4221 = vadd.f32 %v4172, %v4220
    %4222 = vdwg.mxu0
    %4223 = vmatpush.bf16.msra.mxu0 %v2402
    %4224 = vmatpush.bf16.msra.mxu0 %v2394
    %4225 = vmatpush.bf16.msra.mxu0 %v2386
    %4226 = vmatpush.bf16.msra.mxu0 %v2378
    %4227 = vmatpush.bf16.msra.mxu0 %v2370
    %4228 = vmatpush.bf16.msra.mxu0 %v2362
    %4229 = vmatpush.bf16.msra.mxu0 %v2354
    %4230 = vmatpush.bf16.msra.mxu0 %v2346
    %4231 = vmatmul.bf16.gmra.mxu0 %v1283
    %v4232 = vpop.f32.mrf.mxu0
    %v4233 = vadd.f32 0.0, %v4232
    %v4234 = vpop.f32.mrf.mxu0
    %v4235 = vadd.f32 0.0, %v4234
    %4236 = vmatmul.bf16.gmra.mxu0 %v1287
    %v4237 = vpop.f32.mrf.mxu0
    %v4238 = vadd.f32 0.0, %v4237
    %v4239 = vpop.f32.mrf.mxu0
    %v4240 = vadd.f32 0.0, %v4239
    %4241 = vmatmul.bf16.gmra.mxu0 %v1291
    %v4242 = vpop.f32.mrf.mxu0
    %v4243 = vadd.f32 0.0, %v4242
    %v4244 = vpop.f32.mrf.mxu0
    %v4245 = vadd.f32 0.0, %v4244
    %4246 = vmatmul.bf16.gmra.mxu0 %v1295
    %v4247 = vpop.f32.mrf.mxu0
    %v4248 = vadd.f32 0.0, %v4247
    %v4249 = vpop.f32.mrf.mxu0
    %v4250 = vadd.f32 0.0, %v4249
    %4251 = vmatmul.bf16.gmra.mxu0 %v1299
    %v4252 = vpop.f32.mrf.mxu0
    %v4253 = vadd.f32 0.0, %v4252
    %v4254 = vpop.f32.mrf.mxu0
    %v4255 = vadd.f32 0.0, %v4254
    %4256 = vmatmul.bf16.gmra.mxu0 %v1303
    %v4257 = vpop.f32.mrf.mxu0
    %v4258 = vadd.f32 0.0, %v4257
    %v4259 = vpop.f32.mrf.mxu0
    %v4260 = vadd.f32 0.0, %v4259
    %4261 = vmatmul.bf16.gmra.mxu0 %v1307
    %v4262 = vpop.f32.mrf.mxu0
    %v4263 = vadd.f32 0.0, %v4262
    %v4264 = vpop.f32.mrf.mxu0
    %v4265 = vadd.f32 0.0, %v4264
    %4266 = vmatmul.bf16.gmra.mxu0 %v1311
    %v4267 = vpop.f32.mrf.mxu0
    %v4268 = vadd.f32 0.0, %v4267
    %v4269 = vpop.f32.mrf.mxu0
    %v4270 = vadd.f32 0.0, %v4269
    %4271 = vdwg.mxu0
    %4272 = vmatpush.bf16.msra.mxu0 %v2466
    %4273 = vmatpush.bf16.msra.mxu0 %v2458
    %4274 = vmatpush.bf16.msra.mxu0 %v2450
    %4275 = vmatpush.bf16.msra.mxu0 %v2442
    %4276 = vmatpush.bf16.msra.mxu0 %v2434
    %4277 = vmatpush.bf16.msra.mxu0 %v2426
    %4278 = vmatpush.bf16.msra.mxu0 %v2418
    %4279 = vmatpush.bf16.msra.mxu0 %v2410
    %4280 = vmatmul.bf16.gmra.mxu0 %v1284
    %v4281 = vpop.f32.mrf.mxu0
    %v4282 = vadd.f32 %v4233, %v4281
    %v4283 = vpop.f32.mrf.mxu0
    %v4284 = vadd.f32 %v4235, %v4283
    %4285 = vmatmul.bf16.gmra.mxu0 %v1288
    %v4286 = vpop.f32.mrf.mxu0
    %v4287 = vadd.f32 %v4238, %v4286
    %v4288 = vpop.f32.mrf.mxu0
    %v4289 = vadd.f32 %v4240, %v4288
    %4290 = vmatmul.bf16.gmra.mxu0 %v1292
    %v4291 = vpop.f32.mrf.mxu0
    %v4292 = vadd.f32 %v4243, %v4291
    %v4293 = vpop.f32.mrf.mxu0
    %v4294 = vadd.f32 %v4245, %v4293
    %4295 = vmatmul.bf16.gmra.mxu0 %v1296
    %v4296 = vpop.f32.mrf.mxu0
    %v4297 = vadd.f32 %v4248, %v4296
    %v4298 = vpop.f32.mrf.mxu0
    %v4299 = vadd.f32 %v4250, %v4298
    %4300 = vmatmul.bf16.gmra.mxu0 %v1300
    %v4301 = vpop.f32.mrf.mxu0
    %v4302 = vadd.f32 %v4253, %v4301
    %v4303 = vpop.f32.mrf.mxu0
    %v4304 = vadd.f32 %v4255, %v4303
    %4305 = vmatmul.bf16.gmra.mxu0 %v1304
    %v4306 = vpop.f32.mrf.mxu0
    %v4307 = vadd.f32 %v4258, %v4306
    %v4308 = vpop.f32.mrf.mxu0
    %v4309 = vadd.f32 %v4260, %v4308
    %4310 = vmatmul.bf16.gmra.mxu0 %v1308
    %v4311 = vpop.f32.mrf.mxu0
    %v4312 = vadd.f32 %v4263, %v4311
    %v4313 = vpop.f32.mrf.mxu0
    %v4314 = vadd.f32 %v4265, %v4313
    %4315 = vmatmul.bf16.gmra.mxu0 %v1312
    %v4316 = vpop.f32.mrf.mxu0
    %v4317 = vadd.f32 %v4268, %v4316
    %v4318 = vpop.f32.mrf.mxu0
    %v4319 = vadd.f32 %v4270, %v4318
    %4320 = vdwg.mxu0
    %4321 = vmatpush.bf16.msra.mxu0 %v2530
    %4322 = vmatpush.bf16.msra.mxu0 %v2522
    %4323 = vmatpush.bf16.msra.mxu0 %v2514
    %4324 = vmatpush.bf16.msra.mxu0 %v2506
    %4325 = vmatpush.bf16.msra.mxu0 %v2498
    %4326 = vmatpush.bf16.msra.mxu0 %v2490
    %4327 = vmatpush.bf16.msra.mxu0 %v2482
    %4328 = vmatpush.bf16.msra.mxu0 %v2474
    %4329 = vmatmul.bf16.gmra.mxu0 %v1285
    %v4330 = vpop.f32.mrf.mxu0
    %v4331 = vadd.f32 %v4282, %v4330
    %v4332 = vpop.f32.mrf.mxu0
    %v4333 = vadd.f32 %v4284, %v4332
    %4334 = vmatmul.bf16.gmra.mxu0 %v1289
    %v4335 = vpop.f32.mrf.mxu0
    %v4336 = vadd.f32 %v4287, %v4335
    %v4337 = vpop.f32.mrf.mxu0
    %v4338 = vadd.f32 %v4289, %v4337
    %4339 = vmatmul.bf16.gmra.mxu0 %v1293
    %v4340 = vpop.f32.mrf.mxu0
    %v4341 = vadd.f32 %v4292, %v4340
    %v4342 = vpop.f32.mrf.mxu0
    %v4343 = vadd.f32 %v4294, %v4342
    %4344 = vmatmul.bf16.gmra.mxu0 %v1297
    %v4345 = vpop.f32.mrf.mxu0
    %v4346 = vadd.f32 %v4297, %v4345
    %v4347 = vpop.f32.mrf.mxu0
    %v4348 = vadd.f32 %v4299, %v4347
    %4349 = vmatmul.bf16.gmra.mxu0 %v1301
    %v4350 = vpop.f32.mrf.mxu0
    %v4351 = vadd.f32 %v4302, %v4350
    %v4352 = vpop.f32.mrf.mxu0
    %v4353 = vadd.f32 %v4304, %v4352
    %4354 = vmatmul.bf16.gmra.mxu0 %v1305
    %v4355 = vpop.f32.mrf.mxu0
    %v4356 = vadd.f32 %v4307, %v4355
    %v4357 = vpop.f32.mrf.mxu0
    %v4358 = vadd.f32 %v4309, %v4357
    %4359 = vmatmul.bf16.gmra.mxu0 %v1309
    %v4360 = vpop.f32.mrf.mxu0
    %v4361 = vadd.f32 %v4312, %v4360
    %v4362 = vpop.f32.mrf.mxu0
    %v4363 = vadd.f32 %v4314, %v4362
    %4364 = vmatmul.bf16.gmra.mxu0 %v1313
    %v4365 = vpop.f32.mrf.mxu0
    %v4366 = vadd.f32 %v4317, %v4365
    %v4367 = vpop.f32.mrf.mxu0
    %v4368 = vadd.f32 %v4319, %v4367
    %4369 = vdwg.mxu0
    %4370 = vmatpush.bf16.msra.mxu0 %v2594
    %4371 = vmatpush.bf16.msra.mxu0 %v2586
    %4372 = vmatpush.bf16.msra.mxu0 %v2578
    %4373 = vmatpush.bf16.msra.mxu0 %v2570
    %4374 = vmatpush.bf16.msra.mxu0 %v2562
    %4375 = vmatpush.bf16.msra.mxu0 %v2554
    %4376 = vmatpush.bf16.msra.mxu0 %v2546
    %4377 = vmatpush.bf16.msra.mxu0 %v2538
    %4378 = vmatmul.bf16.gmra.mxu0 %v1286
    %v4379 = vpop.f32.mrf.mxu0
    %v4380 = vadd.f32 %v4331, %v4379
    %v4381 = vpop.f32.mrf.mxu0
    %v4382 = vadd.f32 %v4333, %v4381
    %4383 = vmatmul.bf16.gmra.mxu0 %v1290
    %v4384 = vpop.f32.mrf.mxu0
    %v4385 = vadd.f32 %v4336, %v4384
    %v4386 = vpop.f32.mrf.mxu0
    %v4387 = vadd.f32 %v4338, %v4386
    %4388 = vmatmul.bf16.gmra.mxu0 %v1294
    %v4389 = vpop.f32.mrf.mxu0
    %v4390 = vadd.f32 %v4341, %v4389
    %v4391 = vpop.f32.mrf.mxu0
    %v4392 = vadd.f32 %v4343, %v4391
    %4393 = vmatmul.bf16.gmra.mxu0 %v1298
    %v4394 = vpop.f32.mrf.mxu0
    %v4395 = vadd.f32 %v4346, %v4394
    %v4396 = vpop.f32.mrf.mxu0
    %v4397 = vadd.f32 %v4348, %v4396
    %4398 = vmatmul.bf16.gmra.mxu0 %v1302
    %v4399 = vpop.f32.mrf.mxu0
    %v4400 = vadd.f32 %v4351, %v4399
    %v4401 = vpop.f32.mrf.mxu0
    %v4402 = vadd.f32 %v4353, %v4401
    %4403 = vmatmul.bf16.gmra.mxu0 %v1306
    %v4404 = vpop.f32.mrf.mxu0
    %v4405 = vadd.f32 %v4356, %v4404
    %v4406 = vpop.f32.mrf.mxu0
    %v4407 = vadd.f32 %v4358, %v4406
    %4408 = vmatmul.bf16.gmra.mxu0 %v1310
    %v4409 = vpop.f32.mrf.mxu0
    %v4410 = vadd.f32 %v4361, %v4409
    %v4411 = vpop.f32.mrf.mxu0
    %v4412 = vadd.f32 %v4363, %v4411
    %4413 = vmatmul.bf16.gmra.mxu0 %v1314
    %v4414 = vpop.f32.mrf.mxu0
    %v4415 = vadd.f32 %v4366, %v4414
    %v4416 = vpop.f32.mrf.mxu0
    %v4417 = vadd.f32 %v4368, %v4416
    %4418 = vdwg.mxu0
    %v4419 = vpack.c.bf16 %v3204, %v3008
    %v4420 = vpack.c.bf16 %v3596, %v3400
    %v4421 = vpack.c.bf16 %v3988, %v3792
    %v4422 = vpack.c.bf16 %v4380, %v4184
    %v4423 = vpack.c.bf16 %v3206, %v3010
    %v4424 = vpack.c.bf16 %v3598, %v3402
    %v4425 = vpack.c.bf16 %v3990, %v3794
    %v4426 = vpack.c.bf16 %v4382, %v4186
    %v4427 = vpack.c.bf16 %v3209, %v3013
    %v4428 = vpack.c.bf16 %v3601, %v3405
    %v4429 = vpack.c.bf16 %v3993, %v3797
    %v4430 = vpack.c.bf16 %v4385, %v4189
    %v4431 = vpack.c.bf16 %v3211, %v3015
    %v4432 = vpack.c.bf16 %v3603, %v3407
    %v4433 = vpack.c.bf16 %v3995, %v3799
    %v4434 = vpack.c.bf16 %v4387, %v4191
    %v4435 = vpack.c.bf16 %v3214, %v3018
    %v4436 = vpack.c.bf16 %v3606, %v3410
    %v4437 = vpack.c.bf16 %v3998, %v3802
    %v4438 = vpack.c.bf16 %v4390, %v4194
    %v4439 = vpack.c.bf16 %v3216, %v3020
    %v4440 = vpack.c.bf16 %v3608, %v3412
    %v4441 = vpack.c.bf16 %v4000, %v3804
    %v4442 = vpack.c.bf16 %v4392, %v4196
    %v4443 = vpack.c.bf16 %v3219, %v3023
    %v4444 = vpack.c.bf16 %v3611, %v3415
    %v4445 = vpack.c.bf16 %v4003, %v3807
    %v4446 = vpack.c.bf16 %v4395, %v4199
    %v4447 = vpack.c.bf16 %v3221, %v3025
    %v4448 = vpack.c.bf16 %v3613, %v3417
    %v4449 = vpack.c.bf16 %v4005, %v3809
    %v4450 = vpack.c.bf16 %v4397, %v4201
    %v4451 = vpack.c.bf16 %v3224, %v3028
    %v4452 = vpack.c.bf16 %v3616, %v3420
    %v4453 = vpack.c.bf16 %v4008, %v3812
    %v4454 = vpack.c.bf16 %v4400, %v4204
    %v4455 = vpack.c.bf16 %v3226, %v3030
    %v4456 = vpack.c.bf16 %v3618, %v3422
    %v4457 = vpack.c.bf16 %v4010, %v3814
    %v4458 = vpack.c.bf16 %v4402, %v4206
    %v4459 = vpack.c.bf16 %v3229, %v3033
    %v4460 = vpack.c.bf16 %v3621, %v3425
    %v4461 = vpack.c.bf16 %v4013, %v3817
    %v4462 = vpack.c.bf16 %v4405, %v4209
    %v4463 = vpack.c.bf16 %v3231, %v3035
    %v4464 = vpack.c.bf16 %v3623, %v3427
    %v4465 = vpack.c.bf16 %v4015, %v3819
    %v4466 = vpack.c.bf16 %v4407, %v4211
    %v4467 = vpack.c.bf16 %v3234, %v3038
    %v4468 = vpack.c.bf16 %v3626, %v3430
    %v4469 = vpack.c.bf16 %v4018, %v3822
    %v4470 = vpack.c.bf16 %v4410, %v4214
    %v4471 = vpack.c.bf16 %v3236, %v3040
    %v4472 = vpack.c.bf16 %v3628, %v3432
    %v4473 = vpack.c.bf16 %v4020, %v3824
    %v4474 = vpack.c.bf16 %v4412, %v4216
    %v4475 = vpack.c.bf16 %v3239, %v3043
    %v4476 = vpack.c.bf16 %v3631, %v3435
    %v4477 = vpack.c.bf16 %v4023, %v3827
    %v4478 = vpack.c.bf16 %v4415, %v4219
    %v4479 = vpack.c.bf16 %v3241, %v3045
    %v4480 = vpack.c.bf16 %v3633, %v3437
    %v4481 = vpack.c.bf16 %v4025, %v3829
    %v4482 = vpack.c.bf16 %v4417, %v4221
    %v4483 = vld [vmem:[#allocation11] sm:$0xff]
    %4485 = vst [vmem:[#allocation1] ss:$9 sm:$0xff] %v4483
    %v4486 = vld [vmem:[#allocation1] sm:$0xff]
    %v4487 = vld [vmem:[#allocation1 + $0x9] sm:$0xff]
    %v4488 = vld [vmem:[#allocation1 + $0x12] sm:$0xff]
    %v4489 = vld [vmem:[#allocation1 + $0x1b] sm:$0xff]
    %v4490 = vld [vmem:[#allocation1 + $0x24] sm:$0xff]
    %v4491 = vld [vmem:[#allocation1 + $0x2d] sm:$0xff]
    %v4492 = vld [vmem:[#allocation1 + $0x36] sm:$0xff]
    %v4493 = vld [vmem:[#allocation1 + $0x3f] sm:$0xff]
    %v4494 = vpack.i.b16 %v4486, %v4486
    %v4496 = vperm.slane %v4494, 0
    %v4497 = vpack.i.b16 %v4487, %v4487
    %v4499 = vperm.slane %v4497, 0
    %v4500 = vpack.i.b16 %v4488, %v4488
    %v4502 = vperm.slane %v4500, 0
    %v4503 = vpack.i.b16 %v4489, %v4489
    %v4505 = vperm.slane %v4503, 0
    %v4506 = vpack.i.b16 %v4490, %v4490
    %v4508 = vperm.slane %v4506, 0
    %v4509 = vpack.i.b16 %v4491, %v4491
    %v4511 = vperm.slane %v4509, 0
    %v4512 = vpack.i.b16 %v4492, %v4492
    %v4514 = vperm.slane %v4512, 0
    %v4515 = vpack.i.b16 %v4493, %v4493
    %v4517 = vperm.slane %v4515, 0
    %v4518 = vunpack.c.l.bf16 %v4419
    %v4519 = vunpack.c.h.bf16 %v4419
    %v4520 = vunpack.c.l.bf16 %v4420
    %v4521 = vunpack.c.h.bf16 %v4420
    %v4522 = vunpack.c.l.bf16 %v4421
    %v4523 = vunpack.c.h.bf16 %v4421
    %v4524 = vunpack.c.l.bf16 %v4422
    %v4525 = vunpack.c.h.bf16 %v4422
    %v4526 = vunpack.c.l.bf16 %v4423
    %v4527 = vunpack.c.h.bf16 %v4423
    %v4528 = vunpack.c.l.bf16 %v4424
    %v4529 = vunpack.c.h.bf16 %v4424
    %v4530 = vunpack.c.l.bf16 %v4425
    %v4531 = vunpack.c.h.bf16 %v4425
    %v4532 = vunpack.c.l.bf16 %v4426
    %v4533 = vunpack.c.h.bf16 %v4426
    %v4534 = vunpack.c.l.bf16 %v4427
    %v4535 = vunpack.c.h.bf16 %v4427
    %v4536 = vunpack.c.l.bf16 %v4428
    %v4537 = vunpack.c.h.bf16 %v4428
    %v4538 = vunpack.c.l.bf16 %v4429
    %v4539 = vunpack.c.h.bf16 %v4429
    %v4540 = vunpack.c.l.bf16 %v4430
    %v4541 = vunpack.c.h.bf16 %v4430
    %v4542 = vunpack.c.l.bf16 %v4431
    %v4543 = vunpack.c.h.bf16 %v4431
    %v4544 = vunpack.c.l.bf16 %v4432
    %v4545 = vunpack.c.h.bf16 %v4432
    %v4546 = vunpack.c.l.bf16 %v4433
    %v4547 = vunpack.c.h.bf16 %v4433
    %v4548 = vunpack.c.l.bf16 %v4434
    %v4549 = vunpack.c.h.bf16 %v4434
    %v4550 = vunpack.c.l.bf16 %v4435
    %v4551 = vunpack.c.h.bf16 %v4435
    %v4552 = vunpack.c.l.bf16 %v4436
    %v4553 = vunpack.c.h.bf16 %v4436
    %v4554 = vunpack.c.l.bf16 %v4437
    %v4555 = vunpack.c.h.bf16 %v4437
    %v4556 = vunpack.c.l.bf16 %v4438
    %v4557 = vunpack.c.h.bf16 %v4438
    %v4558 = vunpack.c.l.bf16 %v4439
    %v4559 = vunpack.c.h.bf16 %v4439
    %v4560 = vunpack.c.l.bf16 %v4440
    %v4561 = vunpack.c.h.bf16 %v4440
    %v4562 = vunpack.c.l.bf16 %v4441
    %v4563 = vunpack.c.h.bf16 %v4441
    %v4564 = vunpack.c.l.bf16 %v4442
    %v4565 = vunpack.c.h.bf16 %v4442
    %v4566 = vunpack.c.l.bf16 %v4443
    %v4567 = vunpack.c.h.bf16 %v4443
    %v4568 = vunpack.c.l.bf16 %v4444
    %v4569 = vunpack.c.h.bf16 %v4444
    %v4570 = vunpack.c.l.bf16 %v4445
    %v4571 = vunpack.c.h.bf16 %v4445
    %v4572 = vunpack.c.l.bf16 %v4446
    %v4573 = vunpack.c.h.bf16 %v4446
    %v4574 = vunpack.c.l.bf16 %v4447
    %v4575 = vunpack.c.h.bf16 %v4447
    %v4576 = vunpack.c.l.bf16 %v4448
    %v4577 = vunpack.c.h.bf16 %v4448
    %v4578 = vunpack.c.l.bf16 %v4449
    %v4579 = vunpack.c.h.bf16 %v4449
    %v4580 = vunpack.c.l.bf16 %v4450
    %v4581 = vunpack.c.h.bf16 %v4450
    %v4582 = vunpack.c.l.bf16 %v4451
    %v4583 = vunpack.c.h.bf16 %v4451
    %v4584 = vunpack.c.l.bf16 %v4452
    %v4585 = vunpack.c.h.bf16 %v4452
    %v4586 = vunpack.c.l.bf16 %v4453
    %v4587 = vunpack.c.h.bf16 %v4453
    %v4588 = vunpack.c.l.bf16 %v4454
    %v4589 = vunpack.c.h.bf16 %v4454
    %v4590 = vunpack.c.l.bf16 %v4455
    %v4591 = vunpack.c.h.bf16 %v4455
    %v4592 = vunpack.c.l.bf16 %v4456
    %v4593 = vunpack.c.h.bf16 %v4456
    %v4594 = vunpack.c.l.bf16 %v4457
    %v4595 = vunpack.c.h.bf16 %v4457
    %v4596 = vunpack.c.l.bf16 %v4458
    %v4597 = vunpack.c.h.bf16 %v4458
    %v4598 = vunpack.c.l.bf16 %v4459
    %v4599 = vunpack.c.h.bf16 %v4459
    %v4600 = vunpack.c.l.bf16 %v4460
    %v4601 = vunpack.c.h.bf16 %v4460
    %v4602 = vunpack.c.l.bf16 %v4461
    %v4603 = vunpack.c.h.bf16 %v4461
    %v4604 = vunpack.c.l.bf16 %v4462
    %v4605 = vunpack.c.h.bf16 %v4462
    %v4606 = vunpack.c.l.bf16 %v4463
    %v4607 = vunpack.c.h.bf16 %v4463
    %v4608 = vunpack.c.l.bf16 %v4464
    %v4609 = vunpack.c.h.bf16 %v4464
    %v4610 = vunpack.c.l.bf16 %v4465
    %v4611 = vunpack.c.h.bf16 %v4465
    %v4612 = vunpack.c.l.bf16 %v4466
    %v4613 = vunpack.c.h.bf16 %v4466
    %v4614 = vunpack.c.l.bf16 %v4467
    %v4615 = vunpack.c.h.bf16 %v4467
    %v4616 = vunpack.c.l.bf16 %v4468
    %v4617 = vunpack.c.h.bf16 %v4468
    %v4618 = vunpack.c.l.bf16 %v4469
    %v4619 = vunpack.c.h.bf16 %v4469
    %v4620 = vunpack.c.l.bf16 %v4470
    %v4621 = vunpack.c.h.bf16 %v4470
    %v4622 = vunpack.c.l.bf16 %v4471
    %v4623 = vunpack.c.h.bf16 %v4471
    %v4624 = vunpack.c.l.bf16 %v4472
    %v4625 = vunpack.c.h.bf16 %v4472
    %v4626 = vunpack.c.l.bf16 %v4473
    %v4627 = vunpack.c.h.bf16 %v4473
    %v4628 = vunpack.c.l.bf16 %v4474
    %v4629 = vunpack.c.h.bf16 %v4474
    %v4630 = vunpack.c.l.bf16 %v4475
    %v4631 = vunpack.c.h.bf16 %v4475
    %v4632 = vunpack.c.l.bf16 %v4476
    %v4633 = vunpack.c.h.bf16 %v4476
    %v4634 = vunpack.c.l.bf16 %v4477
    %v4635 = vunpack.c.h.bf16 %v4477
    %v4636 = vunpack.c.l.bf16 %v4478
    %v4637 = vunpack.c.h.bf16 %v4478
    %v4638 = vunpack.c.l.bf16 %v4479
    %v4639 = vunpack.c.h.bf16 %v4479
    %v4640 = vunpack.c.l.bf16 %v4480
    %v4641 = vunpack.c.h.bf16 %v4480
    %v4642 = vunpack.c.l.bf16 %v4481
    %v4643 = vunpack.c.h.bf16 %v4481
    %v4644 = vunpack.c.l.bf16 %v4482
    %v4645 = vunpack.c.h.bf16 %v4482
    %v4646 = vunpack.c.l.bf16 %v4496
    %v4647 = vunpack.c.l.bf16 %v4499
    %v4648 = vunpack.c.l.bf16 %v4502
    %v4649 = vunpack.c.l.bf16 %v4505
    %v4650 = vunpack.c.l.bf16 %v4508
    %v4651 = vunpack.c.l.bf16 %v4511
    %v4652 = vunpack.c.l.bf16 %v4514
    %v4653 = vunpack.c.l.bf16 %v4517
    %v4654 = vadd.f32 %v4518, %v4646
    %v4655 = vadd.f32 %v4519, %v4647
    %v4656 = vadd.f32 %v4520, %v4648
    %v4657 = vadd.f32 %v4521, %v4649
    %v4658 = vadd.f32 %v4522, %v4650
    %v4659 = vadd.f32 %v4523, %v4651
    %v4660 = vadd.f32 %v4524, %v4652
    %v4661 = vadd.f32 %v4525, %v4653
    %v4662 = vadd.f32 %v4526, %v4646
    %v4663 = vadd.f32 %v4527, %v4647
    %v4664 = vadd.f32 %v4528, %v4648
    %v4665 = vadd.f32 %v4529, %v4649
    %v4666 = vadd.f32 %v4530, %v4650
    %v4667 = vadd.f32 %v4531, %v4651
    %v4668 = vadd.f32 %v4532, %v4652
    %v4669 = vadd.f32 %v4533, %v4653
    %v4670 = vadd.f32 %v4534, %v4646
    %v4671 = vadd.f32 %v4535, %v4647
    %v4672 = vadd.f32 %v4536, %v4648
    %v4673 = vadd.f32 %v4537, %v4649
    %v4674 = vadd.f32 %v4538, %v4650
    %v4675 = vadd.f32 %v4539, %v4651
    %v4676 = vadd.f32 %v4540, %v4652
    %v4677 = vadd.f32 %v4541, %v4653
    %v4678 = vadd.f32 %v4542, %v4646
    %v4679 = vadd.f32 %v4543, %v4647
    %v4680 = vadd.f32 %v4544, %v4648
    %v4681 = vadd.f32 %v4545, %v4649
    %v4682 = vadd.f32 %v4546, %v4650
    %v4683 = vadd.f32 %v4547, %v4651
    %v4684 = vadd.f32 %v4548, %v4652
    %v4685 = vadd.f32 %v4549, %v4653
    %v4686 = vadd.f32 %v4550, %v4646
    %v4687 = vadd.f32 %v4551, %v4647
    %v4688 = vadd.f32 %v4552, %v4648
    %v4689 = vadd.f32 %v4553, %v4649
    %v4690 = vadd.f32 %v4554, %v4650
    %v4691 = vadd.f32 %v4555, %v4651
    %v4692 = vadd.f32 %v4556, %v4652
    %v4693 = vadd.f32 %v4557, %v4653
    %v4694 = vadd.f32 %v4558, %v4646
    %v4695 = vadd.f32 %v4559, %v4647
    %v4696 = vadd.f32 %v4560, %v4648
    %v4697 = vadd.f32 %v4561, %v4649
    %v4698 = vadd.f32 %v4562, %v4650
    %v4699 = vadd.f32 %v4563, %v4651
    %v4700 = vadd.f32 %v4564, %v4652
    %v4701 = vadd.f32 %v4565, %v4653
    %v4702 = vadd.f32 %v4566, %v4646
    %v4703 = vadd.f32 %v4567, %v4647
    %v4704 = vadd.f32 %v4568, %v4648
    %v4705 = vadd.f32 %v4569, %v4649
    %v4706 = vadd.f32 %v4570, %v4650
    %v4707 = vadd.f32 %v4571, %v4651
    %v4708 = vadd.f32 %v4572, %v4652
    %v4709 = vadd.f32 %v4573, %v4653
    %v4710 = vadd.f32 %v4574, %v4646
    %v4711 = vadd.f32 %v4575, %v4647
    %v4712 = vadd.f32 %v4576, %v4648
    %v4713 = vadd.f32 %v4577, %v4649
    %v4714 = vadd.f32 %v4578, %v4650
    %v4715 = vadd.f32 %v4579, %v4651
    %v4716 = vadd.f32 %v4580, %v4652
    %v4717 = vadd.f32 %v4581, %v4653
    %v4718 = vadd.f32 %v4582, %v4646
    %v4719 = vadd.f32 %v4583, %v4647
    %v4720 = vadd.f32 %v4584, %v4648
    %v4721 = vadd.f32 %v4585, %v4649
    %v4722 = vadd.f32 %v4586, %v4650
    %v4723 = vadd.f32 %v4587, %v4651
    %v4724 = vadd.f32 %v4588, %v4652
    %v4725 = vadd.f32 %v4589, %v4653
    %v4726 = vadd.f32 %v4590, %v4646
    %v4727 = vadd.f32 %v4591, %v4647
    %v4728 = vadd.f32 %v4592, %v4648
    %v4729 = vadd.f32 %v4593, %v4649
    %v4730 = vadd.f32 %v4594, %v4650
    %v4731 = vadd.f32 %v4595, %v4651
    %v4732 = vadd.f32 %v4596, %v4652
    %v4733 = vadd.f32 %v4597, %v4653
    %v4734 = vadd.f32 %v4598, %v4646
    %v4735 = vadd.f32 %v4599, %v4647
    %v4736 = vadd.f32 %v4600, %v4648
    %v4737 = vadd.f32 %v4601, %v4649
    %v4738 = vadd.f32 %v4602, %v4650
    %v4739 = vadd.f32 %v4603, %v4651
    %v4740 = vadd.f32 %v4604, %v4652
    %v4741 = vadd.f32 %v4605, %v4653
    %v4742 = vadd.f32 %v4606, %v4646
    %v4743 = vadd.f32 %v4607, %v4647
    %v4744 = vadd.f32 %v4608, %v4648
    %v4745 = vadd.f32 %v4609, %v4649
    %v4746 = vadd.f32 %v4610, %v4650
    %v4747 = vadd.f32 %v4611, %v4651
    %v4748 = vadd.f32 %v4612, %v4652
    %v4749 = vadd.f32 %v4613, %v4653
    %v4750 = vadd.f32 %v4614, %v4646
    %v4751 = vadd.f32 %v4615, %v4647
    %v4752 = vadd.f32 %v4616, %v4648
    %v4753 = vadd.f32 %v4617, %v4649
    %v4754 = vadd.f32 %v4618, %v4650
    %v4755 = vadd.f32 %v4619, %v4651
    %v4756 = vadd.f32 %v4620, %v4652
    %v4757 = vadd.f32 %v4621, %v4653
    %v4758 = vadd.f32 %v4622, %v4646
    %v4759 = vadd.f32 %v4623, %v4647
    %v4760 = vadd.f32 %v4624, %v4648
    %v4761 = vadd.f32 %v4625, %v4649
    %v4762 = vadd.f32 %v4626, %v4650
    %v4763 = vadd.f32 %v4627, %v4651
    %v4764 = vadd.f32 %v4628, %v4652
    %v4765 = vadd.f32 %v4629, %v4653
    %v4766 = vadd.f32 %v4630, %v4646
    %v4767 = vadd.f32 %v4631, %v4647
    %v4768 = vadd.f32 %v4632, %v4648
    %v4769 = vadd.f32 %v4633, %v4649
    %v4770 = vadd.f32 %v4634, %v4650
    %v4771 = vadd.f32 %v4635, %v4651
    %v4772 = vadd.f32 %v4636, %v4652
    %v4773 = vadd.f32 %v4637, %v4653
    %v4774 = vadd.f32 %v4638, %v4646
    %v4775 = vadd.f32 %v4639, %v4647
    %v4776 = vadd.f32 %v4640, %v4648
    %v4777 = vadd.f32 %v4641, %v4649
    %v4778 = vadd.f32 %v4642, %v4650
    %v4779 = vadd.f32 %v4643, %v4651
    %v4780 = vadd.f32 %v4644, %v4652
    %v4781 = vadd.f32 %v4645, %v4653
    %v4782 = vpack.c.bf16 %v4655, %v4654
    %v4783 = vpack.c.bf16 %v4657, %v4656
    %v4784 = vpack.c.bf16 %v4659, %v4658
    %v4785 = vpack.c.bf16 %v4661, %v4660
    %v4786 = vpack.c.bf16 %v4663, %v4662
    %v4787 = vpack.c.bf16 %v4665, %v4664
    %v4788 = vpack.c.bf16 %v4667, %v4666
    %v4789 = vpack.c.bf16 %v4669, %v4668
    %v4790 = vpack.c.bf16 %v4671, %v4670
    %v4791 = vpack.c.bf16 %v4673, %v4672
    %v4792 = vpack.c.bf16 %v4675, %v4674
    %v4793 = vpack.c.bf16 %v4677, %v4676
    %v4794 = vpack.c.bf16 %v4679, %v4678
    %v4795 = vpack.c.bf16 %v4681, %v4680
    %v4796 = vpack.c.bf16 %v4683, %v4682
    %v4797 = vpack.c.bf16 %v4685, %v4684
    %v4798 = vpack.c.bf16 %v4687, %v4686
    %v4799 = vpack.c.bf16 %v4689, %v4688
    %v4800 = vpack.c.bf16 %v4691, %v4690
    %v4801 = vpack.c.bf16 %v4693, %v4692
    %v4802 = vpack.c.bf16 %v4695, %v4694
    %v4803 = vpack.c.bf16 %v4697, %v4696
    %v4804 = vpack.c.bf16 %v4699, %v4698
    %v4805 = vpack.c.bf16 %v4701, %v4700
    %v4806 = vpack.c.bf16 %v4703, %v4702
    %v4807 = vpack.c.bf16 %v4705, %v4704
    %v4808 = vpack.c.bf16 %v4707, %v4706
    %v4809 = vpack.c.bf16 %v4709, %v4708
    %v4810 = vpack.c.bf16 %v4711, %v4710
    %v4811 = vpack.c.bf16 %v4713, %v4712
    %v4812 = vpack.c.bf16 %v4715, %v4714
    %v4813 = vpack.c.bf16 %v4717, %v4716
    %v4814 = vpack.c.bf16 %v4719, %v4718
    %v4815 = vpack.c.bf16 %v4721, %v4720
    %v4816 = vpack.c.bf16 %v4723, %v4722
    %v4817 = vpack.c.bf16 %v4725, %v4724
    %v4818 = vpack.c.bf16 %v4727, %v4726
    %v4819 = vpack.c.bf16 %v4729, %v4728
    %v4820 = vpack.c.bf16 %v4731, %v4730
    %v4821 = vpack.c.bf16 %v4733, %v4732
    %v4822 = vpack.c.bf16 %v4735, %v4734
    %v4823 = vpack.c.bf16 %v4737, %v4736
    %v4824 = vpack.c.bf16 %v4739, %v4738
    %v4825 = vpack.c.bf16 %v4741, %v4740
    %v4826 = vpack.c.bf16 %v4743, %v4742
    %v4827 = vpack.c.bf16 %v4745, %v4744
    %v4828 = vpack.c.bf16 %v4747, %v4746
    %v4829 = vpack.c.bf16 %v4749, %v4748
    %v4830 = vpack.c.bf16 %v4751, %v4750
    %v4831 = vpack.c.bf16 %v4753, %v4752
    %v4832 = vpack.c.bf16 %v4755, %v4754
    %v4833 = vpack.c.bf16 %v4757, %v4756
    %v4834 = vpack.c.bf16 %v4759, %v4758
    %v4835 = vpack.c.bf16 %v4761, %v4760
    %v4836 = vpack.c.bf16 %v4763, %v4762
    %v4837 = vpack.c.bf16 %v4765, %v4764
    %v4838 = vpack.c.bf16 %v4767, %v4766
    %v4839 = vpack.c.bf16 %v4769, %v4768
    %v4840 = vpack.c.bf16 %v4771, %v4770
    %v4841 = vpack.c.bf16 %v4773, %v4772
    %v4842 = vpack.c.bf16 %v4775, %v4774
    %v4843 = vpack.c.bf16 %v4777, %v4776
    %v4844 = vpack.c.bf16 %v4779, %v4778
    %v4845 = vpack.c.bf16 %v4781, %v4780
    %v4846 = vunpack.c.l.bf16 %v4782
    %v4847 = vunpack.c.h.bf16 %v4782
    %v4848 = vunpack.c.l.bf16 %v4783
    %v4849 = vunpack.c.h.bf16 %v4783
    %v4850 = vunpack.c.l.bf16 %v4784
    %v4851 = vunpack.c.h.bf16 %v4784
    %v4852 = vunpack.c.l.bf16 %v4785
    %v4853 = vunpack.c.h.bf16 %v4785
    %v4854 = vunpack.c.l.bf16 %v4786
    %v4855 = vunpack.c.h.bf16 %v4786
    %v4856 = vunpack.c.l.bf16 %v4787
    %v4857 = vunpack.c.h.bf16 %v4787
    %v4858 = vunpack.c.l.bf16 %v4788
    %v4859 = vunpack.c.h.bf16 %v4788
    %v4860 = vunpack.c.l.bf16 %v4789
    %v4861 = vunpack.c.h.bf16 %v4789
    %v4862 = vunpack.c.l.bf16 %v4790
    %v4863 = vunpack.c.h.bf16 %v4790
    %v4864 = vunpack.c.l.bf16 %v4791
    %v4865 = vunpack.c.h.bf16 %v4791
    %v4866 = vunpack.c.l.bf16 %v4792
    %v4867 = vunpack.c.h.bf16 %v4792
    %v4868 = vunpack.c.l.bf16 %v4793
    %v4869 = vunpack.c.h.bf16 %v4793
    %v4870 = vunpack.c.l.bf16 %v4794
    %v4871 = vunpack.c.h.bf16 %v4794
    %v4872 = vunpack.c.l.bf16 %v4795
    %v4873 = vunpack.c.h.bf16 %v4795
    %v4874 = vunpack.c.l.bf16 %v4796
    %v4875 = vunpack.c.h.bf16 %v4796
    %v4876 = vunpack.c.l.bf16 %v4797
    %v4877 = vunpack.c.h.bf16 %v4797
    %v4878 = vunpack.c.l.bf16 %v4798
    %v4879 = vunpack.c.h.bf16 %v4798
    %v4880 = vunpack.c.l.bf16 %v4799
    %v4881 = vunpack.c.h.bf16 %v4799
    %v4882 = vunpack.c.l.bf16 %v4800
    %v4883 = vunpack.c.h.bf16 %v4800
    %v4884 = vunpack.c.l.bf16 %v4801
    %v4885 = vunpack.c.h.bf16 %v4801
    %v4886 = vunpack.c.l.bf16 %v4802
    %v4887 = vunpack.c.h.bf16 %v4802
    %v4888 = vunpack.c.l.bf16 %v4803
    %v4889 = vunpack.c.h.bf16 %v4803
    %v4890 = vunpack.c.l.bf16 %v4804
    %v4891 = vunpack.c.h.bf16 %v4804
    %v4892 = vunpack.c.l.bf16 %v4805
    %v4893 = vunpack.c.h.bf16 %v4805
    %v4894 = vunpack.c.l.bf16 %v4806
    %v4895 = vunpack.c.h.bf16 %v4806
    %v4896 = vunpack.c.l.bf16 %v4807
    %v4897 = vunpack.c.h.bf16 %v4807
    %v4898 = vunpack.c.l.bf16 %v4808
    %v4899 = vunpack.c.h.bf16 %v4808
    %v4900 = vunpack.c.l.bf16 %v4809
    %v4901 = vunpack.c.h.bf16 %v4809
    %v4902 = vunpack.c.l.bf16 %v4810
    %v4903 = vunpack.c.h.bf16 %v4810
    %v4904 = vunpack.c.l.bf16 %v4811
    %v4905 = vunpack.c.h.bf16 %v4811
    %v4906 = vunpack.c.l.bf16 %v4812
    %v4907 = vunpack.c.h.bf16 %v4812
    %v4908 = vunpack.c.l.bf16 %v4813
    %v4909 = vunpack.c.h.bf16 %v4813
    %v4910 = vunpack.c.l.bf16 %v4814
    %v4911 = vunpack.c.h.bf16 %v4814
    %v4912 = vunpack.c.l.bf16 %v4815
    %v4913 = vunpack.c.h.bf16 %v4815
    %v4914 = vunpack.c.l.bf16 %v4816
    %v4915 = vunpack.c.h.bf16 %v4816
    %v4916 = vunpack.c.l.bf16 %v4817
    %v4917 = vunpack.c.h.bf16 %v4817
    %v4918 = vunpack.c.l.bf16 %v4818
    %v4919 = vunpack.c.h.bf16 %v4818
    %v4920 = vunpack.c.l.bf16 %v4819
    %v4921 = vunpack.c.h.bf16 %v4819
    %v4922 = vunpack.c.l.bf16 %v4820
    %v4923 = vunpack.c.h.bf16 %v4820
    %v4924 = vunpack.c.l.bf16 %v4821
    %v4925 = vunpack.c.h.bf16 %v4821
    %v4926 = vunpack.c.l.bf16 %v4822
    %v4927 = vunpack.c.h.bf16 %v4822
    %v4928 = vunpack.c.l.bf16 %v4823
    %v4929 = vunpack.c.h.bf16 %v4823
    %v4930 = vunpack.c.l.bf16 %v4824
    %v4931 = vunpack.c.h.bf16 %v4824
    %v4932 = vunpack.c.l.bf16 %v4825
    %v4933 = vunpack.c.h.bf16 %v4825
    %v4934 = vunpack.c.l.bf16 %v4826
    %v4935 = vunpack.c.h.bf16 %v4826
    %v4936 = vunpack.c.l.bf16 %v4827
    %v4937 = vunpack.c.h.bf16 %v4827
    %v4938 = vunpack.c.l.bf16 %v4828
    %v4939 = vunpack.c.h.bf16 %v4828
    %v4940 = vunpack.c.l.bf16 %v4829
    %v4941 = vunpack.c.h.bf16 %v4829
    %v4942 = vunpack.c.l.bf16 %v4830
    %v4943 = vunpack.c.h.bf16 %v4830
    %v4944 = vunpack.c.l.bf16 %v4831
    %v4945 = vunpack.c.h.bf16 %v4831
    %v4946 = vunpack.c.l.bf16 %v4832
    %v4947 = vunpack.c.h.bf16 %v4832
    %v4948 = vunpack.c.l.bf16 %v4833
    %v4949 = vunpack.c.h.bf16 %v4833
    %v4950 = vunpack.c.l.bf16 %v4834
    %v4951 = vunpack.c.h.bf16 %v4834
    %v4952 = vunpack.c.l.bf16 %v4835
    %v4953 = vunpack.c.h.bf16 %v4835
    %v4954 = vunpack.c.l.bf16 %v4836
    %v4955 = vunpack.c.h.bf16 %v4836
    %v4956 = vunpack.c.l.bf16 %v4837
    %v4957 = vunpack.c.h.bf16 %v4837
    %v4958 = vunpack.c.l.bf16 %v4838
    %v4959 = vunpack.c.h.bf16 %v4838
    %v4960 = vunpack.c.l.bf16 %v4839
    %v4961 = vunpack.c.h.bf16 %v4839
    %v4962 = vunpack.c.l.bf16 %v4840
    %v4963 = vunpack.c.h.bf16 %v4840
    %v4964 = vunpack.c.l.bf16 %v4841
    %v4965 = vunpack.c.h.bf16 %v4841
    %v4966 = vunpack.c.l.bf16 %v4842
    %v4967 = vunpack.c.h.bf16 %v4842
    %v4968 = vunpack.c.l.bf16 %v4843
    %v4969 = vunpack.c.h.bf16 %v4843
    %v4970 = vunpack.c.l.bf16 %v4844
    %v4971 = vunpack.c.h.bf16 %v4844
    %v4972 = vunpack.c.l.bf16 %v4845
    %v4973 = vunpack.c.h.bf16 %v4845
    %v4974 = vmax.f32 %v4846, 0.0
    %v4975 = vmax.f32 %v4847, 0.0
    %v4976 = vmax.f32 %v4848, 0.0
    %v4977 = vmax.f32 %v4849, 0.0
    %v4978 = vmax.f32 %v4850, 0.0
    %v4979 = vmax.f32 %v4851, 0.0
    %v4980 = vmax.f32 %v4852, 0.0
    %v4981 = vmax.f32 %v4853, 0.0
    %v4982 = vmax.f32 %v4854, 0.0
    %v4983 = vmax.f32 %v4855, 0.0
    %v4984 = vmax.f32 %v4856, 0.0
    %v4985 = vmax.f32 %v4857, 0.0
    %v4986 = vmax.f32 %v4858, 0.0
    %v4987 = vmax.f32 %v4859, 0.0
    %v4988 = vmax.f32 %v4860, 0.0
    %v4989 = vmax.f32 %v4861, 0.0
    %v4990 = vmax.f32 %v4862, 0.0
    %v4991 = vmax.f32 %v4863, 0.0
    %v4992 = vmax.f32 %v4864, 0.0
    %v4993 = vmax.f32 %v4865, 0.0
    %v4994 = vmax.f32 %v4866, 0.0
    %v4995 = vmax.f32 %v4867, 0.0
    %v4996 = vmax.f32 %v4868, 0.0
    %v4997 = vmax.f32 %v4869, 0.0
    %v4998 = vmax.f32 %v4870, 0.0
    %v4999 = vmax.f32 %v4871, 0.0
    %v5000 = vmax.f32 %v4872, 0.0
    %v5001 = vmax.f32 %v4873, 0.0
    %v5002 = vmax.f32 %v4874, 0.0
    %v5003 = vmax.f32 %v4875, 0.0
    %v5004 = vmax.f32 %v4876, 0.0
    %v5005 = vmax.f32 %v4877, 0.0
    %v5006 = vmax.f32 %v4878, 0.0
    %v5007 = vmax.f32 %v4879, 0.0
    %v5008 = vmax.f32 %v4880, 0.0
    %v5009 = vmax.f32 %v4881, 0.0
    %v5010 = vmax.f32 %v4882, 0.0
    %v5011 = vmax.f32 %v4883, 0.0
    %v5012 = vmax.f32 %v4884, 0.0
    %v5013 = vmax.f32 %v4885, 0.0
    %v5014 = vmax.f32 %v4886, 0.0
    %v5015 = vmax.f32 %v4887, 0.0
    %v5016 = vmax.f32 %v4888, 0.0
    %v5017 = vmax.f32 %v4889, 0.0
    %v5018 = vmax.f32 %v4890, 0.0
    %v5019 = vmax.f32 %v4891, 0.0
    %v5020 = vmax.f32 %v4892, 0.0
    %v5021 = vmax.f32 %v4893, 0.0
    %v5022 = vmax.f32 %v4894, 0.0
    %v5023 = vmax.f32 %v4895, 0.0
    %v5024 = vmax.f32 %v4896, 0.0
    %v5025 = vmax.f32 %v4897, 0.0
    %v5026 = vmax.f32 %v4898, 0.0
    %v5027 = vmax.f32 %v4899, 0.0
    %v5028 = vmax.f32 %v4900, 0.0
    %v5029 = vmax.f32 %v4901, 0.0
    %v5030 = vmax.f32 %v4902, 0.0
    %v5031 = vmax.f32 %v4903, 0.0
    %v5032 = vmax.f32 %v4904, 0.0
    %v5033 = vmax.f32 %v4905, 0.0
    %v5034 = vmax.f32 %v4906, 0.0
    %v5035 = vmax.f32 %v4907, 0.0
    %v5036 = vmax.f32 %v4908, 0.0
    %v5037 = vmax.f32 %v4909, 0.0
    %v5038 = vmax.f32 %v4910, 0.0
    %v5039 = vmax.f32 %v4911, 0.0
    %v5040 = vmax.f32 %v4912, 0.0
    %v5041 = vmax.f32 %v4913, 0.0
    %v5042 = vmax.f32 %v4914, 0.0
    %v5043 = vmax.f32 %v4915, 0.0
    %v5044 = vmax.f32 %v4916, 0.0
    %v5045 = vmax.f32 %v4917, 0.0
    %v5046 = vmax.f32 %v4918, 0.0
    %v5047 = vmax.f32 %v4919, 0.0
    %v5048 = vmax.f32 %v4920, 0.0
    %v5049 = vmax.f32 %v4921, 0.0
    %v5050 = vmax.f32 %v4922, 0.0
    %v5051 = vmax.f32 %v4923, 0.0
    %v5052 = vmax.f32 %v4924, 0.0
    %v5053 = vmax.f32 %v4925, 0.0
    %v5054 = vmax.f32 %v4926, 0.0
    %v5055 = vmax.f32 %v4927, 0.0
    %v5056 = vmax.f32 %v4928, 0.0
    %v5057 = vmax.f32 %v4929, 0.0
    %v5058 = vmax.f32 %v4930, 0.0
    %v5059 = vmax.f32 %v4931, 0.0
    %v5060 = vmax.f32 %v4932, 0.0
    %v5061 = vmax.f32 %v4933, 0.0
    %v5062 = vmax.f32 %v4934, 0.0
    %v5063 = vmax.f32 %v4935, 0.0
    %v5064 = vmax.f32 %v4936, 0.0
    %v5065 = vmax.f32 %v4937, 0.0
    %v5066 = vmax.f32 %v4938, 0.0
    %v5067 = vmax.f32 %v4939, 0.0
    %v5068 = vmax.f32 %v4940, 0.0
    %v5069 = vmax.f32 %v4941, 0.0
    %v5070 = vmax.f32 %v4942, 0.0
    %v5071 = vmax.f32 %v4943, 0.0
    %v5072 = vmax.f32 %v4944, 0.0
    %v5073 = vmax.f32 %v4945, 0.0
    %v5074 = vmax.f32 %v4946, 0.0
    %v5075 = vmax.f32 %v4947, 0.0
    %v5076 = vmax.f32 %v4948, 0.0
    %v5077 = vmax.f32 %v4949, 0.0
    %v5078 = vmax.f32 %v4950, 0.0
    %v5079 = vmax.f32 %v4951, 0.0
    %v5080 = vmax.f32 %v4952, 0.0
    %v5081 = vmax.f32 %v4953, 0.0
    %v5082 = vmax.f32 %v4954, 0.0
    %v5083 = vmax.f32 %v4955, 0.0
    %v5084 = vmax.f32 %v4956, 0.0
    %v5085 = vmax.f32 %v4957, 0.0
    %v5086 = vmax.f32 %v4958, 0.0
    %v5087 = vmax.f32 %v4959, 0.0
    %v5088 = vmax.f32 %v4960, 0.0
    %v5089 = vmax.f32 %v4961, 0.0
    %v5090 = vmax.f32 %v4962, 0.0
    %v5091 = vmax.f32 %v4963, 0.0
    %v5092 = vmax.f32 %v4964, 0.0
    %v5093 = vmax.f32 %v4965, 0.0
    %v5094 = vmax.f32 %v4966, 0.0
    %v5095 = vmax.f32 %v4967, 0.0
    %v5096 = vmax.f32 %v4968, 0.0
    %v5097 = vmax.f32 %v4969, 0.0
    %v5098 = vmax.f32 %v4970, 0.0
    %v5099 = vmax.f32 %v4971, 0.0
    %v5100 = vmax.f32 %v4972, 0.0
    %v5101 = vmax.f32 %v4973, 0.0
    %v5102 = vpack.c.bf16 %v4975, %v4974
    %v5103 = vpack.c.bf16 %v4977, %v4976
    %v5104 = vpack.c.bf16 %v4979, %v4978
    %v5105 = vpack.c.bf16 %v4981, %v4980
    %v5106 = vpack.c.bf16 %v4983, %v4982
    %v5107 = vpack.c.bf16 %v4985, %v4984
    %v5108 = vpack.c.bf16 %v4987, %v4986
    %v5109 = vpack.c.bf16 %v4989, %v4988
    %v5110 = vpack.c.bf16 %v4991, %v4990
    %v5111 = vpack.c.bf16 %v4993, %v4992
    %v5112 = vpack.c.bf16 %v4995, %v4994
    %v5113 = vpack.c.bf16 %v4997, %v4996
    %v5114 = vpack.c.bf16 %v4999, %v4998
    %v5115 = vpack.c.bf16 %v5001, %v5000
    %v5116 = vpack.c.bf16 %v5003, %v5002
    %v5117 = vpack.c.bf16 %v5005, %v5004
    %v5118 = vpack.c.bf16 %v5007, %v5006
    %v5119 = vpack.c.bf16 %v5009, %v5008
    %v5120 = vpack.c.bf16 %v5011, %v5010
    %v5121 = vpack.c.bf16 %v5013, %v5012
    %v5122 = vpack.c.bf16 %v5015, %v5014
    %v5123 = vpack.c.bf16 %v5017, %v5016
    %v5124 = vpack.c.bf16 %v5019, %v5018
    %v5125 = vpack.c.bf16 %v5021, %v5020
    %v5126 = vpack.c.bf16 %v5023, %v5022
    %v5127 = vpack.c.bf16 %v5025, %v5024
    %v5128 = vpack.c.bf16 %v5027, %v5026
    %v5129 = vpack.c.bf16 %v5029, %v5028
    %v5130 = vpack.c.bf16 %v5031, %v5030
    %v5131 = vpack.c.bf16 %v5033, %v5032
    %v5132 = vpack.c.bf16 %v5035, %v5034
    %v5133 = vpack.c.bf16 %v5037, %v5036
    %v5134 = vpack.c.bf16 %v5039, %v5038
    %v5135 = vpack.c.bf16 %v5041, %v5040
    %v5136 = vpack.c.bf16 %v5043, %v5042
    %v5137 = vpack.c.bf16 %v5045, %v5044
    %v5138 = vpack.c.bf16 %v5047, %v5046
    %v5139 = vpack.c.bf16 %v5049, %v5048
    %v5140 = vpack.c.bf16 %v5051, %v5050
    %v5141 = vpack.c.bf16 %v5053, %v5052
    %v5142 = vpack.c.bf16 %v5055, %v5054
    %v5143 = vpack.c.bf16 %v5057, %v5056
    %v5144 = vpack.c.bf16 %v5059, %v5058
    %v5145 = vpack.c.bf16 %v5061, %v5060
    %v5146 = vpack.c.bf16 %v5063, %v5062
    %v5147 = vpack.c.bf16 %v5065, %v5064
    %v5148 = vpack.c.bf16 %v5067, %v5066
    %v5149 = vpack.c.bf16 %v5069, %v5068
    %v5150 = vpack.c.bf16 %v5071, %v5070
    %v5151 = vpack.c.bf16 %v5073, %v5072
    %v5152 = vpack.c.bf16 %v5075, %v5074
    %v5153 = vpack.c.bf16 %v5077, %v5076
    %v5154 = vpack.c.bf16 %v5079, %v5078
    %v5155 = vpack.c.bf16 %v5081, %v5080
    %v5156 = vpack.c.bf16 %v5083, %v5082
    %v5157 = vpack.c.bf16 %v5085, %v5084
    %v5158 = vpack.c.bf16 %v5087, %v5086
    %v5159 = vpack.c.bf16 %v5089, %v5088
    %v5160 = vpack.c.bf16 %v5091, %v5090
    %v5161 = vpack.c.bf16 %v5093, %v5092
    %v5162 = vpack.c.bf16 %v5095, %v5094
    %v5163 = vpack.c.bf16 %v5097, %v5096
    %v5164 = vpack.c.bf16 %v5099, %v5098
    %v5165 = vpack.c.bf16 %v5101, %v5100
    %v5166 = vld [vmem:[#allocation12] sm:$0xff]
    %5168 = vst [vmem:[#allocation1] ss:$9 sm:$0xff] %v5166
    %v5169 = vld [vmem:[#allocation1] sm:$0xff]
    %v5170 = vld [vmem:[#allocation1 + $0x9] sm:$0xff]
    %v5171 = vld [vmem:[#allocation1 + $0x12] sm:$0xff]
    %v5172 = vld [vmem:[#allocation1 + $0x1b] sm:$0xff]
    %v5173 = vld [vmem:[#allocation1 + $0x24] sm:$0xff]
    %v5174 = vld [vmem:[#allocation1 + $0x2d] sm:$0xff]
    %v5175 = vld [vmem:[#allocation1 + $0x36] sm:$0xff]
    %v5176 = vld [vmem:[#allocation1 + $0x3f] sm:$0xff]
    %v5177 = vpack.i.b16 %v5169, %v5169
    %v5179 = vperm.slane %v5177, 0
    %v5180 = vpack.i.b16 %v5170, %v5170
    %v5182 = vperm.slane %v5180, 0
    %v5183 = vpack.i.b16 %v5171, %v5171
    %v5185 = vperm.slane %v5183, 0
    %v5186 = vpack.i.b16 %v5172, %v5172
    %v5188 = vperm.slane %v5186, 0
    %v5189 = vpack.i.b16 %v5173, %v5173
    %v5191 = vperm.slane %v5189, 0
    %v5192 = vpack.i.b16 %v5174, %v5174
    %v5194 = vperm.slane %v5192, 0
    %v5195 = vpack.i.b16 %v5175, %v5175
    %v5197 = vperm.slane %v5195, 0
    %v5198 = vpack.i.b16 %v5176, %v5176
    %v5200 = vperm.slane %v5198, 0
    %v5201 = vunpack.c.l.bf16 %v5102
    %v5202 = vunpack.c.h.bf16 %v5102
    %v5203 = vunpack.c.l.bf16 %v5103
    %v5204 = vunpack.c.h.bf16 %v5103
    %v5205 = vunpack.c.l.bf16 %v5104
    %v5206 = vunpack.c.h.bf16 %v5104
    %v5207 = vunpack.c.l.bf16 %v5105
    %v5208 = vunpack.c.h.bf16 %v5105
    %v5209 = vunpack.c.l.bf16 %v5106
    %v5210 = vunpack.c.h.bf16 %v5106
    %v5211 = vunpack.c.l.bf16 %v5107
    %v5212 = vunpack.c.h.bf16 %v5107
    %v5213 = vunpack.c.l.bf16 %v5108
    %v5214 = vunpack.c.h.bf16 %v5108
    %v5215 = vunpack.c.l.bf16 %v5109
    %v5216 = vunpack.c.h.bf16 %v5109
    %v5217 = vunpack.c.l.bf16 %v5110
    %v5218 = vunpack.c.h.bf16 %v5110
    %v5219 = vunpack.c.l.bf16 %v5111
    %v5220 = vunpack.c.h.bf16 %v5111
    %v5221 = vunpack.c.l.bf16 %v5112
    %v5222 = vunpack.c.h.bf16 %v5112
    %v5223 = vunpack.c.l.bf16 %v5113
    %v5224 = vunpack.c.h.bf16 %v5113
    %v5225 = vunpack.c.l.bf16 %v5114
    %v5226 = vunpack.c.h.bf16 %v5114
    %v5227 = vunpack.c.l.bf16 %v5115
    %v5228 = vunpack.c.h.bf16 %v5115
    %v5229 = vunpack.c.l.bf16 %v5116
    %v5230 = vunpack.c.h.bf16 %v5116
    %v5231 = vunpack.c.l.bf16 %v5117
    %v5232 = vunpack.c.h.bf16 %v5117
    %v5233 = vunpack.c.l.bf16 %v5118
    %v5234 = vunpack.c.h.bf16 %v5118
    %v5235 = vunpack.c.l.bf16 %v5119
    %v5236 = vunpack.c.h.bf16 %v5119
    %v5237 = vunpack.c.l.bf16 %v5120
    %v5238 = vunpack.c.h.bf16 %v5120
    %v5239 = vunpack.c.l.bf16 %v5121
    %v5240 = vunpack.c.h.bf16 %v5121
    %v5241 = vunpack.c.l.bf16 %v5122
    %v5242 = vunpack.c.h.bf16 %v5122
    %v5243 = vunpack.c.l.bf16 %v5123
    %v5244 = vunpack.c.h.bf16 %v5123
    %v5245 = vunpack.c.l.bf16 %v5124
    %v5246 = vunpack.c.h.bf16 %v5124
    %v5247 = vunpack.c.l.bf16 %v5125
    %v5248 = vunpack.c.h.bf16 %v5125
    %v5249 = vunpack.c.l.bf16 %v5126
    %v5250 = vunpack.c.h.bf16 %v5126
    %v5251 = vunpack.c.l.bf16 %v5127
    %v5252 = vunpack.c.h.bf16 %v5127
    %v5253 = vunpack.c.l.bf16 %v5128
    %v5254 = vunpack.c.h.bf16 %v5128
    %v5255 = vunpack.c.l.bf16 %v5129
    %v5256 = vunpack.c.h.bf16 %v5129
    %v5257 = vunpack.c.l.bf16 %v5130
    %v5258 = vunpack.c.h.bf16 %v5130
    %v5259 = vunpack.c.l.bf16 %v5131
    %v5260 = vunpack.c.h.bf16 %v5131
    %v5261 = vunpack.c.l.bf16 %v5132
    %v5262 = vunpack.c.h.bf16 %v5132
    %v5263 = vunpack.c.l.bf16 %v5133
    %v5264 = vunpack.c.h.bf16 %v5133
    %v5265 = vunpack.c.l.bf16 %v5134
    %v5266 = vunpack.c.h.bf16 %v5134
    %v5267 = vunpack.c.l.bf16 %v5135
    %v5268 = vunpack.c.h.bf16 %v5135
    %v5269 = vunpack.c.l.bf16 %v5136
    %v5270 = vunpack.c.h.bf16 %v5136
    %v5271 = vunpack.c.l.bf16 %v5137
    %v5272 = vunpack.c.h.bf16 %v5137
    %v5273 = vunpack.c.l.bf16 %v5138
    %v5274 = vunpack.c.h.bf16 %v5138
    %v5275 = vunpack.c.l.bf16 %v5139
    %v5276 = vunpack.c.h.bf16 %v5139
    %v5277 = vunpack.c.l.bf16 %v5140
    %v5278 = vunpack.c.h.bf16 %v5140
    %v5279 = vunpack.c.l.bf16 %v5141
    %v5280 = vunpack.c.h.bf16 %v5141
    %v5281 = vunpack.c.l.bf16 %v5142
    %v5282 = vunpack.c.h.bf16 %v5142
    %v5283 = vunpack.c.l.bf16 %v5143
    %v5284 = vunpack.c.h.bf16 %v5143
    %v5285 = vunpack.c.l.bf16 %v5144
    %v5286 = vunpack.c.h.bf16 %v5144
    %v5287 = vunpack.c.l.bf16 %v5145
    %v5288 = vunpack.c.h.bf16 %v5145
    %v5289 = vunpack.c.l.bf16 %v5146
    %v5290 = vunpack.c.h.bf16 %v5146
    %v5291 = vunpack.c.l.bf16 %v5147
    %v5292 = vunpack.c.h.bf16 %v5147
    %v5293 = vunpack.c.l.bf16 %v5148
    %v5294 = vunpack.c.h.bf16 %v5148
    %v5295 = vunpack.c.l.bf16 %v5149
    %v5296 = vunpack.c.h.bf16 %v5149
    %v5297 = vunpack.c.l.bf16 %v5150
    %v5298 = vunpack.c.h.bf16 %v5150
    %v5299 = vunpack.c.l.bf16 %v5151
    %v5300 = vunpack.c.h.bf16 %v5151
    %v5301 = vunpack.c.l.bf16 %v5152
    %v5302 = vunpack.c.h.bf16 %v5152
    %v5303 = vunpack.c.l.bf16 %v5153
    %v5304 = vunpack.c.h.bf16 %v5153
    %v5305 = vunpack.c.l.bf16 %v5154
    %v5306 = vunpack.c.h.bf16 %v5154
    %v5307 = vunpack.c.l.bf16 %v5155
    %v5308 = vunpack.c.h.bf16 %v5155
    %v5309 = vunpack.c.l.bf16 %v5156
    %v5310 = vunpack.c.h.bf16 %v5156
    %v5311 = vunpack.c.l.bf16 %v5157
    %v5312 = vunpack.c.h.bf16 %v5157
    %v5313 = vunpack.c.l.bf16 %v5158
    %v5314 = vunpack.c.h.bf16 %v5158
    %v5315 = vunpack.c.l.bf16 %v5159
    %v5316 = vunpack.c.h.bf16 %v5159
    %v5317 = vunpack.c.l.bf16 %v5160
    %v5318 = vunpack.c.h.bf16 %v5160
    %v5319 = vunpack.c.l.bf16 %v5161
    %v5320 = vunpack.c.h.bf16 %v5161
    %v5321 = vunpack.c.l.bf16 %v5162
    %v5322 = vunpack.c.h.bf16 %v5162
    %v5323 = vunpack.c.l.bf16 %v5163
    %v5324 = vunpack.c.h.bf16 %v5163
    %v5325 = vunpack.c.l.bf16 %v5164
    %v5326 = vunpack.c.h.bf16 %v5164
    %v5327 = vunpack.c.l.bf16 %v5165
    %v5328 = vunpack.c.h.bf16 %v5165
    %v5329 = vunpack.c.l.bf16 %v5179
    %v5330 = vunpack.c.l.bf16 %v5182
    %v5331 = vunpack.c.l.bf16 %v5185
    %v5332 = vunpack.c.l.bf16 %v5188
    %v5333 = vunpack.c.l.bf16 %v5191
    %v5334 = vunpack.c.l.bf16 %v5194
    %v5335 = vunpack.c.l.bf16 %v5197
    %v5336 = vunpack.c.l.bf16 %v5200
    %v5337 = vmul.f32 %v5201, %v5329
    %v5338 = vmul.f32 %v5202, %v5330
    %v5339 = vmul.f32 %v5203, %v5331
    %v5340 = vmul.f32 %v5204, %v5332
    %v5341 = vmul.f32 %v5205, %v5333
    %v5342 = vmul.f32 %v5206, %v5334
    %v5343 = vmul.f32 %v5207, %v5335
    %v5344 = vmul.f32 %v5208, %v5336
    %v5345 = vmul.f32 %v5209, %v5329
    %v5346 = vmul.f32 %v5210, %v5330
    %v5347 = vmul.f32 %v5211, %v5331
    %v5348 = vmul.f32 %v5212, %v5332
    %v5349 = vmul.f32 %v5213, %v5333
    %v5350 = vmul.f32 %v5214, %v5334
    %v5351 = vmul.f32 %v5215, %v5335
    %v5352 = vmul.f32 %v5216, %v5336
    %v5353 = vmul.f32 %v5217, %v5329
    %v5354 = vmul.f32 %v5218, %v5330
    %v5355 = vmul.f32 %v5219, %v5331
    %v5356 = vmul.f32 %v5220, %v5332
    %v5357 = vmul.f32 %v5221, %v5333
    %v5358 = vmul.f32 %v5222, %v5334
    %v5359 = vmul.f32 %v5223, %v5335
    %v5360 = vmul.f32 %v5224, %v5336
    %v5361 = vmul.f32 %v5225, %v5329
    %v5362 = vmul.f32 %v5226, %v5330
    %v5363 = vmul.f32 %v5227, %v5331
    %v5364 = vmul.f32 %v5228, %v5332
    %v5365 = vmul.f32 %v5229, %v5333
    %v5366 = vmul.f32 %v5230, %v5334
    %v5367 = vmul.f32 %v5231, %v5335
    %v5368 = vmul.f32 %v5232, %v5336
    %v5369 = vmul.f32 %v5233, %v5329
    %v5370 = vmul.f32 %v5234, %v5330
    %v5371 = vmul.f32 %v5235, %v5331
    %v5372 = vmul.f32 %v5236, %v5332
    %v5373 = vmul.f32 %v5237, %v5333
    %v5374 = vmul.f32 %v5238, %v5334
    %v5375 = vmul.f32 %v5239, %v5335
    %v5376 = vmul.f32 %v5240, %v5336
    %v5377 = vmul.f32 %v5241, %v5329
    %v5378 = vmul.f32 %v5242, %v5330
    %v5379 = vmul.f32 %v5243, %v5331
    %v5380 = vmul.f32 %v5244, %v5332
    %v5381 = vmul.f32 %v5245, %v5333
    %v5382 = vmul.f32 %v5246, %v5334
    %v5383 = vmul.f32 %v5247, %v5335
    %v5384 = vmul.f32 %v5248, %v5336
    %v5385 = vmul.f32 %v5249, %v5329
    %v5386 = vmul.f32 %v5250, %v5330
    %v5387 = vmul.f32 %v5251, %v5331
    %v5388 = vmul.f32 %v5252, %v5332
    %v5389 = vmul.f32 %v5253, %v5333
    %v5390 = vmul.f32 %v5254, %v5334
    %v5391 = vmul.f32 %v5255, %v5335
    %v5392 = vmul.f32 %v5256, %v5336
    %v5393 = vmul.f32 %v5257, %v5329
    %v5394 = vmul.f32 %v5258, %v5330
    %v5395 = vmul.f32 %v5259, %v5331
    %v5396 = vmul.f32 %v5260, %v5332
    %v5397 = vmul.f32 %v5261, %v5333
    %v5398 = vmul.f32 %v5262, %v5334
    %v5399 = vmul.f32 %v5263, %v5335
    %v5400 = vmul.f32 %v5264, %v5336
    %v5401 = vmul.f32 %v5265, %v5329
    %v5402 = vmul.f32 %v5266, %v5330
    %v5403 = vmul.f32 %v5267, %v5331
    %v5404 = vmul.f32 %v5268, %v5332
    %v5405 = vmul.f32 %v5269, %v5333
    %v5406 = vmul.f32 %v5270, %v5334
    %v5407 = vmul.f32 %v5271, %v5335
    %v5408 = vmul.f32 %v5272, %v5336
    %v5409 = vmul.f32 %v5273, %v5329
    %v5410 = vmul.f32 %v5274, %v5330
    %v5411 = vmul.f32 %v5275, %v5331
    %v5412 = vmul.f32 %v5276, %v5332
    %v5413 = vmul.f32 %v5277, %v5333
    %v5414 = vmul.f32 %v5278, %v5334
    %v5415 = vmul.f32 %v5279, %v5335
    %v5416 = vmul.f32 %v5280, %v5336
    %v5417 = vmul.f32 %v5281, %v5329
    %v5418 = vmul.f32 %v5282, %v5330
    %v5419 = vmul.f32 %v5283, %v5331
    %v5420 = vmul.f32 %v5284, %v5332
    %v5421 = vmul.f32 %v5285, %v5333
    %v5422 = vmul.f32 %v5286, %v5334
    %v5423 = vmul.f32 %v5287, %v5335
    %v5424 = vmul.f32 %v5288, %v5336
    %v5425 = vmul.f32 %v5289, %v5329
    %v5426 = vmul.f32 %v5290, %v5330
    %v5427 = vmul.f32 %v5291, %v5331
    %v5428 = vmul.f32 %v5292, %v5332
    %v5429 = vmul.f32 %v5293, %v5333
    %v5430 = vmul.f32 %v5294, %v5334
    %v5431 = vmul.f32 %v5295, %v5335
    %v5432 = vmul.f32 %v5296, %v5336
    %v5433 = vmul.f32 %v5297, %v5329
    %v5434 = vmul.f32 %v5298, %v5330
    %v5435 = vmul.f32 %v5299, %v5331
    %v5436 = vmul.f32 %v5300, %v5332
    %v5437 = vmul.f32 %v5301, %v5333
    %v5438 = vmul.f32 %v5302, %v5334
    %v5439 = vmul.f32 %v5303, %v5335
    %v5440 = vmul.f32 %v5304, %v5336
    %v5441 = vmul.f32 %v5305, %v5329
    %v5442 = vmul.f32 %v5306, %v5330
    %v5443 = vmul.f32 %v5307, %v5331
    %v5444 = vmul.f32 %v5308, %v5332
    %v5445 = vmul.f32 %v5309, %v5333
    %v5446 = vmul.f32 %v5310, %v5334
    %v5447 = vmul.f32 %v5311, %v5335
    %v5448 = vmul.f32 %v5312, %v5336
    %v5449 = vmul.f32 %v5313, %v5329
    %v5450 = vmul.f32 %v5314, %v5330
    %v5451 = vmul.f32 %v5315, %v5331
    %v5452 = vmul.f32 %v5316, %v5332
    %v5453 = vmul.f32 %v5317, %v5333
    %v5454 = vmul.f32 %v5318, %v5334
    %v5455 = vmul.f32 %v5319, %v5335
    %v5456 = vmul.f32 %v5320, %v5336
    %v5457 = vmul.f32 %v5321, %v5329
    %v5458 = vmul.f32 %v5322, %v5330
    %v5459 = vmul.f32 %v5323, %v5331
    %v5460 = vmul.f32 %v5324, %v5332
    %v5461 = vmul.f32 %v5325, %v5333
    %v5462 = vmul.f32 %v5326, %v5334
    %v5463 = vmul.f32 %v5327, %v5335
    %v5464 = vmul.f32 %v5328, %v5336
    %v5465 = vpack.c.bf16 %v5345, %v5337
    %v5466 = vpack.c.bf16 %v5346, %v5338
    %v5467 = vpack.c.bf16 %v5347, %v5339
    %v5468 = vpack.c.bf16 %v5348, %v5340
    %v5469 = vpack.c.bf16 %v5349, %v5341
    %v5470 = vpack.c.bf16 %v5350, %v5342
    %v5471 = vpack.c.bf16 %v5351, %v5343
    %v5472 = vpack.c.bf16 %v5352, %v5344
    %v5473 = vpack.c.bf16 %v5361, %v5353
    %v5474 = vpack.c.bf16 %v5362, %v5354
    %v5475 = vpack.c.bf16 %v5363, %v5355
    %v5476 = vpack.c.bf16 %v5364, %v5356
    %v5477 = vpack.c.bf16 %v5365, %v5357
    %v5478 = vpack.c.bf16 %v5366, %v5358
    %v5479 = vpack.c.bf16 %v5367, %v5359
    %v5480 = vpack.c.bf16 %v5368, %v5360
    %v5481 = vpack.c.bf16 %v5377, %v5369
    %v5482 = vpack.c.bf16 %v5378, %v5370
    %v5483 = vpack.c.bf16 %v5379, %v5371
    %v5484 = vpack.c.bf16 %v5380, %v5372
    %v5485 = vpack.c.bf16 %v5381, %v5373
    %v5486 = vpack.c.bf16 %v5382, %v5374
    %v5487 = vpack.c.bf16 %v5383, %v5375
    %v5488 = vpack.c.bf16 %v5384, %v5376
    %v5489 = vpack.c.bf16 %v5393, %v5385
    %v5490 = vpack.c.bf16 %v5394, %v5386
    %v5491 = vpack.c.bf16 %v5395, %v5387
    %v5492 = vpack.c.bf16 %v5396, %v5388
    %v5493 = vpack.c.bf16 %v5397, %v5389
    %v5494 = vpack.c.bf16 %v5398, %v5390
    %v5495 = vpack.c.bf16 %v5399, %v5391
    %v5496 = vpack.c.bf16 %v5400, %v5392
    %v5497 = vpack.c.bf16 %v5409, %v5401
    %v5498 = vpack.c.bf16 %v5410, %v5402
    %v5499 = vpack.c.bf16 %v5411, %v5403
    %v5500 = vpack.c.bf16 %v5412, %v5404
    %v5501 = vpack.c.bf16 %v5413, %v5405
    %v5502 = vpack.c.bf16 %v5414, %v5406
    %v5503 = vpack.c.bf16 %v5415, %v5407
    %v5504 = vpack.c.bf16 %v5416, %v5408
    %v5505 = vpack.c.bf16 %v5425, %v5417
    %v5506 = vpack.c.bf16 %v5426, %v5418
    %v5507 = vpack.c.bf16 %v5427, %v5419
    %v5508 = vpack.c.bf16 %v5428, %v5420
    %v5509 = vpack.c.bf16 %v5429, %v5421
    %v5510 = vpack.c.bf16 %v5430, %v5422
    %v5511 = vpack.c.bf16 %v5431, %v5423
    %v5512 = vpack.c.bf16 %v5432, %v5424
    %v5513 = vpack.c.bf16 %v5441, %v5433
    %v5514 = vpack.c.bf16 %v5442, %v5434
    %v5515 = vpack.c.bf16 %v5443, %v5435
    %v5516 = vpack.c.bf16 %v5444, %v5436
    %v5517 = vpack.c.bf16 %v5445, %v5437
    %v5518 = vpack.c.bf16 %v5446, %v5438
    %v5519 = vpack.c.bf16 %v5447, %v5439
    %v5520 = vpack.c.bf16 %v5448, %v5440
    %v5521 = vpack.c.bf16 %v5457, %v5449
    %v5522 = vpack.c.bf16 %v5458, %v5450
    %v5523 = vpack.c.bf16 %v5459, %v5451
    %v5524 = vpack.c.bf16 %v5460, %v5452
    %v5525 = vpack.c.bf16 %v5461, %v5453
    %v5526 = vpack.c.bf16 %v5462, %v5454
    %v5527 = vpack.c.bf16 %v5463, %v5455
    %v5528 = vpack.c.bf16 %v5464, %v5456
    %v5529 = vunpack.c.l.bf16 %v5465
    %v5530 = vunpack.c.l.bf16 %v5466
    %v5531 = vunpack.c.l.bf16 %v5467
    %v5532 = vunpack.c.l.bf16 %v5468
    %v5533 = vunpack.c.l.bf16 %v5469
    %v5534 = vunpack.c.l.bf16 %v5470
    %v5535 = vunpack.c.l.bf16 %v5471
    %v5536 = vunpack.c.l.bf16 %v5472
    %v5537 = vunpack.c.h.bf16 %v5465
    %v5538 = vunpack.c.h.bf16 %v5466
    %v5539 = vunpack.c.h.bf16 %v5467
    %v5540 = vunpack.c.h.bf16 %v5468
    %v5541 = vunpack.c.h.bf16 %v5469
    %v5542 = vunpack.c.h.bf16 %v5470
    %v5543 = vunpack.c.h.bf16 %v5471
    %v5544 = vunpack.c.h.bf16 %v5472
    %v5545 = vunpack.c.l.bf16 %v5473
    %v5546 = vunpack.c.l.bf16 %v5474
    %v5547 = vunpack.c.l.bf16 %v5475
    %v5548 = vunpack.c.l.bf16 %v5476
    %v5549 = vunpack.c.l.bf16 %v5477
    %v5550 = vunpack.c.l.bf16 %v5478
    %v5551 = vunpack.c.l.bf16 %v5479
    %v5552 = vunpack.c.l.bf16 %v5480
    %v5553 = vunpack.c.h.bf16 %v5473
    %v5554 = vunpack.c.h.bf16 %v5474
    %v5555 = vunpack.c.h.bf16 %v5475
    %v5556 = vunpack.c.h.bf16 %v5476
    %v5557 = vunpack.c.h.bf16 %v5477
    %v5558 = vunpack.c.h.bf16 %v5478
    %v5559 = vunpack.c.h.bf16 %v5479
    %v5560 = vunpack.c.h.bf16 %v5480
    %v5561 = vunpack.c.l.bf16 %v5481
    %v5562 = vunpack.c.l.bf16 %v5482
    %v5563 = vunpack.c.l.bf16 %v5483
    %v5564 = vunpack.c.l.bf16 %v5484
    %v5565 = vunpack.c.l.bf16 %v5485
    %v5566 = vunpack.c.l.bf16 %v5486
    %v5567 = vunpack.c.l.bf16 %v5487
    %v5568 = vunpack.c.l.bf16 %v5488
    %v5569 = vunpack.c.h.bf16 %v5481
    %v5570 = vunpack.c.h.bf16 %v5482
    %v5571 = vunpack.c.h.bf16 %v5483
    %v5572 = vunpack.c.h.bf16 %v5484
    %v5573 = vunpack.c.h.bf16 %v5485
    %v5574 = vunpack.c.h.bf16 %v5486
    %v5575 = vunpack.c.h.bf16 %v5487
    %v5576 = vunpack.c.h.bf16 %v5488
    %v5577 = vunpack.c.l.bf16 %v5489
    %v5578 = vunpack.c.l.bf16 %v5490
    %v5579 = vunpack.c.l.bf16 %v5491
    %v5580 = vunpack.c.l.bf16 %v5492
    %v5581 = vunpack.c.l.bf16 %v5493
    %v5582 = vunpack.c.l.bf16 %v5494
    %v5583 = vunpack.c.l.bf16 %v5495
    %v5584 = vunpack.c.l.bf16 %v5496
    %v5585 = vunpack.c.h.bf16 %v5489
    %v5586 = vunpack.c.h.bf16 %v5490
    %v5587 = vunpack.c.h.bf16 %v5491
    %v5588 = vunpack.c.h.bf16 %v5492
    %v5589 = vunpack.c.h.bf16 %v5493
    %v5590 = vunpack.c.h.bf16 %v5494
    %v5591 = vunpack.c.h.bf16 %v5495
    %v5592 = vunpack.c.h.bf16 %v5496
    %v5593 = vunpack.c.l.bf16 %v5497
    %v5594 = vunpack.c.l.bf16 %v5498
    %v5595 = vunpack.c.l.bf16 %v5499
    %v5596 = vunpack.c.l.bf16 %v5500
    %v5597 = vunpack.c.l.bf16 %v5501
    %v5598 = vunpack.c.l.bf16 %v5502
    %v5599 = vunpack.c.l.bf16 %v5503
    %v5600 = vunpack.c.l.bf16 %v5504
    %v5601 = vunpack.c.h.bf16 %v5497
    %v5602 = vunpack.c.h.bf16 %v5498
    %v5603 = vunpack.c.h.bf16 %v5499
    %v5604 = vunpack.c.h.bf16 %v5500
    %v5605 = vunpack.c.h.bf16 %v5501
    %v5606 = vunpack.c.h.bf16 %v5502
    %v5607 = vunpack.c.h.bf16 %v5503
    %v5608 = vunpack.c.h.bf16 %v5504
    %v5609 = vunpack.c.l.bf16 %v5505
    %v5610 = vunpack.c.l.bf16 %v5506
    %v5611 = vunpack.c.l.bf16 %v5507
    %v5612 = vunpack.c.l.bf16 %v5508
    %v5613 = vunpack.c.l.bf16 %v5509
    %v5614 = vunpack.c.l.bf16 %v5510
    %v5615 = vunpack.c.l.bf16 %v5511
    %v5616 = vunpack.c.l.bf16 %v5512
    %v5617 = vunpack.c.h.bf16 %v5505
    %v5618 = vunpack.c.h.bf16 %v5506
    %v5619 = vunpack.c.h.bf16 %v5507
    %v5620 = vunpack.c.h.bf16 %v5508
    %v5621 = vunpack.c.h.bf16 %v5509
    %v5622 = vunpack.c.h.bf16 %v5510
    %v5623 = vunpack.c.h.bf16 %v5511
    %v5624 = vunpack.c.h.bf16 %v5512
    %v5625 = vunpack.c.l.bf16 %v5513
    %v5626 = vunpack.c.l.bf16 %v5514
    %v5627 = vunpack.c.l.bf16 %v5515
    %v5628 = vunpack.c.l.bf16 %v5516
    %v5629 = vunpack.c.l.bf16 %v5517
    %v5630 = vunpack.c.l.bf16 %v5518
    %v5631 = vunpack.c.l.bf16 %v5519
    %v5632 = vunpack.c.l.bf16 %v5520
    %v5633 = vunpack.c.h.bf16 %v5513
    %v5634 = vunpack.c.h.bf16 %v5514
    %v5635 = vunpack.c.h.bf16 %v5515
    %v5636 = vunpack.c.h.bf16 %v5516
    %v5637 = vunpack.c.h.bf16 %v5517
    %v5638 = vunpack.c.h.bf16 %v5518
    %v5639 = vunpack.c.h.bf16 %v5519
    %v5640 = vunpack.c.h.bf16 %v5520
    %v5641 = vunpack.c.l.bf16 %v5521
    %v5642 = vunpack.c.l.bf16 %v5522
    %v5643 = vunpack.c.l.bf16 %v5523
    %v5644 = vunpack.c.l.bf16 %v5524
    %v5645 = vunpack.c.l.bf16 %v5525
    %v5646 = vunpack.c.l.bf16 %v5526
    %v5647 = vunpack.c.l.bf16 %v5527
    %v5648 = vunpack.c.l.bf16 %v5528
    %v5649 = vunpack.c.h.bf16 %v5521
    %v5650 = vunpack.c.h.bf16 %v5522
    %v5651 = vunpack.c.h.bf16 %v5523
    %v5652 = vunpack.c.h.bf16 %v5524
    %v5653 = vunpack.c.h.bf16 %v5525
    %v5654 = vunpack.c.h.bf16 %v5526
    %v5655 = vunpack.c.h.bf16 %v5527
    %v5656 = vunpack.c.h.bf16 %v5528
    %v5657 = vadd.f32 %v5529, %v5530
    %v5658 = vadd.f32 %v5657, %v5531
    %v5659 = vadd.f32 %v5658, %v5532
    %v5660 = vadd.f32 %v5659, %v5533
    %v5661 = vadd.f32 %v5660, %v5534
    %v5662 = vadd.f32 %v5661, %v5535
    %v5663 = vadd.f32 %v5662, %v5536
    %5664 = vadd.xlane.f32.xlu0 %v5663
    %v5665 = vpop.xlane.xlu0 %5664
    %v5666 = vadd.f32 %v5537, %v5538
    %v5667 = vadd.f32 %v5666, %v5539
    %v5668 = vadd.f32 %v5667, %v5540
    %v5669 = vadd.f32 %v5668, %v5541
    %v5670 = vadd.f32 %v5669, %v5542
    %v5671 = vadd.f32 %v5670, %v5543
    %v5672 = vadd.f32 %v5671, %v5544
    %5673 = vadd.xlane.f32.xlu0 %v5672
    %v5674 = vpop.xlane.xlu0 %5673
    %v5675 = vadd.f32 %v5545, %v5546
    %v5676 = vadd.f32 %v5675, %v5547
    %v5677 = vadd.f32 %v5676, %v5548
    %v5678 = vadd.f32 %v5677, %v5549
    %v5679 = vadd.f32 %v5678, %v5550
    %v5680 = vadd.f32 %v5679, %v5551
    %v5681 = vadd.f32 %v5680, %v5552
    %5682 = vadd.xlane.f32.xlu0 %v5681
    %v5683 = vpop.xlane.xlu0 %5682
    %v5684 = vadd.f32 %v5553, %v5554
    %v5685 = vadd.f32 %v5684, %v5555
    %v5686 = vadd.f32 %v5685, %v5556
    %v5687 = vadd.f32 %v5686, %v5557
    %v5688 = vadd.f32 %v5687, %v5558
    %v5689 = vadd.f32 %v5688, %v5559
    %v5690 = vadd.f32 %v5689, %v5560
    %5691 = vadd.xlane.f32.xlu0 %v5690
    %v5692 = vpop.xlane.xlu0 %5691
    %v5693 = vadd.f32 %v5561, %v5562
    %v5694 = vadd.f32 %v5693, %v5563
    %v5695 = vadd.f32 %v5694, %v5564
    %v5696 = vadd.f32 %v5695, %v5565
    %v5697 = vadd.f32 %v5696, %v5566
    %v5698 = vadd.f32 %v5697, %v5567
    %v5699 = vadd.f32 %v5698, %v5568
    %5700 = vadd.xlane.f32.xlu0 %v5699
    %v5701 = vpop.xlane.xlu0 %5700
    %v5702 = vadd.f32 %v5569, %v5570
    %v5703 = vadd.f32 %v5702, %v5571
    %v5704 = vadd.f32 %v5703, %v5572
    %v5705 = vadd.f32 %v5704, %v5573
    %v5706 = vadd.f32 %v5705, %v5574
    %v5707 = vadd.f32 %v5706, %v5575
    %v5708 = vadd.f32 %v5707, %v5576
    %5709 = vadd.xlane.f32.xlu0 %v5708
    %v5710 = vpop.xlane.xlu0 %5709
    %v5711 = vadd.f32 %v5577, %v5578
    %v5712 = vadd.f32 %v5711, %v5579
    %v5713 = vadd.f32 %v5712, %v5580
    %v5714 = vadd.f32 %v5713, %v5581
    %v5715 = vadd.f32 %v5714, %v5582
    %v5716 = vadd.f32 %v5715, %v5583
    %v5717 = vadd.f32 %v5716, %v5584
    %5718 = vadd.xlane.f32.xlu0 %v5717
    %v5719 = vpop.xlane.xlu0 %5718
    %v5720 = vadd.f32 %v5585, %v5586
    %v5721 = vadd.f32 %v5720, %v5587
    %v5722 = vadd.f32 %v5721, %v5588
    %v5723 = vadd.f32 %v5722, %v5589
    %v5724 = vadd.f32 %v5723, %v5590
    %v5725 = vadd.f32 %v5724, %v5591
    %v5726 = vadd.f32 %v5725, %v5592
    %5727 = vadd.xlane.f32.xlu0 %v5726
    %v5728 = vpop.xlane.xlu0 %5727
    %v5729 = vadd.f32 %v5593, %v5594
    %v5730 = vadd.f32 %v5729, %v5595
    %v5731 = vadd.f32 %v5730, %v5596
    %v5732 = vadd.f32 %v5731, %v5597
    %v5733 = vadd.f32 %v5732, %v5598
    %v5734 = vadd.f32 %v5733, %v5599
    %v5735 = vadd.f32 %v5734, %v5600
    %5736 = vadd.xlane.f32.xlu0 %v5735
    %v5737 = vpop.xlane.xlu0 %5736
    %v5738 = vadd.f32 %v5601, %v5602
    %v5739 = vadd.f32 %v5738, %v5603
    %v5740 = vadd.f32 %v5739, %v5604
    %v5741 = vadd.f32 %v5740, %v5605
    %v5742 = vadd.f32 %v5741, %v5606
    %v5743 = vadd.f32 %v5742, %v5607
    %v5744 = vadd.f32 %v5743, %v5608
    %5745 = vadd.xlane.f32.xlu0 %v5744
    %v5746 = vpop.xlane.xlu0 %5745
    %v5747 = vadd.f32 %v5609, %v5610
    %v5748 = vadd.f32 %v5747, %v5611
    %v5749 = vadd.f32 %v5748, %v5612
    %v5750 = vadd.f32 %v5749, %v5613
    %v5751 = vadd.f32 %v5750, %v5614
    %v5752 = vadd.f32 %v5751, %v5615
    %v5753 = vadd.f32 %v5752, %v5616
    %5754 = vadd.xlane.f32.xlu0 %v5753
    %v5755 = vpop.xlane.xlu0 %5754
    %v5756 = vadd.f32 %v5617, %v5618
    %v5757 = vadd.f32 %v5756, %v5619
    %v5758 = vadd.f32 %v5757, %v5620
    %v5759 = vadd.f32 %v5758, %v5621
    %v5760 = vadd.f32 %v5759, %v5622
    %v5761 = vadd.f32 %v5760, %v5623
    %v5762 = vadd.f32 %v5761, %v5624
    %5763 = vadd.xlane.f32.xlu0 %v5762
    %v5764 = vpop.xlane.xlu0 %5763
    %v5765 = vadd.f32 %v5625, %v5626
    %v5766 = vadd.f32 %v5765, %v5627
    %v5767 = vadd.f32 %v5766, %v5628
    %v5768 = vadd.f32 %v5767, %v5629
    %v5769 = vadd.f32 %v5768, %v5630
    %v5770 = vadd.f32 %v5769, %v5631
    %v5771 = vadd.f32 %v5770, %v5632
    %5772 = vadd.xlane.f32.xlu0 %v5771
    %v5773 = vpop.xlane.xlu0 %5772
    %v5774 = vadd.f32 %v5633, %v5634
    %v5775 = vadd.f32 %v5774, %v5635
    %v5776 = vadd.f32 %v5775, %v5636
    %v5777 = vadd.f32 %v5776, %v5637
    %v5778 = vadd.f32 %v5777, %v5638
    %v5779 = vadd.f32 %v5778, %v5639
    %v5780 = vadd.f32 %v5779, %v5640
    %5781 = vadd.xlane.f32.xlu0 %v5780
    %v5782 = vpop.xlane.xlu0 %5781
    %v5783 = vadd.f32 %v5641, %v5642
    %v5784 = vadd.f32 %v5783, %v5643
    %v5785 = vadd.f32 %v5784, %v5644
    %v5786 = vadd.f32 %v5785, %v5645
    %v5787 = vadd.f32 %v5786, %v5646
    %v5788 = vadd.f32 %v5787, %v5647
    %v5789 = vadd.f32 %v5788, %v5648
    %5790 = vadd.xlane.f32.xlu0 %v5789
    %v5791 = vpop.xlane.xlu0 %5790
    %v5792 = vadd.f32 %v5649, %v5650
    %v5793 = vadd.f32 %v5792, %v5651
    %v5794 = vadd.f32 %v5793, %v5652
    %v5795 = vadd.f32 %v5794, %v5653
    %v5796 = vadd.f32 %v5795, %v5654
    %v5797 = vadd.f32 %v5796, %v5655
    %v5798 = vadd.f32 %v5797, %v5656
    %5799 = vadd.xlane.f32.xlu0 %v5798
    %v5800 = vpop.xlane.xlu0 %5799
    %s5801 = sld [smem:[#allocation2]]
    %v5802 = vstv %s5801
    %v5803 = vadd.f32 %v5665, %v5802
    %v5804 = vadd.f32 %v5674, %v5802
    %v5805 = vadd.f32 %v5683, %v5802
    %v5806 = vadd.f32 %v5692, %v5802
    %v5807 = vadd.f32 %v5701, %v5802
    %v5808 = vadd.f32 %v5710, %v5802
    %v5809 = vadd.f32 %v5719, %v5802
    %v5810 = vadd.f32 %v5728, %v5802
    %v5811 = vadd.f32 %v5737, %v5802
    %v5812 = vadd.f32 %v5746, %v5802
    %v5813 = vadd.f32 %v5755, %v5802
    %v5814 = vadd.f32 %v5764, %v5802
    %v5815 = vadd.f32 %v5773, %v5802
    %v5816 = vadd.f32 %v5782, %v5802
    %v5817 = vadd.f32 %v5791, %v5802
    %v5818 = vadd.f32 %v5800, %v5802
    %v5819 = vlaneseq
    %v5820 = vshrl.u32 %v5819, 7
    %v5821 = vadd.s32 %v5820, 8
    %v5822 = vadd.s32 %v5820, 16
    %v5823 = vadd.s32 %v5820, 24
    %v5824 = vadd.s32 %v5820, 32
    %v5825 = vadd.s32 %v5820, 40
    %v5826 = vadd.s32 %v5820, 48
    %v5827 = vadd.s32 %v5820, 56
    %v5828 = vadd.s32 %v5820, 64
    %v5829 = vadd.s32 %v5820, 72
    %v5830 = vadd.s32 %v5820, 80
    %v5831 = vadd.s32 %v5820, 88
    %v5832 = vadd.s32 %v5820, 96
    %v5833 = vadd.s32 %v5820, 104
    %v5834 = vadd.s32 %v5820, 112
    %v5835 = vadd.s32 %v5820, 120
    %v5836 = vlaneseq
    %v5837 = vand.u32 %v5836, 127
    %vm5838 = vcmp.eq.s32.totalorder %v5820, %v5837
    %vm5839 = vcmp.eq.s32.totalorder %v5821, %v5837
    %vm5840 = vcmp.eq.s32.totalorder %v5822, %v5837
    %vm5841 = vcmp.eq.s32.totalorder %v5823, %v5837
    %vm5842 = vcmp.eq.s32.totalorder %v5824, %v5837
    %vm5843 = vcmp.eq.s32.totalorder %v5825, %v5837
    %vm5844 = vcmp.eq.s32.totalorder %v5826, %v5837
    %vm5845 = vcmp.eq.s32.totalorder %v5827, %v5837
    %vm5846 = vcmp.eq.s32.totalorder %v5828, %v5837
    %vm5847 = vcmp.eq.s32.totalorder %v5829, %v5837
    %vm5848 = vcmp.eq.s32.totalorder %v5830, %v5837
    %vm5849 = vcmp.eq.s32.totalorder %v5831, %v5837
    %vm5850 = vcmp.eq.s32.totalorder %v5832, %v5837
    %vm5851 = vcmp.eq.s32.totalorder %v5833, %v5837
    %vm5852 = vcmp.eq.s32.totalorder %v5834, %v5837
    %vm5853 = vcmp.eq.s32.totalorder %v5835, %v5837
    %v5854 = vsel %vm5838, 1, 0
    %v5855 = vsel %vm5839, 1, 0
    %v5856 = vsel %vm5840, 1, 0
    %v5857 = vsel %vm5841, 1, 0
    %v5858 = vsel %vm5842, 1, 0
    %v5859 = vsel %vm5843, 1, 0
    %v5860 = vsel %vm5844, 1, 0
    %v5861 = vsel %vm5845, 1, 0
    %v5862 = vsel %vm5846, 1, 0
    %v5863 = vsel %vm5847, 1, 0
    %v5864 = vsel %vm5848, 1, 0
    %v5865 = vsel %vm5849, 1, 0
    %v5866 = vsel %vm5850, 1, 0
    %v5867 = vsel %vm5851, 1, 0
    %v5868 = vsel %vm5852, 1, 0
    %v5869 = vsel %vm5853, 1, 0
    %v5870 = vcvt.s32.f32 %v5854
    %v5871 = vcvt.s32.f32 %v5855
    %v5872 = vcvt.s32.f32 %v5856
    %v5873 = vcvt.s32.f32 %v5857
    %v5874 = vcvt.s32.f32 %v5858
    %v5875 = vcvt.s32.f32 %v5859
    %v5876 = vcvt.s32.f32 %v5860
    %v5877 = vcvt.s32.f32 %v5861
    %v5878 = vcvt.s32.f32 %v5862
    %v5879 = vcvt.s32.f32 %v5863
    %v5880 = vcvt.s32.f32 %v5864
    %v5881 = vcvt.s32.f32 %v5865
    %v5882 = vcvt.s32.f32 %v5866
    %v5883 = vcvt.s32.f32 %v5867
    %v5884 = vcvt.s32.f32 %v5868
    %v5885 = vcvt.s32.f32 %v5869
    %v5886 = vmul.f32 %v5803, %v5870
    %v5887 = vmul.f32 %v5804, %v5871
    %v5888 = vmul.f32 %v5805, %v5872
    %v5889 = vmul.f32 %v5806, %v5873
    %v5890 = vmul.f32 %v5807, %v5874
    %v5891 = vmul.f32 %v5808, %v5875
    %v5892 = vmul.f32 %v5809, %v5876
    %v5893 = vmul.f32 %v5810, %v5877
    %v5894 = vmul.f32 %v5811, %v5878
    %v5895 = vmul.f32 %v5812, %v5879
    %v5896 = vmul.f32 %v5813, %v5880
    %v5897 = vmul.f32 %v5814, %v5881
    %v5898 = vmul.f32 %v5815, %v5882
    %v5899 = vmul.f32 %v5816, %v5883
    %v5900 = vmul.f32 %v5817, %v5884
    %v5901 = vmul.f32 %v5818, %v5885
    %v5902 = vadd.f32 %v5886, %v5887
    %v5903 = vadd.f32 %v5902, %v5888
    %v5904 = vadd.f32 %v5903, %v5889
    %v5905 = vadd.f32 %v5904, %v5890
    %v5906 = vadd.f32 %v5905, %v5891
    %v5907 = vadd.f32 %v5906, %v5892
    %v5908 = vadd.f32 %v5907, %v5893
    %v5909 = vadd.f32 %v5908, %v5894
    %v5910 = vadd.f32 %v5909, %v5895
    %v5911 = vadd.f32 %v5910, %v5896
    %v5912 = vadd.f32 %v5911, %v5897
    %v5913 = vadd.f32 %v5912, %v5898
    %v5914 = vadd.f32 %v5913, %v5899
    %v5915 = vadd.f32 %v5914, %v5900
    %v5916 = vadd.f32 %v5915, %v5901
    %v5917 = vrot.slane %v5916, 4
    %v5918 = vadd.f32 %v5916, %v5917
    %v5919 = vrot.slane %v5918, 2
    %v5920 = vadd.f32 %v5918, %v5919
    %v5921 = vrot.slane %v5920, 1
    %v5922 = vadd.f32 %v5920, %v5921
    %5923 = vst [vmem:[#allocation14] sm:$0x1] %v5922
    // Predicated region
    $region54: #{tpu_custom_call.1} parent=1 // pred_check
      _
    $region55: #{tpu_custom_call.1} parent=1 // pred_check_branch
      %5925 = sbr.rel (0) target = $region57
    $region56: #{tpu_custom_call.1} parent=1 // pred_region
      %5927 = vsyncadd [#allocation5], 0
      %s5929 = sshll.u32 [#allocation14], 4
      %s5930 = int_to_ptr.vmem [resolvable:$true] %s5929
      %s5931 = sshll.u32 %s7, 4
      %s5932 = int_to_ptr.hbm [resolvable:$true] %s5931
      %5934 = dma.vmem_to_hbm [thread:$0]  %s5930, 16, %s5932, [#allocation5]
    $region57: #{tpu_custom_call.1} parent=1 // pred_fallthru
      _
    // Predicated region
    $region58: #{tpu_custom_call.1} parent=1 // pred_check
      _
    $region59: #{tpu_custom_call.1} parent=1 // pred_check_branch
      %5936 = sbr.rel (0) target = $region61
    $region60: #{tpu_custom_call.1} parent=1 // pred_region
      %5938 = dma.done [#allocation5], 16
    $region61: #{tpu_custom_call.1} parent=1 // pred_fallthru
      _
    %5939 = vsyncpa [#allocation4], 1
    %5940 = vsyncpa [#allocation7], 1
    %5941 = vsyncpa [#allocation10], 1
    %5942 = vsyncpa [#allocation13], 1
    %5943 = vsyncpa [#allocation5], 1

</llo_original>
